<compile_context>
chip_gen: v7x
topology: tpu7x:2x2x1
jax: 0.10.0
libtpu: 0.0.40
codegen_flags: <defaults>
</compile_context>

<pallas_src>
import jax
import jax.numpy as jnp
from jax.experimental import pallas as pl
from jax.experimental.pallas import tpu as pltpu

_VMEM = pl.BlockSpec(memory_space=pltpu.MemorySpace.VMEM)


# ----------------------------------------------------------------------------
# Pallas kernels
# ----------------------------------------------------------------------------
def _conv_mm_relu_kernel(p_ref, w_ref, b_ref, o_ref):
    """o = relu(w @ p + b); w:(Co,K) bf16, p:(K,R) bf16, b:(Co,1) f32."""
    acc = jnp.dot(w_ref[...], p_ref[...], preferred_element_type=jnp.float32)
    o_ref[...] = jnp.maximum(acc + b_ref[...], 0.0).astype(o_ref.dtype)


def _conv_mm_relu_pool_kernel(p_ref, w_ref, b_ref, o_ref):
    """Fused conv + ReLU + MaxPool2d(2,2).

    p:(4,K,Rp) holds one im2col slab per pooling phase (dy,dx).  Since
    max-pool commutes exactly with the bias add (fp add is monotone) and ReLU
    is monotone:
        o = relu(max_phase(w @ p_phase) + b) == pool(relu(conv(x)))
    Contraction runs on the MXU; the max/bias/relu epilogue stays on the VPU.
    """
    w = w_ref[...]
    m = jnp.dot(w, p_ref[0], preferred_element_type=jnp.float32)
    for ph in range(1, 4):
        m = jnp.maximum(m, jnp.dot(w, p_ref[ph],
                                   preferred_element_type=jnp.float32))
    o_ref[...] = jnp.maximum(m + b_ref[...], 0.0).astype(o_ref.dtype)


def _fc_stack_kernel(x_ref, w1_ref, b1_ref, w2_ref, b2_ref, w3_ref, b3_ref,
                     o_ref):
    """Fused fc1+bn1+relu -> fc2+bn2+relu -> fc3 (BN pre-folded into w/b).

    The (M,128) and (M,64) intermediates live in registers/VMEM only — no
    HBM round trips and no extra kernel launches.
    """
    h = jnp.dot(x_ref[...], w1_ref[...], preferred_element_type=jnp.float32)
    h = jnp.maximum(h + b1_ref[...], 0.0).astype(jnp.bfloat16)       # (M,128)
    h = jnp.dot(h, w2_ref[...], preferred_element_type=jnp.float32)
    h = jnp.maximum(h + b2_ref[...], 0.0).astype(jnp.bfloat16)       # (M,64)
    y = jnp.dot(h, w3_ref[...], preferred_element_type=jnp.float32)
    o_ref[...] = (y + b3_ref[...]).astype(o_ref.dtype)


# ----------------------------------------------------------------------------
# pallas_call wrappers (whole-array VMEM blocks; everything fits trivially)
# ----------------------------------------------------------------------------
def conv_mm_relu(patchesT, wmat, bias):
    K, R = patchesT.shape
    Co = wmat.shape[0]
    cost = pl.CostEstimate(
        flops=2 * Co * K * R, transcendentals=0,
        bytes_accessed=2 * (K * R + Co * K + Co * R) + 4 * Co)
    return pl.pallas_call(
        _conv_mm_relu_kernel,
        out_shape=jax.ShapeDtypeStruct((Co, R), jnp.bfloat16),
        in_specs=[_VMEM, _VMEM, _VMEM],
        out_specs=_VMEM,
        cost_estimate=cost,
    )(patchesT, wmat, bias)


def conv_mm_relu_pool(phase_patchesT, wmat, bias):
    _, K, R = phase_patchesT.shape
    Co = wmat.shape[0]
    cost = pl.CostEstimate(
        flops=8 * Co * K * R, transcendentals=0,
        bytes_accessed=2 * (4 * K * R + Co * K + Co * R) + 4 * Co)
    return pl.pallas_call(
        _conv_mm_relu_pool_kernel,
        out_shape=jax.ShapeDtypeStruct((Co, R), jnp.bfloat16),
        in_specs=[_VMEM, _VMEM, _VMEM],
        out_specs=_VMEM,
        cost_estimate=cost,
    )(phase_patchesT, wmat, bias)


def fc_stack(x, w1, b1, w2, b2, w3, b3):
    M = x.shape[0]
    n_out = w3.shape[1]
    flops = 2 * M * (w1.shape[0] * w1.shape[1] + w2.shape[0] * w2.shape[1]
                     + w3.shape[0] * w3.shape[1])
    cost = pl.CostEstimate(
        flops=flops, transcendentals=0,
        bytes_accessed=2 * (x.size + w1.size + w2.size + w3.size)
        + 4 * (b1.size + b2.size + b3.size + M * n_out))
    return pl.pallas_call(
        _fc_stack_kernel,
        out_shape=jax.ShapeDtypeStruct((M, n_out), jnp.float32),
        in_specs=[_VMEM] * 7,
        out_specs=_VMEM,
        cost_estimate=cost,
    )(x, w1, b1, w2, b2, w3, b3)


# ----------------------------------------------------------------------------
# Pure-XLA references mirroring the kernel math (for in-script verification)
# ----------------------------------------------------------------------------
def _ref_conv_mm_relu(patchesT, wmat, bias):
    acc = jnp.dot(wmat, patchesT, preferred_element_type=jnp.float32)
    return jnp.maximum(acc + bias, 0.0).astype(jnp.bfloat16)


def _ref_conv_mm_relu_pool(phase_patchesT, wmat, bias):
    m = jnp.dot(wmat, phase_patchesT[0], preferred_element_type=jnp.float32)
    for ph in range(1, 4):
        m = jnp.maximum(m, jnp.dot(wmat, phase_patchesT[ph],
                                   preferred_element_type=jnp.float32))
    return jnp.maximum(m + bias, 0.0).astype(jnp.bfloat16)


def _ref_fc_stack(x, w1, b1, w2, b2, w3, b3):
    h = jnp.dot(x, w1, preferred_element_type=jnp.float32)
    h = jnp.maximum(h + b1, 0.0).astype(jnp.bfloat16)
    h = jnp.dot(h, w2, preferred_element_type=jnp.float32)
    h = jnp.maximum(h + b2, 0.0).astype(jnp.bfloat16)
    y = jnp.dot(h, w3, preferred_element_type=jnp.float32)
    return (y + b3).astype(jnp.float32)


# ----------------------------------------------------------------------------
# JAX glue: channel-major im2col (plain and pooling-phase variants)
# ----------------------------------------------------------------------------
def _patchesT(a_cnhw, kh_sz, kw_sz):
    """a:(Ci,N,H,W) -> (Kh*Kw*Ci, N*Ho*Wo); row order (kh,kw,ci)."""
    Ci, _, H, W = a_cnhw.shape
    Ho, Wo = H - kh_sz + 1, W - kw_sz + 1
    blocks = []
    for kh in range(kh_sz):
        for kw in range(kw_sz):
            blocks.append(a_cnhw[:, :, kh:kh + Ho, kw:kw + Wo].reshape(Ci, -1))
    return jnp.concatenate(blocks, axis=0)


def _phase_patchesT(a_cnhw, kh_sz, kw_sz, hp, wp):
    """im2col restricted to the 4 MaxPool(2,2) phases.

    Returns (4, Kh*Kw*Ci, N*hp*wp); for phase (dy,dx), column (n,i,j) is the
    patch at conv-output position (2i+dy, 2j+dx) (floor pooling semantics).
    """
    Ci = a_cnhw.shape[0]
    phases = []
    for dy in range(2):
        for dx in range(2):
            blocks = []
            for kh in range(kh_sz):
                for kw in range(kw_sz):
                    sl = a_cnhw[:, :,
                                kh + dy: kh + dy + 2 * hp: 2,
                                kw + dx: kw + dx + 2 * wp: 2]
                    blocks.append(sl.reshape(Ci, -1))
            phases.append(jnp.concatenate(blocks, axis=0))
    return jnp.stack(phases, axis=0)


# ----------------------------------------------------------------------------
# Parameters (deterministic synthetic init, mirrors nn.Module __init__ shapes)
# ----------------------------------------------------------------------------
def init_params(key, n_classes):
    ks = jax.random.split(key, 16)
    p = {}
    p["conv1_w"] = 0.2 * jax.random.normal(ks[0], (3, 1, 2, 2), jnp.float32)
    p["conv1_b"] = 0.1 * jax.random.normal(ks[1], (3,), jnp.float32)
    p["conv2_w"] = 0.2 * jax.random.normal(ks[2], (8, 3, 2, 2), jnp.float32)
    p["conv2_b"] = 0.1 * jax.random.normal(ks[3], (8,), jnp.float32)
    p["conv3_w"] = 0.1 * jax.random.normal(ks[4], (16, 8, 5, 5), jnp.float32)
    p["conv3_b"] = 0.1 * jax.random.normal(ks[5], (16,), jnp.float32)
    p["conv4_w"] = 0.1 * jax.random.normal(ks[6], (32, 16, 5, 5), jnp.float32)
    p["conv4_b"] = 0.1 * jax.random.normal(ks[7], (32,), jnp.float32)
    p["fc1_w"] = 0.05 * jax.random.normal(ks[8], (128, 32 * 5 * 4), jnp.float32)
    p["fc1_b"] = 0.05 * jax.random.normal(ks[9], (128,), jnp.float32)
    p["fc2_w"] = 0.05 * jax.random.normal(ks[10], (64, 128), jnp.float32)
    p["fc2_b"] = 0.05 * jax.random.normal(ks[11], (64,), jnp.float32)
    p["fc3_w"] = 0.05 * jax.random.normal(ks[12], (n_classes, 64), jnp.float32)
    p["fc3_b"] = 0.05 * jax.random.normal(ks[13], (n_classes,), jnp.float32)
    # BatchNorm1d(128) and BatchNorm1d(64) — eval-mode running stats
    p["bn1_gamma"] = 1.0 + 0.1 * jax.random.normal(ks[14], (128,), jnp.float32)
    p["bn1_beta"] = jnp.zeros((128,), jnp.float32) + 0.01
    p["bn1_mean"] = jnp.zeros((128,), jnp.float32)
    p["bn1_var"] = jnp.ones((128,), jnp.float32)
    p["bn2_gamma"] = 1.0 + 0.1 * jax.random.normal(ks[15], (64,), jnp.float32)
    p["bn2_beta"] = jnp.zeros((64,), jnp.float32) - 0.01
    p["bn2_mean"] = jnp.zeros((64,), jnp.float32)
    p["bn2_var"] = jnp.ones((64,), jnp.float32)
    return p


def prepare_params(p, *, eps=1e-5):
    """One-time weight prep: reorder conv weights for the transposed matmul,
    fold BatchNorm into fc1/fc2, and pre-cast every MXU operand to bf16."""
    def conv_w(w):                                # (Co,Ci,Kh,Kw)->(Co,Kh*Kw*Ci)
        return jnp.transpose(w, (0, 2, 3, 1)).reshape(w.shape[0], -1) \
                  .astype(jnp.bfloat16)

    def conv_b(b):
        return b.reshape(-1, 1).astype(jnp.float32)

    q = {
        "w1": conv_w(p["conv1_w"]), "b1": conv_b(p["conv1_b"]),
        "w2": conv_w(p["conv2_w"]), "b2": conv_b(p["conv2_b"]),
        "w3": conv_w(p["conv3_w"]), "b3": conv_b(p["conv3_b"]),
        "w4": conv_w(p["conv4_w"]), "b4": conv_b(p["conv4_b"]),
    }
    s1 = p["bn1_gamma"] / jnp.sqrt(p["bn1_var"] + eps)
    q["fc1_w"] = (p["fc1_w"].T * s1[None, :]).astype(jnp.bfloat16)    # (640,128)
    q["fc1_b"] = (p["fc1_b"] * s1 + p["bn1_beta"] - p["bn1_mean"] * s1) \
        .reshape(1, -1).astype(jnp.float32)
    s2 = p["bn2_gamma"] / jnp.sqrt(p["bn2_var"] + eps)
    q["fc2_w"] = (p["fc2_w"].T * s2[None, :]).astype(jnp.bfloat16)    # (128,64)
    q["fc2_b"] = (p["fc2_b"] * s2 + p["bn2_beta"] - p["bn2_mean"] * s2) \
        .reshape(1, -1).astype(jnp.float32)
    q["fc3_w"] = p["fc3_w"].T.astype(jnp.bfloat16)                    # (64,NC)
    q["fc3_b"] = p["fc3_b"].reshape(1, -1).astype(jnp.float32)
    return q


# ----------------------------------------------------------------------------
# Forward pass (mirrors Net.forward)
# ----------------------------------------------------------------------------
def _forward(q, x_nchw, conv_fn, convpool_fn, fc_fn):
    n = x_nchw.shape[0]
    a0 = jnp.transpose(x_nchw, (1, 0, 2, 3)).astype(jnp.bfloat16)  # (1,N,40,36)
    # conv1 + relu
    y1 = conv_fn(_patchesT(a0, 2, 2), q["w1"], q["b1"])            # (3, N*39*35)
    a1 = y1.reshape(3, n, 39, 35)
    # conv2 + relu + maxpool (fused)
    y2 = convpool_fn(_phase_patchesT(a1, 2, 2, 19, 17), q["w2"], q["b2"])
    a2 = y2.reshape(8, n, 19, 17)
    # conv3 + relu
    y3 = conv_fn(_patchesT(a2, 5, 5), q["w3"], q["b3"])            # (16,N*15*13)
    a3 = y3.reshape(16, n, 15, 13)
    # conv4 + relu + maxpool (fused)
    y4 = convpool_fn(_phase_patchesT(a3, 5, 5, 5, 4), q["w4"], q["b4"])
    a4 = y4.reshape(32, n, 5, 4)
    # PyTorch flattens in (C,H,W) order per sample: (C,N,H,W) -> (N, C*H*W)
    xf = jnp.transpose(a4, (1, 0, 2, 3)).reshape(n, 32 * 5 * 4)
    # TODO(synk): Dropout(0.3) is identity here (inference semantics).
    return fc_fn(xf, q["fc1_w"], q["fc1_b"], q["fc2_w"], q["fc2_b"],
                 q["fc3_w"], q["fc3_b"])


def net_forward(q, x_nchw):
    """Pallas-kernel forward pass."""
    return _forward(q, x_nchw, conv_mm_relu, conv_mm_relu_pool, fc_stack)


def net_forward_reference(q, x_nchw):
    """Pure-XLA forward mirroring the exact same math (verification only)."""
    return _forward(q, x_nchw, _ref_conv_mm_relu, _ref_conv_mm_relu_pool,
                    _ref_fc_stack)


if __name__ == "__main__":
    N_CLASSES = 10
    key = jax.random.PRNGKey(0)
    k_param, k_x = jax.random.split(key)
    params = prepare_params(init_params(k_param, N_CLASSES))
    # Input chosen so the flatten equals 32*5*4: (batch=2, C=1, H=40, W=36)
    x = jax.random.normal(k_x, (2, 1, 40, 36), jnp.float32)

    out = jax.jit(net_forward)(params, x)
    out = jax.block_until_ready(out)
    assert out.shape == (2, N_CLASSES), out.shape
    assert bool(jnp.all(jnp.isfinite(out)))

    # Verify the Pallas path against the pure-XLA reference (same math/dtypes).
    ref = jax.block_until_ready(jax.jit(net_forward_reference)(params, x))
    assert bool(jnp.allclose(out, ref, rtol=2e-2, atol=2e-2)), (out, ref)

    print("KERNEL_OK")
</pallas_src>

<mosaic_0001>
module attributes {stable_mosaic.version = 11 : i64} {
  func.func @_conv_mm_relu_kernel(%arg0: memref<4x2730xbf16, #tpu.memory_space<vmem>>, %arg1: memref<3x4xbf16, #tpu.memory_space<vmem>>, %arg2: memref<3x1xf32, #tpu.memory_space<vmem>>, %arg3: memref<3x2730xbf16, #tpu.memory_space<vmem>>) attributes {dimension_semantics = [], scalar_prefetch = 0 : i64, scratch_operands = 0 : i64, tpu.core_type = #tpu.core_type<tc>} {
    %c0 = arith.constant 0 : index
    %c0_0 = arith.constant 0 : index
    %0 = vector.load %arg1[%c0, %c0_0] : memref<3x4xbf16, #tpu.memory_space<vmem>>, vector<3x4xbf16>
    %c0_1 = arith.constant 0 : index
    %c0_2 = arith.constant 0 : index
    %1 = vector.load %arg0[%c0_1, %c0_2] : memref<4x2730xbf16, #tpu.memory_space<vmem>>, vector<4x2730xbf16>
    %cst = arith.constant dense<0.000000e+00> : vector<3x2730xf32>
    %2 = tpu.matmul %0, %1, %cst {dimension_numbers = #tpu.dot_dimension_numbers<[1], [0], [0], [1], [0, 0, 1, 1], [], []>} : vector<3x4xbf16>, vector<4x2730xbf16>, vector<3x2730xf32> -> vector<3x2730xf32>
    %c0_3 = arith.constant 0 : index
    %c0_4 = arith.constant 0 : index
    %3 = vector.load %arg2[%c0_3, %c0_4] : memref<3x1xf32, #tpu.memory_space<vmem>>, vector<3x1xf32>
    %4 = vector.broadcast %3 : vector<3x1xf32> to vector<3x2730xf32>
    %5 = arith.addf %2, %4 : vector<3x2730xf32>
    %cst_5 = arith.constant 0.000000e+00 : f32
    %6 = vector.broadcast %cst_5 : f32 to vector<3x2730xf32>
    %7 = arith.maximumf %5, %6 : vector<3x2730xf32>
    %8 = arith.truncf %7 : vector<3x2730xf32> to vector<3x2730xbf16>
    %c0_6 = arith.constant 0 : index
    %c0_7 = arith.constant 0 : index
    %9 = vector.load %arg3[%c0_6, %c0_7] : memref<3x2730xbf16, #tpu.memory_space<vmem>>, vector<3x2730xbf16>
    tpu.vector_store %arg3[%c0_6, %c0_7], %8 {strides = array<i32>} : memref<3x2730xbf16, #tpu.memory_space<vmem>>, vector<3x2730xbf16>,
    return
  }
}

module attributes {stable_mosaic.version = 11 : i64} {
  func.func @_conv_mm_relu_pool_kernel(%arg0: memref<4x12x646xbf16, #tpu.memory_space<vmem>>, %arg1: memref<8x12xbf16, #tpu.memory_space<vmem>>, %arg2: memref<8x1xf32, #tpu.memory_space<vmem>>, %arg3: memref<8x646xbf16, #tpu.memory_space<vmem>>) attributes {dimension_semantics = [], scalar_prefetch = 0 : i64, scratch_operands = 0 : i64, tpu.core_type = #tpu.core_type<tc>} {
    %c0 = arith.constant 0 : index
    %c0_0 = arith.constant 0 : index
    %0 = vector.load %arg1[%c0, %c0_0] : memref<8x12xbf16, #tpu.memory_space<vmem>>, vector<8x12xbf16>
    %c0_1 = arith.constant 0 : index
    %c0_2 = arith.constant 0 : index
    %c0_3 = arith.constant 0 : index
    %1 = vector.load %arg0[%c0_1, %c0_2, %c0_3] : memref<4x12x646xbf16, #tpu.memory_space<vmem>>, vector<1x12x646xbf16>
    %2 = vector.shape_cast %1 : vector<1x12x646xbf16> to vector<12x646xbf16>
    %cst = arith.constant dense<0.000000e+00> : vector<8x646xf32>
    %3 = tpu.matmul %0, %2, %cst {dimension_numbers = #tpu.dot_dimension_numbers<[1], [0], [0], [1], [0, 0, 1, 1], [], []>} : vector<8x12xbf16>, vector<12x646xbf16>, vector<8x646xf32> -> vector<8x646xf32>
    %c1 = arith.constant 1 : index
    %c0_4 = arith.constant 0 : index
    %c0_5 = arith.constant 0 : index
    %4 = vector.load %arg0[%c1, %c0_4, %c0_5] : memref<4x12x646xbf16, #tpu.memory_space<vmem>>, vector<1x12x646xbf16>
    %5 = vector.shape_cast %4 : vector<1x12x646xbf16> to vector<12x646xbf16>
    %cst_6 = arith.constant dense<0.000000e+00> : vector<8x646xf32>
    %6 = tpu.matmul %0, %5, %cst_6 {dimension_numbers = #tpu.dot_dimension_numbers<[1], [0], [0], [1], [0, 0, 1, 1], [], []>} : vector<8x12xbf16>, vector<12x646xbf16>, vector<8x646xf32> -> vector<8x646xf32>
    %7 = arith.maximumf %3, %6 : vector<8x646xf32>
    %c2 = arith.constant 2 : index
    %c0_7 = arith.constant 0 : index
    %c0_8 = arith.constant 0 : index
    %8 = vector.load %arg0[%c2, %c0_7, %c0_8] : memref<4x12x646xbf16, #tpu.memory_space<vmem>>, vector<1x12x646xbf16>
    %9 = vector.shape_cast %8 : vector<1x12x646xbf16> to vector<12x646xbf16>
    %cst_9 = arith.constant dense<0.000000e+00> : vector<8x646xf32>
    %10 = tpu.matmul %0, %9, %cst_9 {dimension_numbers = #tpu.dot_dimension_numbers<[1], [0], [0], [1], [0, 0, 1, 1], [], []>} : vector<8x12xbf16>, vector<12x646xbf16>, vector<8x646xf32> -> vector<8x646xf32>
    %11 = arith.maximumf %7, %10 : vector<8x646xf32>
    %c3 = arith.constant 3 : index
    %c0_10 = arith.constant 0 : index
    %c0_11 = arith.constant 0 : index
    %12 = vector.load %arg0[%c3, %c0_10, %c0_11] : memref<4x12x646xbf16, #tpu.memory_space<vmem>>, vector<1x12x646xbf16>
    %13 = vector.shape_cast %12 : vector<1x12x646xbf16> to vector<12x646xbf16>
    %cst_12 = arith.constant dense<0.000000e+00> : vector<8x646xf32>
    %14 = tpu.matmul %0, %13, %cst_12 {dimension_numbers = #tpu.dot_dimension_numbers<[1], [0], [0], [1], [0, 0, 1, 1], [], []>} : vector<8x12xbf16>, vector<12x646xbf16>, vector<8x646xf32> -> vector<8x646xf32>
    %15 = arith.maximumf %11, %14 : vector<8x646xf32>
    %c0_13 = arith.constant 0 : index
    %c0_14 = arith.constant 0 : index
    %16 = vector.load %arg2[%c0_13, %c0_14] : memref<8x1xf32, #tpu.memory_space<vmem>>, vector<8x1xf32>
    %17 = vector.broadcast %16 : vector<8x1xf32> to vector<8x646xf32>
    %18 = arith.addf %15, %17 : vector<8x646xf32>
    %cst_15 = arith.constant 0.000000e+00 : f32
    %19 = vector.broadcast %cst_15 : f32 to vector<8x646xf32>
    %20 = arith.maximumf %18, %19 : vector<8x646xf32>
    %21 = arith.truncf %20 : vector<8x646xf32> to vector<8x646xbf16>
    %c0_16 = arith.constant 0 : index
    %c0_17 = arith.constant 0 : index
    %22 = vector.load %arg3[%c0_16, %c0_17] : memref<8x646xbf16, #tpu.memory_space<vmem>>, vector<8x646xbf16>
    tpu.vector_store %arg3[%c0_16, %c0_17], %21 {strides = array<i32>} : memref<8x646xbf16, #tpu.memory_space<vmem>>, vector<8x646xbf16>,
    return
  }
}

module attributes {stable_mosaic.version = 11 : i64} {
  func.func @_conv_mm_relu_kernel(%arg0: memref<200x390xbf16, #tpu.memory_space<vmem>>, %arg1: memref<16x200xbf16, #tpu.memory_space<vmem>>, %arg2: memref<16x1xf32, #tpu.memory_space<vmem>>, %arg3: memref<16x390xbf16, #tpu.memory_space<vmem>>) attributes {dimension_semantics = [], scalar_prefetch = 0 : i64, scratch_operands = 0 : i64, tpu.core_type = #tpu.core_type<tc>} {
    %c0 = arith.constant 0 : index
    %c0_0 = arith.constant 0 : index
    %0 = vector.load %arg1[%c0, %c0_0] : memref<16x200xbf16, #tpu.memory_space<vmem>>, vector<16x200xbf16>
    %c0_1 = arith.constant 0 : index
    %c0_2 = arith.constant 0 : index
    %1 = vector.load %arg0[%c0_1, %c0_2] : memref<200x390xbf16, #tpu.memory_space<vmem>>, vector<200x390xbf16>
    %cst = arith.constant dense<0.000000e+00> : vector<16x390xf32>
    %2 = tpu.matmul %0, %1, %cst {dimension_numbers = #tpu.dot_dimension_numbers<[1], [0], [0], [1], [0, 0, 1, 1], [], []>} : vector<16x200xbf16>, vector<200x390xbf16>, vector<16x390xf32> -> vector<16x390xf32>
    %c0_3 = arith.constant 0 : index
    %c0_4 = arith.constant 0 : index
    %3 = vector.load %arg2[%c0_3, %c0_4] : memref<16x1xf32, #tpu.memory_space<vmem>>, vector<16x1xf32>
    %4 = vector.broadcast %3 : vector<16x1xf32> to vector<16x390xf32>
    %5 = arith.addf %2, %4 : vector<16x390xf32>
    %cst_5 = arith.constant 0.000000e+00 : f32
    %6 = vector.broadcast %cst_5 : f32 to vector<16x390xf32>
    %7 = arith.maximumf %5, %6 : vector<16x390xf32>
    %8 = arith.truncf %7 : vector<16x390xf32> to vector<16x390xbf16>
    %c0_6 = arith.constant 0 : index
    %c0_7 = arith.constant 0 : index
    %9 = vector.load %arg3[%c0_6, %c0_7] : memref<16x390xbf16, #tpu.memory_space<vmem>>, vector<16x390xbf16>
    tpu.vector_store %arg3[%c0_6, %c0_7], %8 {strides = array<i32>} : memref<16x390xbf16, #tpu.memory_space<vmem>>, vector<16x390xbf16>,
    return
  }
}

module attributes {stable_mosaic.version = 11 : i64} {
  func.func @_conv_mm_relu_pool_kernel(%arg0: memref<4x400x40xbf16, #tpu.memory_space<vmem>>, %arg1: memref<32x400xbf16, #tpu.memory_space<vmem>>, %arg2: memref<32x1xf32, #tpu.memory_space<vmem>>, %arg3: memref<32x40xbf16, #tpu.memory_space<vmem>>) attributes {dimension_semantics = [], scalar_prefetch = 0 : i64, scratch_operands = 0 : i64, tpu.core_type = #tpu.core_type<tc>} {
    %c0 = arith.constant 0 : index
    %c0_0 = arith.constant 0 : index
    %0 = vector.load %arg1[%c0, %c0_0] : memref<32x400xbf16, #tpu.memory_space<vmem>>, vector<32x400xbf16>
    %c0_1 = arith.constant 0 : index
    %c0_2 = arith.constant 0 : index
    %c0_3 = arith.constant 0 : index
    %1 = vector.load %arg0[%c0_1, %c0_2, %c0_3] : memref<4x400x40xbf16, #tpu.memory_space<vmem>>, vector<1x400x40xbf16>
    %2 = vector.shape_cast %1 : vector<1x400x40xbf16> to vector<400x40xbf16>
    %cst = arith.constant dense<0.000000e+00> : vector<32x40xf32>
    %3 = tpu.matmul %0, %2, %cst {dimension_numbers = #tpu.dot_dimension_numbers<[1], [0], [0], [1], [0, 0, 1, 1], [], []>} : vector<32x400xbf16>, vector<400x40xbf16>, vector<32x40xf32> -> vector<32x40xf32>
    %c1 = arith.constant 1 : index
    %c0_4 = arith.constant 0 : index
    %c0_5 = arith.constant 0 : index
    %4 = vector.load %arg0[%c1, %c0_4, %c0_5] : memref<4x400x40xbf16, #tpu.memory_space<vmem>>, vector<1x400x40xbf16>
    %5 = vector.shape_cast %4 : vector<1x400x40xbf16> to vector<400x40xbf16>
    %cst_6 = arith.constant dense<0.000000e+00> : vector<32x40xf32>
    %6 = tpu.matmul %0, %5, %cst_6 {dimension_numbers = #tpu.dot_dimension_numbers<[1], [0], [0], [1], [0, 0, 1, 1], [], []>} : vector<32x400xbf16>, vector<400x40xbf16>, vector<32x40xf32> -> vector<32x40xf32>
    %7 = arith.maximumf %3, %6 : vector<32x40xf32>
    %c2 = arith.constant 2 : index
    %c0_7 = arith.constant 0 : index
    %c0_8 = arith.constant 0 : index
    %8 = vector.load %arg0[%c2, %c0_7, %c0_8] : memref<4x400x40xbf16, #tpu.memory_space<vmem>>, vector<1x400x40xbf16>
    %9 = vector.shape_cast %8 : vector<1x400x40xbf16> to vector<400x40xbf16>
    %cst_9 = arith.constant dense<0.000000e+00> : vector<32x40xf32>
    %10 = tpu.matmul %0, %9, %cst_9 {dimension_numbers = #tpu.dot_dimension_numbers<[1], [0], [0], [1], [0, 0, 1, 1], [], []>} : vector<32x400xbf16>, vector<400x40xbf16>, vector<32x40xf32> -> vector<32x40xf32>
    %11 = arith.maximumf %7, %10 : vector<32x40xf32>
    %c3 = arith.constant 3 : index
    %c0_10 = arith.constant 0 : index
    %c0_11 = arith.constant 0 : index
    %12 = vector.load %arg0[%c3, %c0_10, %c0_11] : memref<4x400x40xbf16, #tpu.memory_space<vmem>>, vector<1x400x40xbf16>
    %13 = vector.shape_cast %12 : vector<1x400x40xbf16> to vector<400x40xbf16>
    %cst_12 = arith.constant dense<0.000000e+00> : vector<32x40xf32>
    %14 = tpu.matmul %0, %13, %cst_12 {dimension_numbers = #tpu.dot_dimension_numbers<[1], [0], [0], [1], [0, 0, 1, 1], [], []>} : vector<32x400xbf16>, vector<400x40xbf16>, vector<32x40xf32> -> vector<32x40xf32>
    %15 = arith.maximumf %11, %14 : vector<32x40xf32>
    %c0_13 = arith.constant 0 : index
    %c0_14 = arith.constant 0 : index
    %16 = vector.load %arg2[%c0_13, %c0_14] : memref<32x1xf32, #tpu.memory_space<vmem>>, vector<32x1xf32>
    %17 = vector.broadcast %16 : vector<32x1xf32> to vector<32x40xf32>
    %18 = arith.addf %15, %17 : vector<32x40xf32>
    %cst_15 = arith.constant 0.000000e+00 : f32
    %19 = vector.broadcast %cst_15 : f32 to vector<32x40xf32>
    %20 = arith.maximumf %18, %19 : vector<32x40xf32>
    %21 = arith.truncf %20 : vector<32x40xf32> to vector<32x40xbf16>
    %c0_16 = arith.constant 0 : index
    %c0_17 = arith.constant 0 : index
    %22 = vector.load %arg3[%c0_16, %c0_17] : memref<32x40xbf16, #tpu.memory_space<vmem>>, vector<32x40xbf16>
    tpu.vector_store %arg3[%c0_16, %c0_17], %21 {strides = array<i32>} : memref<32x40xbf16, #tpu.memory_space<vmem>>, vector<32x40xbf16>,
    return
  }
}

module attributes {stable_mosaic.version = 11 : i64} {
  func.func @_fc_stack_kernel(%arg0: memref<2x640xbf16, #tpu.memory_space<vmem>>, %arg1: memref<640x128xbf16, #tpu.memory_space<vmem>>, %arg2: memref<1x128xf32, #tpu.memory_space<vmem>>, %arg3: memref<128x64xbf16, #tpu.memory_space<vmem>>, %arg4: memref<1x64xf32, #tpu.memory_space<vmem>>, %arg5: memref<64x10xbf16, #tpu.memory_space<vmem>>, %arg6: memref<1x10xf32, #tpu.memory_space<vmem>>, %arg7: memref<2x10xf32, #tpu.memory_space<vmem>>) attributes {dimension_semantics = [], scalar_prefetch = 0 : i64, scratch_operands = 0 : i64, tpu.core_type = #tpu.core_type<tc>} {
    %c0 = arith.constant 0 : index
    %c0_0 = arith.constant 0 : index
    %0 = vector.load %arg0[%c0, %c0_0] : memref<2x640xbf16, #tpu.memory_space<vmem>>, vector<2x640xbf16>
    %c0_1 = arith.constant 0 : index
    %c0_2 = arith.constant 0 : index
    %1 = vector.load %arg1[%c0_1, %c0_2] : memref<640x128xbf16, #tpu.memory_space<vmem>>, vector<640x128xbf16>
    %cst = arith.constant dense<0.000000e+00> : vector<2x128xf32>
    %2 = tpu.matmul %0, %1, %cst {dimension_numbers = #tpu.dot_dimension_numbers<[1], [0], [0], [1], [0, 0, 1, 1], [], []>} : vector<2x640xbf16>, vector<640x128xbf16>, vector<2x128xf32> -> vector<2x128xf32>
    %c0_3 = arith.constant 0 : index
    %c0_4 = arith.constant 0 : index
    %3 = vector.load %arg2[%c0_3, %c0_4] : memref<1x128xf32, #tpu.memory_space<vmem>>, vector<1x128xf32>
    %4 = vector.broadcast %3 : vector<1x128xf32> to vector<2x128xf32>
    %5 = arith.addf %2, %4 : vector<2x128xf32>
    %cst_5 = arith.constant 0.000000e+00 : f32
    %6 = vector.broadcast %cst_5 : f32 to vector<2x128xf32>
    %7 = arith.maximumf %5, %6 : vector<2x128xf32>
    %8 = arith.truncf %7 : vector<2x128xf32> to vector<2x128xbf16>
    %c0_6 = arith.constant 0 : index
    %c0_7 = arith.constant 0 : index
    %9 = vector.load %arg3[%c0_6, %c0_7] : memref<128x64xbf16, #tpu.memory_space<vmem>>, vector<128x64xbf16>
    %cst_8 = arith.constant dense<0.000000e+00> : vector<2x64xf32>
    %10 = tpu.matmul %8, %9, %cst_8 {dimension_numbers = #tpu.dot_dimension_numbers<[1], [0], [0], [1], [0, 0, 1, 1], [], []>} : vector<2x128xbf16>, vector<128x64xbf16>, vector<2x64xf32> -> vector<2x64xf32>
    %c0_9 = arith.constant 0 : index
    %c0_10 = arith.constant 0 : index
    %11 = vector.load %arg4[%c0_9, %c0_10] : memref<1x64xf32, #tpu.memory_space<vmem>>, vector<1x64xf32>
    %12 = vector.broadcast %11 : vector<1x64xf32> to vector<2x64xf32>
    %13 = arith.addf %10, %12 : vector<2x64xf32>
    %cst_11 = arith.constant 0.000000e+00 : f32
    %14 = vector.broadcast %cst_11 : f32 to vector<2x64xf32>
    %15 = arith.maximumf %13, %14 : vector<2x64xf32>
    %16 = arith.truncf %15 : vector<2x64xf32> to vector<2x64xbf16>
    %c0_12 = arith.constant 0 : index
    %c0_13 = arith.constant 0 : index
    %17 = vector.load %arg5[%c0_12, %c0_13] : memref<64x10xbf16, #tpu.memory_space<vmem>>, vector<64x10xbf16>
    %cst_14 = arith.constant dense<0.000000e+00> : vector<2x10xf32>
    %18 = tpu.matmul %16, %17, %cst_14 {dimension_numbers = #tpu.dot_dimension_numbers<[1], [0], [0], [1], [0, 0, 1, 1], [], []>} : vector<2x64xbf16>, vector<64x10xbf16>, vector<2x10xf32> -> vector<2x10xf32>
    %c0_15 = arith.constant 0 : index
    %c0_16 = arith.constant 0 : index
    %19 = vector.load %arg6[%c0_15, %c0_16] : memref<1x10xf32, #tpu.memory_space<vmem>>, vector<1x10xf32>
    %20 = vector.broadcast %19 : vector<1x10xf32> to vector<2x10xf32>
    %21 = arith.addf %18, %20 : vector<2x10xf32>
    %c0_17 = arith.constant 0 : index
    %c0_18 = arith.constant 0 : index
    %22 = vector.load %arg7[%c0_17, %c0_18] : memref<2x10xf32, #tpu.memory_space<vmem>>, vector<2x10xf32>
    tpu.vector_store %arg7[%c0_17, %c0_18], %21 {strides = array<i32>} : memref<2x10xf32, #tpu.memory_space<vmem>>, vector<2x10xf32>,
    return
  }
}

</mosaic_0001>

<llo_original>
// kernel: net_forward.5
$region0: #{net_forward.5}
  #allocation0 [shape = 'u32[]', space=smem, size = 0x4, offset = 0x4, fixed_abs, tag = 'smem constant byte address 0x4 - core index']
  #allocation1 [shape = 'u32[144,128]{1,0:T(1,128)}', space=vmem, size = 0x12000, scoped, tag = 'internal scratch']
  %s0 = inlined_call_operand.vmem [shape: bf16[4,2730], index: 0, kind: input, shape index: {}]
  %s1 = inlined_call_operand.vmem [shape: bf16[3,4], index: 1, kind: input, shape index: {}]
  %s2 = inlined_call_operand.vmem [shape: f32[3,1], index: 2, kind: input, shape index: {}]
  %s3 = inlined_call_operand.vmem [shape: bf16[3,2730], index: 3, kind: output, shape index: {}]
  %s4 = sld [smem:[#allocation0]]
  $region22: #{net_forward.5} parent=0
    _
  %s6 = ssub.s32 1, %s4
  %s7 = scalar_select 0, %s6, %s4
  // Predicated region
  $region2: #{net_forward.5} parent=0 // pred_check
    _
  $region3: #{net_forward.5} parent=0 // pred_check_branch
    %9 = sbr.rel (0) target = $region5
  $region4: #{net_forward.5} parent=0 // pred_region
    _
  $region5: #{net_forward.5} parent=0 // pred_fallthru
    _
  // Predicated region
  $region6: #{net_forward.5} parent=0 // pred_check
    _
  $region7: #{net_forward.5} parent=0 // pred_check_branch
    %11 = sbr.rel (0) target = $region9
  $region8: #{net_forward.5} parent=0 // pred_region
    _
  $region9: #{net_forward.5} parent=0 // pred_fallthru
    _
  // Predicated region
  $region10: #{net_forward.5} parent=0 // pred_check
    _
  $region11: #{net_forward.5} parent=0 // pred_check_branch
    %13 = sbr.rel (0) target = $region13
  $region12: #{net_forward.5} parent=0 // pred_region
    _
  $region13: #{net_forward.5} parent=0 // pred_fallthru
    _
  %v15 = vld [vmem:[%s1] sm:$0x3]
  %v16 = vld [vmem:[%s0] sm:$0xff]
  %v17 = vld [vmem:[%s0 + $0x8] sm:$0xff]
  %v18 = vld [vmem:[%s0 + $0x10] sm:$0xff]
  %v19 = vld [vmem:[%s0 + $0x18] sm:$0xff]
  %v20 = vld [vmem:[%s0 + $0x20] sm:$0xff]
  %v21 = vld [vmem:[%s0 + $0x28] sm:$0xf]
  %v22 = vld [vmem:[%s2] sm:$0x7]
  %24 = vset.pattern.permute.xlu0 0
  %25 = vperm.xlu0 %24, %v22
  %v26 = vpop.permute.xlu0 %25
  %v34 = vcombine.high %v16, %v16
  %v36 = vunpack.c.l.s4 1983009808
  %v37 = vunpack.c.0.s8 %v36
  %v38 = vlaneseq
  %v39 = vshrl.u32 %v38, 7
  %v40 = vsub.s32 %v37, %v39
  %v41 = vrot.slane %v16, %v40
  %v43 = vunpack.c.l.s4 1983009808
  %v44 = vunpack.c.0.s8 %v43
  %v45 = vlaneseq
  %v46 = vshrl.u32 %v45, 7
  %v47 = vsub.s32 %v44, %v46
  %v48 = vrot.slane %v34, %v47
  %v49 = vcombine.high %v41, %v41
  %v50 = vcombine.high %v48, %v48
  %v51 = vcombine.high %v17, %v17
  %v53 = vunpack.c.l.s4 1983009808
  %v54 = vunpack.c.0.s8 %v53
  %v55 = vlaneseq
  %v56 = vshrl.u32 %v55, 7
  %v57 = vsub.s32 %v54, %v56
  %v58 = vrot.slane %v17, %v57
  %v60 = vunpack.c.l.s4 1983009808
  %v61 = vunpack.c.0.s8 %v60
  %v62 = vlaneseq
  %v63 = vshrl.u32 %v62, 7
  %v64 = vsub.s32 %v61, %v63
  %v65 = vrot.slane %v51, %v64
  %v66 = vcombine.high %v58, %v58
  %v67 = vcombine.high %v65, %v65
  %v68 = vcombine.high %v18, %v18
  %v70 = vunpack.c.l.s4 1983009808
  %v71 = vunpack.c.0.s8 %v70
  %v72 = vlaneseq
  %v73 = vshrl.u32 %v72, 7
  %v74 = vsub.s32 %v71, %v73
  %v75 = vrot.slane %v18, %v74
  %v77 = vunpack.c.l.s4 1983009808
  %v78 = vunpack.c.0.s8 %v77
  %v79 = vlaneseq
  %v80 = vshrl.u32 %v79, 7
  %v81 = vsub.s32 %v78, %v80
  %v82 = vrot.slane %v68, %v81
  %v83 = vcombine.high %v75, %v75
  %v84 = vcombine.high %v82, %v82
  %v85 = vcombine.high %v19, %v19
  %v87 = vunpack.c.l.s4 1983009808
  %v88 = vunpack.c.0.s8 %v87
  %v89 = vlaneseq
  %v90 = vshrl.u32 %v89, 7
  %v91 = vsub.s32 %v88, %v90
  %v92 = vrot.slane %v19, %v91
  %v94 = vunpack.c.l.s4 1983009808
  %v95 = vunpack.c.0.s8 %v94
  %v96 = vlaneseq
  %v97 = vshrl.u32 %v96, 7
  %v98 = vsub.s32 %v95, %v97
  %v99 = vrot.slane %v85, %v98
  %v100 = vcombine.high %v92, %v92
  %v101 = vcombine.high %v99, %v99
  %v102 = vcombine.high %v20, %v20
  %v104 = vunpack.c.l.s4 1983009808
  %v105 = vunpack.c.0.s8 %v104
  %v106 = vlaneseq
  %v107 = vshrl.u32 %v106, 7
  %v108 = vsub.s32 %v105, %v107
  %v109 = vrot.slane %v20, %v108
  %v111 = vunpack.c.l.s4 1983009808
  %v112 = vunpack.c.0.s8 %v111
  %v113 = vlaneseq
  %v114 = vshrl.u32 %v113, 7
  %v115 = vsub.s32 %v112, %v114
  %v116 = vrot.slane %v102, %v115
  %v117 = vcombine.high %v109, %v109
  %v118 = vcombine.high %v116, %v116
  %v120 = vunpack.c.l.s4 1983009808
  %v121 = vunpack.c.0.s8 %v120
  %v122 = vlaneseq
  %v123 = vshrl.u32 %v122, 7
  %v124 = vsub.s32 %v121, %v123
  %v125 = vrot.slane %v21, %v124
  %v126 = vcombine.high %v125, %v125
  %vm127 = vcmask 31744
  %v129 = vsel %vm127, %v15, 0
  %vm131 = vcmask 1041408
  %v133 = vsel %vm131, %v41, 0
  %v136 = vsel %vm131, %v49, 0
  %v139 = vsel %vm131, %v48, 0
  %v142 = vsel %vm131, %v50, 0
  %v145 = vsel %vm131, %v58, 0
  %v148 = vsel %vm131, %v66, 0
  %v151 = vsel %vm131, %v65, 0
  %v154 = vsel %vm131, %v67, 0
  %v157 = vsel %vm131, %v75, 0
  %v160 = vsel %vm131, %v83, 0
  %v163 = vsel %vm131, %v82, 0
  %v166 = vsel %vm131, %v84, 0
  %v169 = vsel %vm131, %v92, 0
  %v172 = vsel %vm131, %v100, 0
  %v175 = vsel %vm131, %v99, 0
  %v178 = vsel %vm131, %v101, 0
  %v181 = vsel %vm131, %v109, 0
  %v184 = vsel %vm131, %v117, 0
  %v187 = vsel %vm131, %v116, 0
  %v190 = vsel %vm131, %v118, 0
  %v193 = vsel %vm131, %v125, 0
  %v196 = vsel %vm131, %v126, 0
  %198 = vmatprep.subr.bf16.mxu0 %v136
  %199 = vmatpush1.bf16.msra.mxu0 %v133
  %200 = vmatprep.subr.bf16.mxu0 0
  %201 = vmatpush1.bf16.msra.mxu0 0
  %202 = vmatprep.subr.bf16.mxu0 0
  %203 = vmatpush1.bf16.msra.mxu0 0
  %204 = vmatprep.subr.bf16.mxu0 0
  %205 = vmatpush1.bf16.msra.mxu0 0
  %206 = vmatprep.subr.bf16.mxu0 0
  %207 = vmatpush1.bf16.msra.mxu0 0
  %208 = vmatprep.subr.bf16.mxu0 0
  %209 = vmatpush1.bf16.msra.mxu0 0
  %210 = vmatprep.subr.bf16.mxu0 0
  %211 = vmatpush1.bf16.msra.mxu0 0
  %212 = vmatprep.subr.bf16.mxu0 0
  %213 = vmatpush1.bf16.msra.mxu0 0
  %214 = vmatprep.subr.bf16.mxu0 0
  %215 = vmatpush1.bf16.msra.mxu0 0
  %216 = vmatprep.subr.bf16.mxu0 0
  %217 = vmatpush1.bf16.msra.mxu0 0
  %218 = vmatprep.subr.bf16.mxu0 0
  %219 = vmatpush1.bf16.msra.mxu0 0
  %220 = vmatprep.subr.bf16.mxu0 0
  %221 = vmatpush1.bf16.msra.mxu0 0
  %222 = vmatprep.subr.bf16.mxu0 0
  %223 = vmatpush1.bf16.msra.mxu0 0
  %224 = vmatprep.subr.bf16.mxu0 0
  %225 = vmatpush1.bf16.msra.mxu0 0
  %226 = vmatprep.subr.bf16.mxu0 0
  %227 = vmatpush1.bf16.msra.mxu0 0
  %228 = vmatprep.subr.bf16.mxu0 0
  %229 = vmatpush1.bf16.msra.mxu0 0
  %230 = vmatprep.mubr.bf16.mxu0 0
  %231 = vmatmul.mubr.bf16.gmra.mrb[0].mxu0 %v129
  %v232 = vpop.f32.mrb[0].mxu0
  %v233 = vadd.f32 %v26, %v232
  %v234 = vpop.f32.mrb[0].mxu0
  %v235 = vadd.f32 %v26, %v234
  %v236 = vpop.f32.mrb[0].mxu0
  %v237 = vpop.f32.mrb[0].mxu0
  %238 = vdwg.mxu0
  %239 = vmatprep.subr.bf16.mxu0 %v142
  %240 = vmatpush1.bf16.msra.mxu0 %v139
  %241 = vmatprep.subr.bf16.mxu0 0
  %242 = vmatpush1.bf16.msra.mxu0 0
  %243 = vmatprep.subr.bf16.mxu0 0
  %244 = vmatpush1.bf16.msra.mxu0 0
  %245 = vmatprep.subr.bf16.mxu0 0
  %246 = vmatpush1.bf16.msra.mxu0 0
  %247 = vmatprep.subr.bf16.mxu0 0
  %248 = vmatpush1.bf16.msra.mxu0 0
  %249 = vmatprep.subr.bf16.mxu0 0
  %250 = vmatpush1.bf16.msra.mxu0 0
  %251 = vmatprep.subr.bf16.mxu0 0
  %252 = vmatpush1.bf16.msra.mxu0 0
  %253 = vmatprep.subr.bf16.mxu0 0
  %254 = vmatpush1.bf16.msra.mxu0 0
  %255 = vmatprep.subr.bf16.mxu0 0
  %256 = vmatpush1.bf16.msra.mxu0 0
  %257 = vmatprep.subr.bf16.mxu0 0
  %258 = vmatpush1.bf16.msra.mxu0 0
  %259 = vmatprep.subr.bf16.mxu0 0
  %260 = vmatpush1.bf16.msra.mxu0 0
  %261 = vmatprep.subr.bf16.mxu0 0
  %262 = vmatpush1.bf16.msra.mxu0 0
  %263 = vmatprep.subr.bf16.mxu0 0
  %264 = vmatpush1.bf16.msra.mxu0 0
  %265 = vmatprep.subr.bf16.mxu0 0
  %266 = vmatpush1.bf16.msra.mxu0 0
  %267 = vmatprep.subr.bf16.mxu0 0
  %268 = vmatpush1.bf16.msra.mxu0 0
  %269 = vmatprep.subr.bf16.mxu0 0
  %270 = vmatpush1.bf16.msra.mxu0 0
  %271 = vmatprep.mubr.bf16.mxu0 0
  %272 = vmatmul.mubr.bf16.gmra.mrb[0].mxu0 %v129
  %v273 = vpop.f32.mrb[0].mxu0
  %v274 = vadd.f32 %v26, %v273
  %v275 = vpop.f32.mrb[0].mxu0
  %v276 = vadd.f32 %v26, %v275
  %v277 = vpop.f32.mrb[0].mxu0
  %v278 = vpop.f32.mrb[0].mxu0
  %279 = vdwg.mxu0
  %280 = vmatprep.subr.bf16.mxu0 %v148
  %281 = vmatpush1.bf16.msra.mxu0 %v145
  %282 = vmatprep.subr.bf16.mxu0 0
  %283 = vmatpush1.bf16.msra.mxu0 0
  %284 = vmatprep.subr.bf16.mxu0 0
  %285 = vmatpush1.bf16.msra.mxu0 0
  %286 = vmatprep.subr.bf16.mxu0 0
  %287 = vmatpush1.bf16.msra.mxu0 0
  %288 = vmatprep.subr.bf16.mxu0 0
  %289 = vmatpush1.bf16.msra.mxu0 0
  %290 = vmatprep.subr.bf16.mxu0 0
  %291 = vmatpush1.bf16.msra.mxu0 0
  %292 = vmatprep.subr.bf16.mxu0 0
  %293 = vmatpush1.bf16.msra.mxu0 0
  %294 = vmatprep.subr.bf16.mxu0 0
  %295 = vmatpush1.bf16.msra.mxu0 0
  %296 = vmatprep.subr.bf16.mxu0 0
  %297 = vmatpush1.bf16.msra.mxu0 0
  %298 = vmatprep.subr.bf16.mxu0 0
  %299 = vmatpush1.bf16.msra.mxu0 0
  %300 = vmatprep.subr.bf16.mxu0 0
  %301 = vmatpush1.bf16.msra.mxu0 0
  %302 = vmatprep.subr.bf16.mxu0 0
  %303 = vmatpush1.bf16.msra.mxu0 0
  %304 = vmatprep.subr.bf16.mxu0 0
  %305 = vmatpush1.bf16.msra.mxu0 0
  %306 = vmatprep.subr.bf16.mxu0 0
  %307 = vmatpush1.bf16.msra.mxu0 0
  %308 = vmatprep.subr.bf16.mxu0 0
  %309 = vmatpush1.bf16.msra.mxu0 0
  %310 = vmatprep.subr.bf16.mxu0 0
  %311 = vmatpush1.bf16.msra.mxu0 0
  %312 = vmatprep.mubr.bf16.mxu0 0
  %313 = vmatmul.mubr.bf16.gmra.mrb[0].mxu0 %v129
  %v314 = vpop.f32.mrb[0].mxu0
  %v315 = vadd.f32 %v26, %v314
  %v316 = vpop.f32.mrb[0].mxu0
  %v317 = vadd.f32 %v26, %v316
  %v318 = vpop.f32.mrb[0].mxu0
  %v319 = vpop.f32.mrb[0].mxu0
  %320 = vdwg.mxu0
  %321 = vmatprep.subr.bf16.mxu0 %v154
  %322 = vmatpush1.bf16.msra.mxu0 %v151
  %323 = vmatprep.subr.bf16.mxu0 0
  %324 = vmatpush1.bf16.msra.mxu0 0
  %325 = vmatprep.subr.bf16.mxu0 0
  %326 = vmatpush1.bf16.msra.mxu0 0
  %327 = vmatprep.subr.bf16.mxu0 0
  %328 = vmatpush1.bf16.msra.mxu0 0
  %329 = vmatprep.subr.bf16.mxu0 0
  %330 = vmatpush1.bf16.msra.mxu0 0
  %331 = vmatprep.subr.bf16.mxu0 0
  %332 = vmatpush1.bf16.msra.mxu0 0
  %333 = vmatprep.subr.bf16.mxu0 0
  %334 = vmatpush1.bf16.msra.mxu0 0
  %335 = vmatprep.subr.bf16.mxu0 0
  %336 = vmatpush1.bf16.msra.mxu0 0
  %337 = vmatprep.subr.bf16.mxu0 0
  %338 = vmatpush1.bf16.msra.mxu0 0
  %339 = vmatprep.subr.bf16.mxu0 0
  %340 = vmatpush1.bf16.msra.mxu0 0
  %341 = vmatprep.subr.bf16.mxu0 0
  %342 = vmatpush1.bf16.msra.mxu0 0
  %343 = vmatprep.subr.bf16.mxu0 0
  %344 = vmatpush1.bf16.msra.mxu0 0
  %345 = vmatprep.subr.bf16.mxu0 0
  %346 = vmatpush1.bf16.msra.mxu0 0
  %347 = vmatprep.subr.bf16.mxu0 0
  %348 = vmatpush1.bf16.msra.mxu0 0
  %349 = vmatprep.subr.bf16.mxu0 0
  %350 = vmatpush1.bf16.msra.mxu0 0
  %351 = vmatprep.subr.bf16.mxu0 0
  %352 = vmatpush1.bf16.msra.mxu0 0
  %353 = vmatprep.mubr.bf16.mxu0 0
  %354 = vmatmul.mubr.bf16.gmra.mrb[0].mxu0 %v129
  %v355 = vpop.f32.mrb[0].mxu0
  %v356 = vadd.f32 %v26, %v355
  %v357 = vpop.f32.mrb[0].mxu0
  %v358 = vadd.f32 %v26, %v357
  %v359 = vpop.f32.mrb[0].mxu0
  %v360 = vpop.f32.mrb[0].mxu0
  %361 = vdwg.mxu0
  %362 = vmatprep.subr.bf16.mxu0 %v160
  %363 = vmatpush1.bf16.msra.mxu0 %v157
  %364 = vmatprep.subr.bf16.mxu0 0
  %365 = vmatpush1.bf16.msra.mxu0 0
  %366 = vmatprep.subr.bf16.mxu0 0
  %367 = vmatpush1.bf16.msra.mxu0 0
  %368 = vmatprep.subr.bf16.mxu0 0
  %369 = vmatpush1.bf16.msra.mxu0 0
  %370 = vmatprep.subr.bf16.mxu0 0
  %371 = vmatpush1.bf16.msra.mxu0 0
  %372 = vmatprep.subr.bf16.mxu0 0
  %373 = vmatpush1.bf16.msra.mxu0 0
  %374 = vmatprep.subr.bf16.mxu0 0
  %375 = vmatpush1.bf16.msra.mxu0 0
  %376 = vmatprep.subr.bf16.mxu0 0
  %377 = vmatpush1.bf16.msra.mxu0 0
  %378 = vmatprep.subr.bf16.mxu0 0
  %379 = vmatpush1.bf16.msra.mxu0 0
  %380 = vmatprep.subr.bf16.mxu0 0
  %381 = vmatpush1.bf16.msra.mxu0 0
  %382 = vmatprep.subr.bf16.mxu0 0
  %383 = vmatpush1.bf16.msra.mxu0 0
  %384 = vmatprep.subr.bf16.mxu0 0
  %385 = vmatpush1.bf16.msra.mxu0 0
  %386 = vmatprep.subr.bf16.mxu0 0
  %387 = vmatpush1.bf16.msra.mxu0 0
  %388 = vmatprep.subr.bf16.mxu0 0
  %389 = vmatpush1.bf16.msra.mxu0 0
  %390 = vmatprep.subr.bf16.mxu0 0
  %391 = vmatpush1.bf16.msra.mxu0 0
  %392 = vmatprep.subr.bf16.mxu0 0
  %393 = vmatpush1.bf16.msra.mxu0 0
  %394 = vmatprep.mubr.bf16.mxu0 0
  %395 = vmatmul.mubr.bf16.gmra.mrb[0].mxu0 %v129
  %v396 = vpop.f32.mrb[0].mxu0
  %v397 = vadd.f32 %v26, %v396
  %v398 = vpop.f32.mrb[0].mxu0
  %v399 = vadd.f32 %v26, %v398
  %v400 = vpop.f32.mrb[0].mxu0
  %v401 = vpop.f32.mrb[0].mxu0
  %402 = vdwg.mxu0
  %403 = vmatprep.subr.bf16.mxu0 %v166
  %404 = vmatpush1.bf16.msra.mxu0 %v163
  %405 = vmatprep.subr.bf16.mxu0 0
  %406 = vmatpush1.bf16.msra.mxu0 0
  %407 = vmatprep.subr.bf16.mxu0 0
  %408 = vmatpush1.bf16.msra.mxu0 0
  %409 = vmatprep.subr.bf16.mxu0 0
  %410 = vmatpush1.bf16.msra.mxu0 0
  %411 = vmatprep.subr.bf16.mxu0 0
  %412 = vmatpush1.bf16.msra.mxu0 0
  %413 = vmatprep.subr.bf16.mxu0 0
  %414 = vmatpush1.bf16.msra.mxu0 0
  %415 = vmatprep.subr.bf16.mxu0 0
  %416 = vmatpush1.bf16.msra.mxu0 0
  %417 = vmatprep.subr.bf16.mxu0 0
  %418 = vmatpush1.bf16.msra.mxu0 0
  %419 = vmatprep.subr.bf16.mxu0 0
  %420 = vmatpush1.bf16.msra.mxu0 0
  %421 = vmatprep.subr.bf16.mxu0 0
  %422 = vmatpush1.bf16.msra.mxu0 0
  %423 = vmatprep.subr.bf16.mxu0 0
  %424 = vmatpush1.bf16.msra.mxu0 0
  %425 = vmatprep.subr.bf16.mxu0 0
  %426 = vmatpush1.bf16.msra.mxu0 0
  %427 = vmatprep.subr.bf16.mxu0 0
  %428 = vmatpush1.bf16.msra.mxu0 0
  %429 = vmatprep.subr.bf16.mxu0 0
  %430 = vmatpush1.bf16.msra.mxu0 0
  %431 = vmatprep.subr.bf16.mxu0 0
  %432 = vmatpush1.bf16.msra.mxu0 0
  %433 = vmatprep.subr.bf16.mxu0 0
  %434 = vmatpush1.bf16.msra.mxu0 0
  %435 = vmatprep.mubr.bf16.mxu0 0
  %436 = vmatmul.mubr.bf16.gmra.mrb[0].mxu0 %v129
  %v437 = vpop.f32.mrb[0].mxu0
  %v438 = vadd.f32 %v26, %v437
  %v439 = vpop.f32.mrb[0].mxu0
  %v440 = vadd.f32 %v26, %v439
  %v441 = vpop.f32.mrb[0].mxu0
  %v442 = vpop.f32.mrb[0].mxu0
  %443 = vdwg.mxu0
  %444 = vmatprep.subr.bf16.mxu0 %v172
  %445 = vmatpush1.bf16.msra.mxu0 %v169
  %446 = vmatprep.subr.bf16.mxu0 0
  %447 = vmatpush1.bf16.msra.mxu0 0
  %448 = vmatprep.subr.bf16.mxu0 0
  %449 = vmatpush1.bf16.msra.mxu0 0
  %450 = vmatprep.subr.bf16.mxu0 0
  %451 = vmatpush1.bf16.msra.mxu0 0
  %452 = vmatprep.subr.bf16.mxu0 0
  %453 = vmatpush1.bf16.msra.mxu0 0
  %454 = vmatprep.subr.bf16.mxu0 0
  %455 = vmatpush1.bf16.msra.mxu0 0
  %456 = vmatprep.subr.bf16.mxu0 0
  %457 = vmatpush1.bf16.msra.mxu0 0
  %458 = vmatprep.subr.bf16.mxu0 0
  %459 = vmatpush1.bf16.msra.mxu0 0
  %460 = vmatprep.subr.bf16.mxu0 0
  %461 = vmatpush1.bf16.msra.mxu0 0
  %462 = vmatprep.subr.bf16.mxu0 0
  %463 = vmatpush1.bf16.msra.mxu0 0
  %464 = vmatprep.subr.bf16.mxu0 0
  %465 = vmatpush1.bf16.msra.mxu0 0
  %466 = vmatprep.subr.bf16.mxu0 0
  %467 = vmatpush1.bf16.msra.mxu0 0
  %468 = vmatprep.subr.bf16.mxu0 0
  %469 = vmatpush1.bf16.msra.mxu0 0
  %470 = vmatprep.subr.bf16.mxu0 0
  %471 = vmatpush1.bf16.msra.mxu0 0
  %472 = vmatprep.subr.bf16.mxu0 0
  %473 = vmatpush1.bf16.msra.mxu0 0
  %474 = vmatprep.subr.bf16.mxu0 0
  %475 = vmatpush1.bf16.msra.mxu0 0
  %476 = vmatprep.mubr.bf16.mxu0 0
  %477 = vmatmul.mubr.bf16.gmra.mrb[0].mxu0 %v129
  %v478 = vpop.f32.mrb[0].mxu0
  %v479 = vadd.f32 %v26, %v478
  %v480 = vpop.f32.mrb[0].mxu0
  %v481 = vadd.f32 %v26, %v480
  %v482 = vpop.f32.mrb[0].mxu0
  %v483 = vpop.f32.mrb[0].mxu0
  %484 = vdwg.mxu0
  %485 = vmatprep.subr.bf16.mxu0 %v178
  %486 = vmatpush1.bf16.msra.mxu0 %v175
  %487 = vmatprep.subr.bf16.mxu0 0
  %488 = vmatpush1.bf16.msra.mxu0 0
  %489 = vmatprep.subr.bf16.mxu0 0
  %490 = vmatpush1.bf16.msra.mxu0 0
  %491 = vmatprep.subr.bf16.mxu0 0
  %492 = vmatpush1.bf16.msra.mxu0 0
  %493 = vmatprep.subr.bf16.mxu0 0
  %494 = vmatpush1.bf16.msra.mxu0 0
  %495 = vmatprep.subr.bf16.mxu0 0
  %496 = vmatpush1.bf16.msra.mxu0 0
  %497 = vmatprep.subr.bf16.mxu0 0
  %498 = vmatpush1.bf16.msra.mxu0 0
  %499 = vmatprep.subr.bf16.mxu0 0
  %500 = vmatpush1.bf16.msra.mxu0 0
  %501 = vmatprep.subr.bf16.mxu0 0
  %502 = vmatpush1.bf16.msra.mxu0 0
  %503 = vmatprep.subr.bf16.mxu0 0
  %504 = vmatpush1.bf16.msra.mxu0 0
  %505 = vmatprep.subr.bf16.mxu0 0
  %506 = vmatpush1.bf16.msra.mxu0 0
  %507 = vmatprep.subr.bf16.mxu0 0
  %508 = vmatpush1.bf16.msra.mxu0 0
  %509 = vmatprep.subr.bf16.mxu0 0
  %510 = vmatpush1.bf16.msra.mxu0 0
  %511 = vmatprep.subr.bf16.mxu0 0
  %512 = vmatpush1.bf16.msra.mxu0 0
  %513 = vmatprep.subr.bf16.mxu0 0
  %514 = vmatpush1.bf16.msra.mxu0 0
  %515 = vmatprep.subr.bf16.mxu0 0
  %516 = vmatpush1.bf16.msra.mxu0 0
  %517 = vmatprep.mubr.bf16.mxu0 0
  %518 = vmatmul.mubr.bf16.gmra.mrb[0].mxu0 %v129
  %v519 = vpop.f32.mrb[0].mxu0
  %v520 = vadd.f32 %v26, %v519
  %v521 = vpop.f32.mrb[0].mxu0
  %v522 = vadd.f32 %v26, %v521
  %v523 = vpop.f32.mrb[0].mxu0
  %v524 = vpop.f32.mrb[0].mxu0
  %525 = vdwg.mxu0
  %526 = vmatprep.subr.bf16.mxu0 %v184
  %527 = vmatpush1.bf16.msra.mxu0 %v181
  %528 = vmatprep.subr.bf16.mxu0 0
  %529 = vmatpush1.bf16.msra.mxu0 0
  %530 = vmatprep.subr.bf16.mxu0 0
  %531 = vmatpush1.bf16.msra.mxu0 0
  %532 = vmatprep.subr.bf16.mxu0 0
  %533 = vmatpush1.bf16.msra.mxu0 0
  %534 = vmatprep.subr.bf16.mxu0 0
  %535 = vmatpush1.bf16.msra.mxu0 0
  %536 = vmatprep.subr.bf16.mxu0 0
  %537 = vmatpush1.bf16.msra.mxu0 0
  %538 = vmatprep.subr.bf16.mxu0 0
  %539 = vmatpush1.bf16.msra.mxu0 0
  %540 = vmatprep.subr.bf16.mxu0 0
  %541 = vmatpush1.bf16.msra.mxu0 0
  %542 = vmatprep.subr.bf16.mxu0 0
  %543 = vmatpush1.bf16.msra.mxu0 0
  %544 = vmatprep.subr.bf16.mxu0 0
  %545 = vmatpush1.bf16.msra.mxu0 0
  %546 = vmatprep.subr.bf16.mxu0 0
  %547 = vmatpush1.bf16.msra.mxu0 0
  %548 = vmatprep.subr.bf16.mxu0 0
  %549 = vmatpush1.bf16.msra.mxu0 0
  %550 = vmatprep.subr.bf16.mxu0 0
  %551 = vmatpush1.bf16.msra.mxu0 0
  %552 = vmatprep.subr.bf16.mxu0 0
  %553 = vmatpush1.bf16.msra.mxu0 0
  %554 = vmatprep.subr.bf16.mxu0 0
  %555 = vmatpush1.bf16.msra.mxu0 0
  %556 = vmatprep.subr.bf16.mxu0 0
  %557 = vmatpush1.bf16.msra.mxu0 0
  %558 = vmatprep.mubr.bf16.mxu0 0
  %559 = vmatmul.mubr.bf16.gmra.mrb[0].mxu0 %v129
  %v560 = vpop.f32.mrb[0].mxu0
  %v561 = vadd.f32 %v26, %v560
  %v562 = vpop.f32.mrb[0].mxu0
  %v563 = vadd.f32 %v26, %v562
  %v564 = vpop.f32.mrb[0].mxu0
  %v565 = vpop.f32.mrb[0].mxu0
  %566 = vdwg.mxu0
  %567 = vmatprep.subr.bf16.mxu0 %v190
  %568 = vmatpush1.bf16.msra.mxu0 %v187
  %569 = vmatprep.subr.bf16.mxu0 0
  %570 = vmatpush1.bf16.msra.mxu0 0
  %571 = vmatprep.subr.bf16.mxu0 0
  %572 = vmatpush1.bf16.msra.mxu0 0
  %573 = vmatprep.subr.bf16.mxu0 0
  %574 = vmatpush1.bf16.msra.mxu0 0
  %575 = vmatprep.subr.bf16.mxu0 0
  %576 = vmatpush1.bf16.msra.mxu0 0
  %577 = vmatprep.subr.bf16.mxu0 0
  %578 = vmatpush1.bf16.msra.mxu0 0
  %579 = vmatprep.subr.bf16.mxu0 0
  %580 = vmatpush1.bf16.msra.mxu0 0
  %581 = vmatprep.subr.bf16.mxu0 0
  %582 = vmatpush1.bf16.msra.mxu0 0
  %583 = vmatprep.subr.bf16.mxu0 0
  %584 = vmatpush1.bf16.msra.mxu0 0
  %585 = vmatprep.subr.bf16.mxu0 0
  %586 = vmatpush1.bf16.msra.mxu0 0
  %587 = vmatprep.subr.bf16.mxu0 0
  %588 = vmatpush1.bf16.msra.mxu0 0
  %589 = vmatprep.subr.bf16.mxu0 0
  %590 = vmatpush1.bf16.msra.mxu0 0
  %591 = vmatprep.subr.bf16.mxu0 0
  %592 = vmatpush1.bf16.msra.mxu0 0
  %593 = vmatprep.subr.bf16.mxu0 0
  %594 = vmatpush1.bf16.msra.mxu0 0
  %595 = vmatprep.subr.bf16.mxu0 0
  %596 = vmatpush1.bf16.msra.mxu0 0
  %597 = vmatprep.subr.bf16.mxu0 0
  %598 = vmatpush1.bf16.msra.mxu0 0
  %599 = vmatprep.mubr.bf16.mxu0 0
  %600 = vmatmul.mubr.bf16.gmra.mrb[0].mxu0 %v129
  %v601 = vpop.f32.mrb[0].mxu0
  %v602 = vadd.f32 %v26, %v601
  %v603 = vpop.f32.mrb[0].mxu0
  %v604 = vadd.f32 %v26, %v603
  %v605 = vpop.f32.mrb[0].mxu0
  %v606 = vpop.f32.mrb[0].mxu0
  %607 = vdwg.mxu0
  %608 = vmatprep.subr.bf16.mxu0 %v196
  %609 = vmatpush1.bf16.msra.mxu0 %v193
  %610 = vmatprep.subr.bf16.mxu0 0
  %611 = vmatpush1.bf16.msra.mxu0 0
  %612 = vmatprep.subr.bf16.mxu0 0
  %613 = vmatpush1.bf16.msra.mxu0 0
  %614 = vmatprep.subr.bf16.mxu0 0
  %615 = vmatpush1.bf16.msra.mxu0 0
  %616 = vmatprep.subr.bf16.mxu0 0
  %617 = vmatpush1.bf16.msra.mxu0 0
  %618 = vmatprep.subr.bf16.mxu0 0
  %619 = vmatpush1.bf16.msra.mxu0 0
  %620 = vmatprep.subr.bf16.mxu0 0
  %621 = vmatpush1.bf16.msra.mxu0 0
  %622 = vmatprep.subr.bf16.mxu0 0
  %623 = vmatpush1.bf16.msra.mxu0 0
  %624 = vmatprep.subr.bf16.mxu0 0
  %625 = vmatpush1.bf16.msra.mxu0 0
  %626 = vmatprep.subr.bf16.mxu0 0
  %627 = vmatpush1.bf16.msra.mxu0 0
  %628 = vmatprep.subr.bf16.mxu0 0
  %629 = vmatpush1.bf16.msra.mxu0 0
  %630 = vmatprep.subr.bf16.mxu0 0
  %631 = vmatpush1.bf16.msra.mxu0 0
  %632 = vmatprep.subr.bf16.mxu0 0
  %633 = vmatpush1.bf16.msra.mxu0 0
  %634 = vmatprep.subr.bf16.mxu0 0
  %635 = vmatpush1.bf16.msra.mxu0 0
  %636 = vmatprep.subr.bf16.mxu0 0
  %637 = vmatpush1.bf16.msra.mxu0 0
  %638 = vmatprep.subr.bf16.mxu0 0
  %639 = vmatpush1.bf16.msra.mxu0 0
  %640 = vmatprep.mubr.bf16.mxu0 0
  %641 = vmatmul.mubr.bf16.gmra.mrb[0].mxu0 %v129
  %v642 = vpop.f32.mrb[0].mxu0
  %v643 = vadd.f32 %v26, %v642
  %v644 = vpop.f32.mrb[0].mxu0
  %v645 = vadd.f32 %v26, %v644
  %v646 = vpop.f32.mrb[0].mxu0
  %v647 = vpop.f32.mrb[0].mxu0
  %648 = vdwg.mxu0
  %v649 = vmax.f32 %v233, 0.0
  %v650 = vmax.f32 %v235, 0.0
  %v651 = vmax.f32 %v274, 0.0
  %v652 = vmax.f32 %v276, 0.0
  %v653 = vmax.f32 %v315, 0.0
  %v654 = vmax.f32 %v317, 0.0
  %v655 = vmax.f32 %v356, 0.0
  %v656 = vmax.f32 %v358, 0.0
  %v657 = vmax.f32 %v397, 0.0
  %v658 = vmax.f32 %v399, 0.0
  %v659 = vmax.f32 %v438, 0.0
  %v660 = vmax.f32 %v440, 0.0
  %v661 = vmax.f32 %v479, 0.0
  %v662 = vmax.f32 %v481, 0.0
  %v663 = vmax.f32 %v520, 0.0
  %v664 = vmax.f32 %v522, 0.0
  %v665 = vmax.f32 %v561, 0.0
  %v666 = vmax.f32 %v563, 0.0
  %v667 = vmax.f32 %v602, 0.0
  %v668 = vmax.f32 %v604, 0.0
  %v669 = vmax.f32 %v643, 0.0
  %v670 = vmax.f32 %v645, 0.0
  %v671 = vpack.c.bf16 %v649, %v649
  %v672 = vpack.c.bf16 %v650, %v650
  %v673 = vpack.c.bf16 %v651, %v651
  %v674 = vpack.c.bf16 %v652, %v652
  %v675 = vpack.c.bf16 %v653, %v653
  %v676 = vpack.c.bf16 %v654, %v654
  %v677 = vpack.c.bf16 %v655, %v655
  %v678 = vpack.c.bf16 %v656, %v656
  %v679 = vpack.c.bf16 %v657, %v657
  %v680 = vpack.c.bf16 %v658, %v658
  %v681 = vpack.c.bf16 %v659, %v659
  %v682 = vpack.c.bf16 %v660, %v660
  %v683 = vpack.c.bf16 %v661, %v661
  %v684 = vpack.c.bf16 %v662, %v662
  %v685 = vpack.c.bf16 %v663, %v663
  %v686 = vpack.c.bf16 %v664, %v664
  %v687 = vpack.c.bf16 %v665, %v665
  %v688 = vpack.c.bf16 %v666, %v666
  %v689 = vpack.c.bf16 %v667, %v667
  %v690 = vpack.c.bf16 %v668, %v668
  %v691 = vpack.c.bf16 %v669, %v669
  %v692 = vpack.c.bf16 %v670, %v670
  %v715 = vcombine.low %v671, %v672
  %v716 = vcombine.low %v673, %v674
  %v718 = vunpack.c.l.s4 1983009808
  %v719 = vunpack.c.0.s8 %v718
  %v720 = vlaneseq
  %v721 = vshrl.u32 %v720, 7
  %v722 = vsub.s32 %v719, %v721
  %v723 = vrot.slane %v715, %v722
  %v725 = vunpack.c.l.s4 1983009808
  %v726 = vunpack.c.0.s8 %v725
  %v727 = vlaneseq
  %v728 = vshrl.u32 %v727, 7
  %v729 = vsub.s32 %v726, %v728
  %v730 = vrot.slane %v716, %v729
  %v731 = vcombine.low %v723, %v730
  %v732 = vcombine.low %v675, %v676
  %v733 = vcombine.low %v677, %v678
  %v735 = vunpack.c.l.s4 1983009808
  %v736 = vunpack.c.0.s8 %v735
  %v737 = vlaneseq
  %v738 = vshrl.u32 %v737, 7
  %v739 = vsub.s32 %v736, %v738
  %v740 = vrot.slane %v732, %v739
  %v742 = vunpack.c.l.s4 1983009808
  %v743 = vunpack.c.0.s8 %v742
  %v744 = vlaneseq
  %v745 = vshrl.u32 %v744, 7
  %v746 = vsub.s32 %v743, %v745
  %v747 = vrot.slane %v733, %v746
  %v748 = vcombine.low %v740, %v747
  %v749 = vcombine.low %v679, %v680
  %v750 = vcombine.low %v681, %v682
  %v752 = vunpack.c.l.s4 1983009808
  %v753 = vunpack.c.0.s8 %v752
  %v754 = vlaneseq
  %v755 = vshrl.u32 %v754, 7
  %v756 = vsub.s32 %v753, %v755
  %v757 = vrot.slane %v749, %v756
  %v759 = vunpack.c.l.s4 1983009808
  %v760 = vunpack.c.0.s8 %v759
  %v761 = vlaneseq
  %v762 = vshrl.u32 %v761, 7
  %v763 = vsub.s32 %v760, %v762
  %v764 = vrot.slane %v750, %v763
  %v765 = vcombine.low %v757, %v764
  %v766 = vcombine.low %v683, %v684
  %v767 = vcombine.low %v685, %v686
  %v769 = vunpack.c.l.s4 1983009808
  %v770 = vunpack.c.0.s8 %v769
  %v771 = vlaneseq
  %v772 = vshrl.u32 %v771, 7
  %v773 = vsub.s32 %v770, %v772
  %v774 = vrot.slane %v766, %v773
  %v776 = vunpack.c.l.s4 1983009808
  %v777 = vunpack.c.0.s8 %v776
  %v778 = vlaneseq
  %v779 = vshrl.u32 %v778, 7
  %v780 = vsub.s32 %v777, %v779
  %v781 = vrot.slane %v767, %v780
  %v782 = vcombine.low %v774, %v781
  %v783 = vcombine.low %v687, %v688
  %v784 = vcombine.low %v689, %v690
  %v786 = vunpack.c.l.s4 1983009808
  %v787 = vunpack.c.0.s8 %v786
  %v788 = vlaneseq
  %v789 = vshrl.u32 %v788, 7
  %v790 = vsub.s32 %v787, %v789
  %v791 = vrot.slane %v783, %v790
  %v793 = vunpack.c.l.s4 1983009808
  %v794 = vunpack.c.0.s8 %v793
  %v795 = vlaneseq
  %v796 = vshrl.u32 %v795, 7
  %v797 = vsub.s32 %v794, %v796
  %v798 = vrot.slane %v784, %v797
  %v799 = vcombine.low %v791, %v798
  %v800 = vcombine.low %v691, %v692
  %v802 = vunpack.c.l.s4 1983009808
  %v803 = vunpack.c.0.s8 %v802
  %v804 = vlaneseq
  %v805 = vshrl.u32 %v804, 7
  %v806 = vsub.s32 %v803, %v805
  %v807 = vrot.slane %v800, %v806
  %vm814 = vcmask 1041408
  %vm815 = vsmask.f32 1280
  %vm816 = vmand %vm814, %vm815
  %vm817 = vcmask 1043458
  %vm818 = vsmask.f32 3328
  %vm819 = vmand %vm817, %vm818
  %vm820 = vmor %vm819, %vm816
  %vm821 = vcmask 1045508
  %vm822 = vsmask.f32 5376
  %vm823 = vmand %vm821, %vm822
  %vm824 = vmor %vm823, %vm820
  %vm825 = vcmask 1047558
  %vm826 = vsmask.f32 7424
  %vm827 = vmand %vm825, %vm826
  %vm828 = vmor %vm827, %vm824
  %v829 = vld [vmem:[%s3] sm:$0xff]
  %v830 = vsel %vm828, %v731, %v829
  %831 = vst [vmem:[%s3] sm:$0xff] %v830
  %v832 = vld [vmem:[%s3 + $0x8] sm:$0xff]
  %v833 = vsel %vm828, %v748, %v832
  %834 = vst [vmem:[%s3 + $0x8] sm:$0xff] %v833
  %v835 = vld [vmem:[%s3 + $0x10] sm:$0xff]
  %v836 = vsel %vm828, %v765, %v835
  %837 = vst [vmem:[%s3 + $0x10] sm:$0xff] %v836
  %v838 = vld [vmem:[%s3 + $0x18] sm:$0xff]
  %v839 = vsel %vm828, %v782, %v838
  %840 = vst [vmem:[%s3 + $0x18] sm:$0xff] %v839
  %v841 = vld [vmem:[%s3 + $0x20] sm:$0xff]
  %v842 = vsel %vm828, %v799, %v841
  %843 = vst [vmem:[%s3 + $0x20] sm:$0xff] %v842
  %vm844 = vcmask 338946
  %vm845 = vmand %vm844, %vm818
  %vm846 = vmor %vm845, %vm816
  %v847 = vld [vmem:[%s3 + $0x28] sm:$0xf]
  %v848 = vsel %vm846, %v807, %v847
  %849 = vst [vmem:[%s3 + $0x28] sm:$0xf] %v848
  // Predicated region
  $region14: #{net_forward.5} parent=0 // pred_check
    _
  $region15: #{net_forward.5} parent=0 // pred_check_branch
    %851 = sbr.rel (0) target = $region17
  $region16: #{net_forward.5} parent=0 // pred_region
    _
  $region17: #{net_forward.5} parent=0 // pred_fallthru
    _
  // Predicated region
  $region18: #{net_forward.5} parent=0 // pred_check
    _
  $region19: #{net_forward.5} parent=0 // pred_check_branch
    %853 = sbr.rel (0) target = $region21
  $region20: #{net_forward.5} parent=0 // pred_region
    _
  $region21: #{net_forward.5} parent=0 // pred_fallthru
    _

// kernel: net_forward.6
$region0: #{net_forward.6}
  #allocation0 [shape = 'u32[]', space=smem, size = 0x4, offset = 0x4, fixed_abs, tag = 'smem constant byte address 0x4 - core index']
  #allocation1 [shape = 'u32[144,128]{1,0:T(1,128)}', space=vmem, size = 0x12000, scoped, tag = 'internal scratch']
  %s0 = inlined_call_operand.vmem [shape: bf16[4,12,646], index: 0, kind: input, shape index: {}]
  %s1 = inlined_call_operand.vmem [shape: bf16[8,12], index: 1, kind: input, shape index: {}]
  %s2 = inlined_call_operand.vmem [shape: f32[8,1], index: 2, kind: input, shape index: {}]
  %s3 = inlined_call_operand.vmem [shape: bf16[8,646], index: 3, kind: output, shape index: {}]
  %s4 = sld [smem:[#allocation0]]
  $region22: #{net_forward.6} parent=0
    _
  %s6 = ssub.s32 1, %s4
  %s7 = scalar_select 0, %s6, %s4
  // Predicated region
  $region2: #{net_forward.6} parent=0 // pred_check
    _
  $region3: #{net_forward.6} parent=0 // pred_check_branch
    %9 = sbr.rel (0) target = $region5
  $region4: #{net_forward.6} parent=0 // pred_region
    _
  $region5: #{net_forward.6} parent=0 // pred_fallthru
    _
  // Predicated region
  $region6: #{net_forward.6} parent=0 // pred_check
    _
  $region7: #{net_forward.6} parent=0 // pred_check_branch
    %11 = sbr.rel (0) target = $region9
  $region8: #{net_forward.6} parent=0 // pred_region
    _
  $region9: #{net_forward.6} parent=0 // pred_fallthru
    _
  // Predicated region
  $region10: #{net_forward.6} parent=0 // pred_check
    _
  $region11: #{net_forward.6} parent=0 // pred_check_branch
    %13 = sbr.rel (0) target = $region13
  $region12: #{net_forward.6} parent=0 // pred_region
    _
  $region13: #{net_forward.6} parent=0 // pred_fallthru
    _
  %v15 = vld [vmem:[%s1] sm:$0xf]
  %v16 = vld [vmem:[%s0] sm:$0xff]
  %v17 = vld [vmem:[%s0 + $0x8] sm:$0xff]
  %v18 = vld [vmem:[%s0 + $0x10] sm:$0xff]
  %v19 = vld [vmem:[%s0 + $0x18] sm:$0x33]
  %v20 = vld [vmem:[%s0 + $0x20] sm:$0x33]
  %v21 = vld [vmem:[%s0 + $0x28] sm:$0x33]
  %v28 = vunpack.c.l.b16 %v16
  %v29 = vunpack.c.h.b16 %v16
  %v30 = vunpack.c.l.b16 %v17
  %v31 = vunpack.c.h.b16 %v17
  %v32 = vunpack.c.l.b16 %v18
  %v33 = vunpack.c.h.b16 %v18
  %v34 = vunpack.c.l.b16 %v19
  %v35 = vunpack.c.h.b16 %v19
  %v36 = vunpack.c.l.b16 %v20
  %v37 = vunpack.c.h.b16 %v20
  %v38 = vunpack.c.l.b16 %v21
  %v39 = vunpack.c.h.b16 %v21
  %v40 = vpack.c.b16 %v34, %v28
  %v41 = vpack.c.b16 %v35, %v29
  %v42 = vpack.c.b16 %v36, %v30
  %v43 = vpack.c.b16 %v37, %v31
  %v44 = vpack.c.b16 %v38, %v32
  %v45 = vpack.c.b16 %v39, %v33
  %vm46 = vcmask 97280
  %v48 = vsel %vm46, %v15, 0
  %vm50 = vcmask 1045504
  %v52 = vsel %vm50, %v40, 0
  %v55 = vsel %vm50, %v41, 0
  %v58 = vsel %vm50, %v42, 0
  %v61 = vsel %vm50, %v43, 0
  %v64 = vsel %vm50, %v44, 0
  %v67 = vsel %vm50, %v45, 0
  %69 = vmatprep.subr.bf16.mxu0 %v55
  %70 = vmatpush1.bf16.msra.mxu0 %v52
  %71 = vmatprep.subr.bf16.mxu0 0
  %72 = vmatpush1.bf16.msra.mxu0 0
  %73 = vmatprep.subr.bf16.mxu0 0
  %74 = vmatpush1.bf16.msra.mxu0 0
  %75 = vmatprep.subr.bf16.mxu0 0
  %76 = vmatpush1.bf16.msra.mxu0 0
  %77 = vmatprep.subr.bf16.mxu0 0
  %78 = vmatpush1.bf16.msra.mxu0 0
  %79 = vmatprep.subr.bf16.mxu0 0
  %80 = vmatpush1.bf16.msra.mxu0 0
  %81 = vmatprep.subr.bf16.mxu0 0
  %82 = vmatpush1.bf16.msra.mxu0 0
  %83 = vmatprep.subr.bf16.mxu0 0
  %84 = vmatpush1.bf16.msra.mxu0 0
  %85 = vmatprep.subr.bf16.mxu0 0
  %86 = vmatpush1.bf16.msra.mxu0 0
  %87 = vmatprep.subr.bf16.mxu0 0
  %88 = vmatpush1.bf16.msra.mxu0 0
  %89 = vmatprep.subr.bf16.mxu0 0
  %90 = vmatpush1.bf16.msra.mxu0 0
  %91 = vmatprep.subr.bf16.mxu0 0
  %92 = vmatpush1.bf16.msra.mxu0 0
  %93 = vmatprep.subr.bf16.mxu0 0
  %94 = vmatpush1.bf16.msra.mxu0 0
  %95 = vmatprep.subr.bf16.mxu0 0
  %96 = vmatpush1.bf16.msra.mxu0 0
  %97 = vmatprep.subr.bf16.mxu0 0
  %98 = vmatpush1.bf16.msra.mxu0 0
  %99 = vmatprep.subr.bf16.mxu0 0
  %100 = vmatpush1.bf16.msra.mxu0 0
  %101 = vmatprep.mubr.bf16.mxu0 0
  %102 = vmatmul.mubr.bf16.gmra.mrb[0].mxu0 %v48
  %v103 = vpop.f32.mrb[0].mxu0
  %v104 = vadd.f32 0.0, %v103
  %v105 = vpop.f32.mrb[0].mxu0
  %v106 = vadd.f32 0.0, %v105
  %v107 = vpop.f32.mrb[0].mxu0
  %v108 = vpop.f32.mrb[0].mxu0
  %109 = vdwg.mxu0
  %110 = vmatprep.subr.bf16.mxu0 %v61
  %111 = vmatpush1.bf16.msra.mxu0 %v58
  %112 = vmatprep.subr.bf16.mxu0 0
  %113 = vmatpush1.bf16.msra.mxu0 0
  %114 = vmatprep.subr.bf16.mxu0 0
  %115 = vmatpush1.bf16.msra.mxu0 0
  %116 = vmatprep.subr.bf16.mxu0 0
  %117 = vmatpush1.bf16.msra.mxu0 0
  %118 = vmatprep.subr.bf16.mxu0 0
  %119 = vmatpush1.bf16.msra.mxu0 0
  %120 = vmatprep.subr.bf16.mxu0 0
  %121 = vmatpush1.bf16.msra.mxu0 0
  %122 = vmatprep.subr.bf16.mxu0 0
  %123 = vmatpush1.bf16.msra.mxu0 0
  %124 = vmatprep.subr.bf16.mxu0 0
  %125 = vmatpush1.bf16.msra.mxu0 0
  %126 = vmatprep.subr.bf16.mxu0 0
  %127 = vmatpush1.bf16.msra.mxu0 0
  %128 = vmatprep.subr.bf16.mxu0 0
  %129 = vmatpush1.bf16.msra.mxu0 0
  %130 = vmatprep.subr.bf16.mxu0 0
  %131 = vmatpush1.bf16.msra.mxu0 0
  %132 = vmatprep.subr.bf16.mxu0 0
  %133 = vmatpush1.bf16.msra.mxu0 0
  %134 = vmatprep.subr.bf16.mxu0 0
  %135 = vmatpush1.bf16.msra.mxu0 0
  %136 = vmatprep.subr.bf16.mxu0 0
  %137 = vmatpush1.bf16.msra.mxu0 0
  %138 = vmatprep.subr.bf16.mxu0 0
  %139 = vmatpush1.bf16.msra.mxu0 0
  %140 = vmatprep.subr.bf16.mxu0 0
  %141 = vmatpush1.bf16.msra.mxu0 0
  %142 = vmatprep.mubr.bf16.mxu0 0
  %143 = vmatmul.mubr.bf16.gmra.mrb[0].mxu0 %v48
  %v144 = vpop.f32.mrb[0].mxu0
  %v145 = vadd.f32 0.0, %v144
  %v146 = vpop.f32.mrb[0].mxu0
  %v147 = vadd.f32 0.0, %v146
  %v148 = vpop.f32.mrb[0].mxu0
  %v149 = vpop.f32.mrb[0].mxu0
  %150 = vdwg.mxu0
  %151 = vmatprep.subr.bf16.mxu0 %v67
  %152 = vmatpush1.bf16.msra.mxu0 %v64
  %153 = vmatprep.subr.bf16.mxu0 0
  %154 = vmatpush1.bf16.msra.mxu0 0
  %155 = vmatprep.subr.bf16.mxu0 0
  %156 = vmatpush1.bf16.msra.mxu0 0
  %157 = vmatprep.subr.bf16.mxu0 0
  %158 = vmatpush1.bf16.msra.mxu0 0
  %159 = vmatprep.subr.bf16.mxu0 0
  %160 = vmatpush1.bf16.msra.mxu0 0
  %161 = vmatprep.subr.bf16.mxu0 0
  %162 = vmatpush1.bf16.msra.mxu0 0
  %163 = vmatprep.subr.bf16.mxu0 0
  %164 = vmatpush1.bf16.msra.mxu0 0
  %165 = vmatprep.subr.bf16.mxu0 0
  %166 = vmatpush1.bf16.msra.mxu0 0
  %167 = vmatprep.subr.bf16.mxu0 0
  %168 = vmatpush1.bf16.msra.mxu0 0
  %169 = vmatprep.subr.bf16.mxu0 0
  %170 = vmatpush1.bf16.msra.mxu0 0
  %171 = vmatprep.subr.bf16.mxu0 0
  %172 = vmatpush1.bf16.msra.mxu0 0
  %173 = vmatprep.subr.bf16.mxu0 0
  %174 = vmatpush1.bf16.msra.mxu0 0
  %175 = vmatprep.subr.bf16.mxu0 0
  %176 = vmatpush1.bf16.msra.mxu0 0
  %177 = vmatprep.subr.bf16.mxu0 0
  %178 = vmatpush1.bf16.msra.mxu0 0
  %179 = vmatprep.subr.bf16.mxu0 0
  %180 = vmatpush1.bf16.msra.mxu0 0
  %181 = vmatprep.subr.bf16.mxu0 0
  %182 = vmatpush1.bf16.msra.mxu0 0
  %183 = vmatprep.mubr.bf16.mxu0 0
  %184 = vmatmul.mubr.bf16.gmra.mrb[0].mxu0 %v48
  %v185 = vpop.f32.mrb[0].mxu0
  %v186 = vadd.f32 0.0, %v185
  %v187 = vpop.f32.mrb[0].mxu0
  %v188 = vadd.f32 0.0, %v187
  %v189 = vpop.f32.mrb[0].mxu0
  %v190 = vpop.f32.mrb[0].mxu0
  %191 = vdwg.mxu0
  %s192 = scalar_lea.vmem %s0, 48
  %v193 = vld [vmem:[%s192] sm:$0xff]
  %v194 = vld [vmem:[%s192 + $0x8] sm:$0xff]
  %v195 = vld [vmem:[%s192 + $0x10] sm:$0xff]
  %v196 = vld [vmem:[%s192 + $0x18] sm:$0x33]
  %v197 = vld [vmem:[%s192 + $0x20] sm:$0x33]
  %v198 = vld [vmem:[%s192 + $0x28] sm:$0x33]
  %v205 = vunpack.c.l.b16 %v193
  %v206 = vunpack.c.h.b16 %v193
  %v207 = vunpack.c.l.b16 %v194
  %v208 = vunpack.c.h.b16 %v194
  %v209 = vunpack.c.l.b16 %v195
  %v210 = vunpack.c.h.b16 %v195
  %v211 = vunpack.c.l.b16 %v196
  %v212 = vunpack.c.h.b16 %v196
  %v213 = vunpack.c.l.b16 %v197
  %v214 = vunpack.c.h.b16 %v197
  %v215 = vunpack.c.l.b16 %v198
  %v216 = vunpack.c.h.b16 %v198
  %v217 = vpack.c.b16 %v211, %v205
  %v218 = vpack.c.b16 %v212, %v206
  %v219 = vpack.c.b16 %v213, %v207
  %v220 = vpack.c.b16 %v214, %v208
  %v221 = vpack.c.b16 %v215, %v209
  %v222 = vpack.c.b16 %v216, %v210
  %v224 = vsel %vm50, %v217, 0
  %v227 = vsel %vm50, %v218, 0
  %v230 = vsel %vm50, %v219, 0
  %v233 = vsel %vm50, %v220, 0
  %v236 = vsel %vm50, %v221, 0
  %v239 = vsel %vm50, %v222, 0
  %241 = vmatprep.subr.bf16.mxu0 %v227
  %242 = vmatpush1.bf16.msra.mxu0 %v224
  %243 = vmatprep.subr.bf16.mxu0 0
  %244 = vmatpush1.bf16.msra.mxu0 0
  %245 = vmatprep.subr.bf16.mxu0 0
  %246 = vmatpush1.bf16.msra.mxu0 0
  %247 = vmatprep.subr.bf16.mxu0 0
  %248 = vmatpush1.bf16.msra.mxu0 0
  %249 = vmatprep.subr.bf16.mxu0 0
  %250 = vmatpush1.bf16.msra.mxu0 0
  %251 = vmatprep.subr.bf16.mxu0 0
  %252 = vmatpush1.bf16.msra.mxu0 0
  %253 = vmatprep.subr.bf16.mxu0 0
  %254 = vmatpush1.bf16.msra.mxu0 0
  %255 = vmatprep.subr.bf16.mxu0 0
  %256 = vmatpush1.bf16.msra.mxu0 0
  %257 = vmatprep.subr.bf16.mxu0 0
  %258 = vmatpush1.bf16.msra.mxu0 0
  %259 = vmatprep.subr.bf16.mxu0 0
  %260 = vmatpush1.bf16.msra.mxu0 0
  %261 = vmatprep.subr.bf16.mxu0 0
  %262 = vmatpush1.bf16.msra.mxu0 0
  %263 = vmatprep.subr.bf16.mxu0 0
  %264 = vmatpush1.bf16.msra.mxu0 0
  %265 = vmatprep.subr.bf16.mxu0 0
  %266 = vmatpush1.bf16.msra.mxu0 0
  %267 = vmatprep.subr.bf16.mxu0 0
  %268 = vmatpush1.bf16.msra.mxu0 0
  %269 = vmatprep.subr.bf16.mxu0 0
  %270 = vmatpush1.bf16.msra.mxu0 0
  %271 = vmatprep.subr.bf16.mxu0 0
  %272 = vmatpush1.bf16.msra.mxu0 0
  %273 = vmatprep.mubr.bf16.mxu0 0
  %274 = vmatmul.mubr.bf16.gmra.mrb[0].mxu0 %v48
  %v275 = vpop.f32.mrb[0].mxu0
  %v276 = vadd.f32 0.0, %v275
  %v277 = vpop.f32.mrb[0].mxu0
  %v278 = vadd.f32 0.0, %v277
  %v279 = vpop.f32.mrb[0].mxu0
  %v280 = vpop.f32.mrb[0].mxu0
  %281 = vdwg.mxu0
  %282 = vmatprep.subr.bf16.mxu0 %v233
  %283 = vmatpush1.bf16.msra.mxu0 %v230
  %284 = vmatprep.subr.bf16.mxu0 0
  %285 = vmatpush1.bf16.msra.mxu0 0
  %286 = vmatprep.subr.bf16.mxu0 0
  %287 = vmatpush1.bf16.msra.mxu0 0
  %288 = vmatprep.subr.bf16.mxu0 0
  %289 = vmatpush1.bf16.msra.mxu0 0
  %290 = vmatprep.subr.bf16.mxu0 0
  %291 = vmatpush1.bf16.msra.mxu0 0
  %292 = vmatprep.subr.bf16.mxu0 0
  %293 = vmatpush1.bf16.msra.mxu0 0
  %294 = vmatprep.subr.bf16.mxu0 0
  %295 = vmatpush1.bf16.msra.mxu0 0
  %296 = vmatprep.subr.bf16.mxu0 0
  %297 = vmatpush1.bf16.msra.mxu0 0
  %298 = vmatprep.subr.bf16.mxu0 0
  %299 = vmatpush1.bf16.msra.mxu0 0
  %300 = vmatprep.subr.bf16.mxu0 0
  %301 = vmatpush1.bf16.msra.mxu0 0
  %302 = vmatprep.subr.bf16.mxu0 0
  %303 = vmatpush1.bf16.msra.mxu0 0
  %304 = vmatprep.subr.bf16.mxu0 0
  %305 = vmatpush1.bf16.msra.mxu0 0
  %306 = vmatprep.subr.bf16.mxu0 0
  %307 = vmatpush1.bf16.msra.mxu0 0
  %308 = vmatprep.subr.bf16.mxu0 0
  %309 = vmatpush1.bf16.msra.mxu0 0
  %310 = vmatprep.subr.bf16.mxu0 0
  %311 = vmatpush1.bf16.msra.mxu0 0
  %312 = vmatprep.subr.bf16.mxu0 0
  %313 = vmatpush1.bf16.msra.mxu0 0
  %314 = vmatprep.mubr.bf16.mxu0 0
  %315 = vmatmul.mubr.bf16.gmra.mrb[0].mxu0 %v48
  %v316 = vpop.f32.mrb[0].mxu0
  %v317 = vadd.f32 0.0, %v316
  %v318 = vpop.f32.mrb[0].mxu0
  %v319 = vadd.f32 0.0, %v318
  %v320 = vpop.f32.mrb[0].mxu0
  %v321 = vpop.f32.mrb[0].mxu0
  %322 = vdwg.mxu0
  %323 = vmatprep.subr.bf16.mxu0 %v239
  %324 = vmatpush1.bf16.msra.mxu0 %v236
  %325 = vmatprep.subr.bf16.mxu0 0
  %326 = vmatpush1.bf16.msra.mxu0 0
  %327 = vmatprep.subr.bf16.mxu0 0
  %328 = vmatpush1.bf16.msra.mxu0 0
  %329 = vmatprep.subr.bf16.mxu0 0
  %330 = vmatpush1.bf16.msra.mxu0 0
  %331 = vmatprep.subr.bf16.mxu0 0
  %332 = vmatpush1.bf16.msra.mxu0 0
  %333 = vmatprep.subr.bf16.mxu0 0
  %334 = vmatpush1.bf16.msra.mxu0 0
  %335 = vmatprep.subr.bf16.mxu0 0
  %336 = vmatpush1.bf16.msra.mxu0 0
  %337 = vmatprep.subr.bf16.mxu0 0
  %338 = vmatpush1.bf16.msra.mxu0 0
  %339 = vmatprep.subr.bf16.mxu0 0
  %340 = vmatpush1.bf16.msra.mxu0 0
  %341 = vmatprep.subr.bf16.mxu0 0
  %342 = vmatpush1.bf16.msra.mxu0 0
  %343 = vmatprep.subr.bf16.mxu0 0
  %344 = vmatpush1.bf16.msra.mxu0 0
  %345 = vmatprep.subr.bf16.mxu0 0
  %346 = vmatpush1.bf16.msra.mxu0 0
  %347 = vmatprep.subr.bf16.mxu0 0
  %348 = vmatpush1.bf16.msra.mxu0 0
  %349 = vmatprep.subr.bf16.mxu0 0
  %350 = vmatpush1.bf16.msra.mxu0 0
  %351 = vmatprep.subr.bf16.mxu0 0
  %352 = vmatpush1.bf16.msra.mxu0 0
  %353 = vmatprep.subr.bf16.mxu0 0
  %354 = vmatpush1.bf16.msra.mxu0 0
  %355 = vmatprep.mubr.bf16.mxu0 0
  %356 = vmatmul.mubr.bf16.gmra.mrb[0].mxu0 %v48
  %v357 = vpop.f32.mrb[0].mxu0
  %v358 = vadd.f32 0.0, %v357
  %v359 = vpop.f32.mrb[0].mxu0
  %v360 = vadd.f32 0.0, %v359
  %v361 = vpop.f32.mrb[0].mxu0
  %v362 = vpop.f32.mrb[0].mxu0
  %363 = vdwg.mxu0
  %v364 = vmax.f32 %v104, %v276
  %v365 = vmax.f32 %v106, %v278
  %v366 = vmax.f32 %v145, %v317
  %v367 = vmax.f32 %v147, %v319
  %v368 = vmax.f32 %v186, %v358
  %v369 = vmax.f32 %v188, %v360
  %s370 = scalar_lea.vmem %s0, 96
  %v371 = vld [vmem:[%s370] sm:$0xff]
  %v372 = vld [vmem:[%s370 + $0x8] sm:$0xff]
  %v373 = vld [vmem:[%s370 + $0x10] sm:$0xff]
  %v374 = vld [vmem:[%s370 + $0x18] sm:$0x33]
  %v375 = vld [vmem:[%s370 + $0x20] sm:$0x33]
  %v376 = vld [vmem:[%s370 + $0x28] sm:$0x33]
  %v383 = vunpack.c.l.b16 %v371
  %v384 = vunpack.c.h.b16 %v371
  %v385 = vunpack.c.l.b16 %v372
  %v386 = vunpack.c.h.b16 %v372
  %v387 = vunpack.c.l.b16 %v373
  %v388 = vunpack.c.h.b16 %v373
  %v389 = vunpack.c.l.b16 %v374
  %v390 = vunpack.c.h.b16 %v374
  %v391 = vunpack.c.l.b16 %v375
  %v392 = vunpack.c.h.b16 %v375
  %v393 = vunpack.c.l.b16 %v376
  %v394 = vunpack.c.h.b16 %v376
  %v395 = vpack.c.b16 %v389, %v383
  %v396 = vpack.c.b16 %v390, %v384
  %v397 = vpack.c.b16 %v391, %v385
  %v398 = vpack.c.b16 %v392, %v386
  %v399 = vpack.c.b16 %v393, %v387
  %v400 = vpack.c.b16 %v394, %v388
  %v402 = vsel %vm50, %v395, 0
  %v405 = vsel %vm50, %v396, 0
  %v408 = vsel %vm50, %v397, 0
  %v411 = vsel %vm50, %v398, 0
  %v414 = vsel %vm50, %v399, 0
  %v417 = vsel %vm50, %v400, 0
  %419 = vmatprep.subr.bf16.mxu0 %v405
  %420 = vmatpush1.bf16.msra.mxu0 %v402
  %421 = vmatprep.subr.bf16.mxu0 0
  %422 = vmatpush1.bf16.msra.mxu0 0
  %423 = vmatprep.subr.bf16.mxu0 0
  %424 = vmatpush1.bf16.msra.mxu0 0
  %425 = vmatprep.subr.bf16.mxu0 0
  %426 = vmatpush1.bf16.msra.mxu0 0
  %427 = vmatprep.subr.bf16.mxu0 0
  %428 = vmatpush1.bf16.msra.mxu0 0
  %429 = vmatprep.subr.bf16.mxu0 0
  %430 = vmatpush1.bf16.msra.mxu0 0
  %431 = vmatprep.subr.bf16.mxu0 0
  %432 = vmatpush1.bf16.msra.mxu0 0
  %433 = vmatprep.subr.bf16.mxu0 0
  %434 = vmatpush1.bf16.msra.mxu0 0
  %435 = vmatprep.subr.bf16.mxu0 0
  %436 = vmatpush1.bf16.msra.mxu0 0
  %437 = vmatprep.subr.bf16.mxu0 0
  %438 = vmatpush1.bf16.msra.mxu0 0
  %439 = vmatprep.subr.bf16.mxu0 0
  %440 = vmatpush1.bf16.msra.mxu0 0
  %441 = vmatprep.subr.bf16.mxu0 0
  %442 = vmatpush1.bf16.msra.mxu0 0
  %443 = vmatprep.subr.bf16.mxu0 0
  %444 = vmatpush1.bf16.msra.mxu0 0
  %445 = vmatprep.subr.bf16.mxu0 0
  %446 = vmatpush1.bf16.msra.mxu0 0
  %447 = vmatprep.subr.bf16.mxu0 0
  %448 = vmatpush1.bf16.msra.mxu0 0
  %449 = vmatprep.subr.bf16.mxu0 0
  %450 = vmatpush1.bf16.msra.mxu0 0
  %451 = vmatprep.mubr.bf16.mxu0 0
  %452 = vmatmul.mubr.bf16.gmra.mrb[0].mxu0 %v48
  %v453 = vpop.f32.mrb[0].mxu0
  %v454 = vadd.f32 0.0, %v453
  %v455 = vpop.f32.mrb[0].mxu0
  %v456 = vadd.f32 0.0, %v455
  %v457 = vpop.f32.mrb[0].mxu0
  %v458 = vpop.f32.mrb[0].mxu0
  %459 = vdwg.mxu0
  %460 = vmatprep.subr.bf16.mxu0 %v411
  %461 = vmatpush1.bf16.msra.mxu0 %v408
  %462 = vmatprep.subr.bf16.mxu0 0
  %463 = vmatpush1.bf16.msra.mxu0 0
  %464 = vmatprep.subr.bf16.mxu0 0
  %465 = vmatpush1.bf16.msra.mxu0 0
  %466 = vmatprep.subr.bf16.mxu0 0
  %467 = vmatpush1.bf16.msra.mxu0 0
  %468 = vmatprep.subr.bf16.mxu0 0
  %469 = vmatpush1.bf16.msra.mxu0 0
  %470 = vmatprep.subr.bf16.mxu0 0
  %471 = vmatpush1.bf16.msra.mxu0 0
  %472 = vmatprep.subr.bf16.mxu0 0
  %473 = vmatpush1.bf16.msra.mxu0 0
  %474 = vmatprep.subr.bf16.mxu0 0
  %475 = vmatpush1.bf16.msra.mxu0 0
  %476 = vmatprep.subr.bf16.mxu0 0
  %477 = vmatpush1.bf16.msra.mxu0 0
  %478 = vmatprep.subr.bf16.mxu0 0
  %479 = vmatpush1.bf16.msra.mxu0 0
  %480 = vmatprep.subr.bf16.mxu0 0
  %481 = vmatpush1.bf16.msra.mxu0 0
  %482 = vmatprep.subr.bf16.mxu0 0
  %483 = vmatpush1.bf16.msra.mxu0 0
  %484 = vmatprep.subr.bf16.mxu0 0
  %485 = vmatpush1.bf16.msra.mxu0 0
  %486 = vmatprep.subr.bf16.mxu0 0
  %487 = vmatpush1.bf16.msra.mxu0 0
  %488 = vmatprep.subr.bf16.mxu0 0
  %489 = vmatpush1.bf16.msra.mxu0 0
  %490 = vmatprep.subr.bf16.mxu0 0
  %491 = vmatpush1.bf16.msra.mxu0 0
  %492 = vmatprep.mubr.bf16.mxu0 0
  %493 = vmatmul.mubr.bf16.gmra.mrb[0].mxu0 %v48
  %v494 = vpop.f32.mrb[0].mxu0
  %v495 = vadd.f32 0.0, %v494
  %v496 = vpop.f32.mrb[0].mxu0
  %v497 = vadd.f32 0.0, %v496
  %v498 = vpop.f32.mrb[0].mxu0
  %v499 = vpop.f32.mrb[0].mxu0
  %500 = vdwg.mxu0
  %501 = vmatprep.subr.bf16.mxu0 %v417
  %502 = vmatpush1.bf16.msra.mxu0 %v414
  %503 = vmatprep.subr.bf16.mxu0 0
  %504 = vmatpush1.bf16.msra.mxu0 0
  %505 = vmatprep.subr.bf16.mxu0 0
  %506 = vmatpush1.bf16.msra.mxu0 0
  %507 = vmatprep.subr.bf16.mxu0 0
  %508 = vmatpush1.bf16.msra.mxu0 0
  %509 = vmatprep.subr.bf16.mxu0 0
  %510 = vmatpush1.bf16.msra.mxu0 0
  %511 = vmatprep.subr.bf16.mxu0 0
  %512 = vmatpush1.bf16.msra.mxu0 0
  %513 = vmatprep.subr.bf16.mxu0 0
  %514 = vmatpush1.bf16.msra.mxu0 0
  %515 = vmatprep.subr.bf16.mxu0 0
  %516 = vmatpush1.bf16.msra.mxu0 0
  %517 = vmatprep.subr.bf16.mxu0 0
  %518 = vmatpush1.bf16.msra.mxu0 0
  %519 = vmatprep.subr.bf16.mxu0 0
  %520 = vmatpush1.bf16.msra.mxu0 0
  %521 = vmatprep.subr.bf16.mxu0 0
  %522 = vmatpush1.bf16.msra.mxu0 0
  %523 = vmatprep.subr.bf16.mxu0 0
  %524 = vmatpush1.bf16.msra.mxu0 0
  %525 = vmatprep.subr.bf16.mxu0 0
  %526 = vmatpush1.bf16.msra.mxu0 0
  %527 = vmatprep.subr.bf16.mxu0 0
  %528 = vmatpush1.bf16.msra.mxu0 0
  %529 = vmatprep.subr.bf16.mxu0 0
  %530 = vmatpush1.bf16.msra.mxu0 0
  %531 = vmatprep.subr.bf16.mxu0 0
  %532 = vmatpush1.bf16.msra.mxu0 0
  %533 = vmatprep.mubr.bf16.mxu0 0
  %534 = vmatmul.mubr.bf16.gmra.mrb[0].mxu0 %v48
  %v535 = vpop.f32.mrb[0].mxu0
  %v536 = vadd.f32 0.0, %v535
  %v537 = vpop.f32.mrb[0].mxu0
  %v538 = vadd.f32 0.0, %v537
  %v539 = vpop.f32.mrb[0].mxu0
  %v540 = vpop.f32.mrb[0].mxu0
  %541 = vdwg.mxu0
  %v542 = vmax.f32 %v364, %v454
  %v543 = vmax.f32 %v365, %v456
  %v544 = vmax.f32 %v366, %v495
  %v545 = vmax.f32 %v367, %v497
  %v546 = vmax.f32 %v368, %v536
  %v547 = vmax.f32 %v369, %v538
  %s548 = scalar_lea.vmem %s0, 144
  %v549 = vld [vmem:[%s548] sm:$0xff]
  %v550 = vld [vmem:[%s548 + $0x8] sm:$0xff]
  %v551 = vld [vmem:[%s548 + $0x10] sm:$0xff]
  %v552 = vld [vmem:[%s548 + $0x18] sm:$0x33]
  %v553 = vld [vmem:[%s548 + $0x20] sm:$0x33]
  %v554 = vld [vmem:[%s548 + $0x28] sm:$0x33]
  %v561 = vunpack.c.l.b16 %v549
  %v562 = vunpack.c.h.b16 %v549
  %v563 = vunpack.c.l.b16 %v550
  %v564 = vunpack.c.h.b16 %v550
  %v565 = vunpack.c.l.b16 %v551
  %v566 = vunpack.c.h.b16 %v551
  %v567 = vunpack.c.l.b16 %v552
  %v568 = vunpack.c.h.b16 %v552
  %v569 = vunpack.c.l.b16 %v553
  %v570 = vunpack.c.h.b16 %v553
  %v571 = vunpack.c.l.b16 %v554
  %v572 = vunpack.c.h.b16 %v554
  %v573 = vpack.c.b16 %v567, %v561
  %v574 = vpack.c.b16 %v568, %v562
  %v575 = vpack.c.b16 %v569, %v563
  %v576 = vpack.c.b16 %v570, %v564
  %v577 = vpack.c.b16 %v571, %v565
  %v578 = vpack.c.b16 %v572, %v566
  %v580 = vsel %vm50, %v573, 0
  %v583 = vsel %vm50, %v574, 0
  %v586 = vsel %vm50, %v575, 0
  %v589 = vsel %vm50, %v576, 0
  %v592 = vsel %vm50, %v577, 0
  %v595 = vsel %vm50, %v578, 0
  %597 = vmatprep.subr.bf16.mxu0 %v583
  %598 = vmatpush1.bf16.msra.mxu0 %v580
  %599 = vmatprep.subr.bf16.mxu0 0
  %600 = vmatpush1.bf16.msra.mxu0 0
  %601 = vmatprep.subr.bf16.mxu0 0
  %602 = vmatpush1.bf16.msra.mxu0 0
  %603 = vmatprep.subr.bf16.mxu0 0
  %604 = vmatpush1.bf16.msra.mxu0 0
  %605 = vmatprep.subr.bf16.mxu0 0
  %606 = vmatpush1.bf16.msra.mxu0 0
  %607 = vmatprep.subr.bf16.mxu0 0
  %608 = vmatpush1.bf16.msra.mxu0 0
  %609 = vmatprep.subr.bf16.mxu0 0
  %610 = vmatpush1.bf16.msra.mxu0 0
  %611 = vmatprep.subr.bf16.mxu0 0
  %612 = vmatpush1.bf16.msra.mxu0 0
  %613 = vmatprep.subr.bf16.mxu0 0
  %614 = vmatpush1.bf16.msra.mxu0 0
  %615 = vmatprep.subr.bf16.mxu0 0
  %616 = vmatpush1.bf16.msra.mxu0 0
  %617 = vmatprep.subr.bf16.mxu0 0
  %618 = vmatpush1.bf16.msra.mxu0 0
  %619 = vmatprep.subr.bf16.mxu0 0
  %620 = vmatpush1.bf16.msra.mxu0 0
  %621 = vmatprep.subr.bf16.mxu0 0
  %622 = vmatpush1.bf16.msra.mxu0 0
  %623 = vmatprep.subr.bf16.mxu0 0
  %624 = vmatpush1.bf16.msra.mxu0 0
  %625 = vmatprep.subr.bf16.mxu0 0
  %626 = vmatpush1.bf16.msra.mxu0 0
  %627 = vmatprep.subr.bf16.mxu0 0
  %628 = vmatpush1.bf16.msra.mxu0 0
  %629 = vmatprep.mubr.bf16.mxu0 0
  %630 = vmatmul.mubr.bf16.gmra.mrb[0].mxu0 %v48
  %v631 = vpop.f32.mrb[0].mxu0
  %v632 = vadd.f32 0.0, %v631
  %v633 = vpop.f32.mrb[0].mxu0
  %v634 = vadd.f32 0.0, %v633
  %v635 = vpop.f32.mrb[0].mxu0
  %v636 = vpop.f32.mrb[0].mxu0
  %637 = vdwg.mxu0
  %638 = vmatprep.subr.bf16.mxu0 %v589
  %639 = vmatpush1.bf16.msra.mxu0 %v586
  %640 = vmatprep.subr.bf16.mxu0 0
  %641 = vmatpush1.bf16.msra.mxu0 0
  %642 = vmatprep.subr.bf16.mxu0 0
  %643 = vmatpush1.bf16.msra.mxu0 0
  %644 = vmatprep.subr.bf16.mxu0 0
  %645 = vmatpush1.bf16.msra.mxu0 0
  %646 = vmatprep.subr.bf16.mxu0 0
  %647 = vmatpush1.bf16.msra.mxu0 0
  %648 = vmatprep.subr.bf16.mxu0 0
  %649 = vmatpush1.bf16.msra.mxu0 0
  %650 = vmatprep.subr.bf16.mxu0 0
  %651 = vmatpush1.bf16.msra.mxu0 0
  %652 = vmatprep.subr.bf16.mxu0 0
  %653 = vmatpush1.bf16.msra.mxu0 0
  %654 = vmatprep.subr.bf16.mxu0 0
  %655 = vmatpush1.bf16.msra.mxu0 0
  %656 = vmatprep.subr.bf16.mxu0 0
  %657 = vmatpush1.bf16.msra.mxu0 0
  %658 = vmatprep.subr.bf16.mxu0 0
  %659 = vmatpush1.bf16.msra.mxu0 0
  %660 = vmatprep.subr.bf16.mxu0 0
  %661 = vmatpush1.bf16.msra.mxu0 0
  %662 = vmatprep.subr.bf16.mxu0 0
  %663 = vmatpush1.bf16.msra.mxu0 0
  %664 = vmatprep.subr.bf16.mxu0 0
  %665 = vmatpush1.bf16.msra.mxu0 0
  %666 = vmatprep.subr.bf16.mxu0 0
  %667 = vmatpush1.bf16.msra.mxu0 0
  %668 = vmatprep.subr.bf16.mxu0 0
  %669 = vmatpush1.bf16.msra.mxu0 0
  %670 = vmatprep.mubr.bf16.mxu0 0
  %671 = vmatmul.mubr.bf16.gmra.mrb[0].mxu0 %v48
  %v672 = vpop.f32.mrb[0].mxu0
  %v673 = vadd.f32 0.0, %v672
  %v674 = vpop.f32.mrb[0].mxu0
  %v675 = vadd.f32 0.0, %v674
  %v676 = vpop.f32.mrb[0].mxu0
  %v677 = vpop.f32.mrb[0].mxu0
  %678 = vdwg.mxu0
  %679 = vmatprep.subr.bf16.mxu0 %v595
  %680 = vmatpush1.bf16.msra.mxu0 %v592
  %681 = vmatprep.subr.bf16.mxu0 0
  %682 = vmatpush1.bf16.msra.mxu0 0
  %683 = vmatprep.subr.bf16.mxu0 0
  %684 = vmatpush1.bf16.msra.mxu0 0
  %685 = vmatprep.subr.bf16.mxu0 0
  %686 = vmatpush1.bf16.msra.mxu0 0
  %687 = vmatprep.subr.bf16.mxu0 0
  %688 = vmatpush1.bf16.msra.mxu0 0
  %689 = vmatprep.subr.bf16.mxu0 0
  %690 = vmatpush1.bf16.msra.mxu0 0
  %691 = vmatprep.subr.bf16.mxu0 0
  %692 = vmatpush1.bf16.msra.mxu0 0
  %693 = vmatprep.subr.bf16.mxu0 0
  %694 = vmatpush1.bf16.msra.mxu0 0
  %695 = vmatprep.subr.bf16.mxu0 0
  %696 = vmatpush1.bf16.msra.mxu0 0
  %697 = vmatprep.subr.bf16.mxu0 0
  %698 = vmatpush1.bf16.msra.mxu0 0
  %699 = vmatprep.subr.bf16.mxu0 0
  %700 = vmatpush1.bf16.msra.mxu0 0
  %701 = vmatprep.subr.bf16.mxu0 0
  %702 = vmatpush1.bf16.msra.mxu0 0
  %703 = vmatprep.subr.bf16.mxu0 0
  %704 = vmatpush1.bf16.msra.mxu0 0
  %705 = vmatprep.subr.bf16.mxu0 0
  %706 = vmatpush1.bf16.msra.mxu0 0
  %707 = vmatprep.subr.bf16.mxu0 0
  %708 = vmatpush1.bf16.msra.mxu0 0
  %709 = vmatprep.subr.bf16.mxu0 0
  %710 = vmatpush1.bf16.msra.mxu0 0
  %711 = vmatprep.mubr.bf16.mxu0 0
  %712 = vmatmul.mubr.bf16.gmra.mrb[0].mxu0 %v48
  %v713 = vpop.f32.mrb[0].mxu0
  %v714 = vadd.f32 0.0, %v713
  %v715 = vpop.f32.mrb[0].mxu0
  %v716 = vadd.f32 0.0, %v715
  %v717 = vpop.f32.mrb[0].mxu0
  %v718 = vpop.f32.mrb[0].mxu0
  %719 = vdwg.mxu0
  %v720 = vmax.f32 %v542, %v632
  %v721 = vmax.f32 %v543, %v634
  %v722 = vmax.f32 %v544, %v673
  %v723 = vmax.f32 %v545, %v675
  %v724 = vmax.f32 %v546, %v714
  %v725 = vmax.f32 %v547, %v716
  %v726 = vld [vmem:[%s2] sm:$0xff]
  %728 = vset.pattern.permute.xlu0 0
  %729 = vperm.xlu0 %728, %v726
  %v730 = vpop.permute.xlu0 %729
  %v732 = vadd.f32 %v720, %v730
  %v733 = vadd.f32 %v721, %v730
  %v734 = vadd.f32 %v722, %v730
  %v735 = vadd.f32 %v723, %v730
  %v736 = vadd.f32 %v724, %v730
  %v737 = vadd.f32 %v725, %v730
  %v738 = vmax.f32 %v732, 0.0
  %v739 = vmax.f32 %v733, 0.0
  %v740 = vmax.f32 %v734, 0.0
  %v741 = vmax.f32 %v735, 0.0
  %v742 = vmax.f32 %v736, 0.0
  %v743 = vmax.f32 %v737, 0.0
  %v744 = vpack.c.bf16 %v738, %v738
  %v745 = vpack.c.bf16 %v739, %v739
  %v746 = vpack.c.bf16 %v740, %v740
  %v747 = vpack.c.bf16 %v741, %v741
  %v748 = vpack.c.bf16 %v742, %v742
  %v749 = vpack.c.bf16 %v743, %v743
  %v756 = vunpack.c.l.b16 %v744
  %v757 = vunpack.c.l.b16 %v745
  %v758 = vunpack.c.l.b16 %v746
  %v759 = vunpack.c.l.b16 %v747
  %v760 = vunpack.c.l.b16 %v748
  %v761 = vunpack.c.l.b16 %v749
  %v762 = vpack.c.b16 %v757, %v756
  %v763 = vpack.c.b16 %v759, %v758
  %v764 = vpack.c.b16 %v761, %v760
  %768 = vst [vmem:[%s3] sm:$0xff] %v762
  %769 = vst [vmem:[%s3 + $0x8] sm:$0xff] %v763
  %vm770 = vcmask 1043456
  %vm771 = vcmask 48132
  %vm772 = vmor %vm771, %vm770
  %773 = vst.msk [vmem:[%s3 + $0x10] sm:$0xff] %vm772, %v764
  // Predicated region
  $region14: #{net_forward.6} parent=0 // pred_check
    _
  $region15: #{net_forward.6} parent=0 // pred_check_branch
    %775 = sbr.rel (0) target = $region17
  $region16: #{net_forward.6} parent=0 // pred_region
    _
  $region17: #{net_forward.6} parent=0 // pred_fallthru
    _
  // Predicated region
  $region18: #{net_forward.6} parent=0 // pred_check
    _
  $region19: #{net_forward.6} parent=0 // pred_check_branch
    %777 = sbr.rel (0) target = $region21
  $region20: #{net_forward.6} parent=0 // pred_region
    _
  $region21: #{net_forward.6} parent=0 // pred_fallthru
    _

// kernel: net_forward.7
$region0: #{net_forward.7}
  #allocation0 [shape = 'u32[]', space=smem, size = 0x4, offset = 0x4, fixed_abs, tag = 'smem constant byte address 0x4 - core index']
  #allocation1 [shape = 'u32[144,128]{1,0:T(1,128)}', space=vmem, size = 0x12000, scoped, tag = 'internal scratch']
  %s0 = inlined_call_operand.vmem [shape: bf16[200,390], index: 0, kind: input, shape index: {}]
  %s1 = inlined_call_operand.vmem [shape: bf16[16,200], index: 1, kind: input, shape index: {}]
  %s2 = inlined_call_operand.vmem [shape: f32[16,1], index: 2, kind: input, shape index: {}]
  %s3 = inlined_call_operand.vmem [shape: bf16[16,390], index: 3, kind: output, shape index: {}]
  %s4 = sld [smem:[#allocation0]]
  $region22: #{net_forward.7} parent=0
    _
  %s6 = ssub.s32 1, %s4
  %s7 = scalar_select 0, %s6, %s4
  // Predicated region
  $region2: #{net_forward.7} parent=0 // pred_check
    _
  $region3: #{net_forward.7} parent=0 // pred_check_branch
    %9 = sbr.rel (0) target = $region5
  $region4: #{net_forward.7} parent=0 // pred_region
    _
  $region5: #{net_forward.7} parent=0 // pred_fallthru
    _
  // Predicated region
  $region6: #{net_forward.7} parent=0 // pred_check
    _
  $region7: #{net_forward.7} parent=0 // pred_check_branch
    %11 = sbr.rel (0) target = $region9
  $region8: #{net_forward.7} parent=0 // pred_region
    _
  $region9: #{net_forward.7} parent=0 // pred_fallthru
    _
  // Predicated region
  $region10: #{net_forward.7} parent=0 // pred_check
    _
  $region11: #{net_forward.7} parent=0 // pred_check_branch
    %13 = sbr.rel (0) target = $region13
  $region12: #{net_forward.7} parent=0 // pred_region
    _
  $region13: #{net_forward.7} parent=0 // pred_fallthru
    _
  %v15 = vld [vmem:[%s1] sm:$0xff]
  %v16 = vld [vmem:[%s1 + $0x8] sm:$0xff]
  %v17 = vld [vmem:[%s0] sm:$0xff]
  %v18 = vld [vmem:[%s0 + $0x8] sm:$0xff]
  %v19 = vld [vmem:[%s0 + $0x10] sm:$0xff]
  %v20 = vld [vmem:[%s0 + $0x18] sm:$0xff]
  %v21 = vld [vmem:[%s0 + $0x20] sm:$0xff]
  %v22 = vld [vmem:[%s0 + $0x28] sm:$0xff]
  %v23 = vld [vmem:[%s0 + $0x30] sm:$0xff]
  %v24 = vld [vmem:[%s0 + $0x38] sm:$0xff]
  %v25 = vld [vmem:[%s0 + $0x40] sm:$0xff]
  %v26 = vld [vmem:[%s0 + $0x48] sm:$0xff]
  %v27 = vld [vmem:[%s0 + $0x50] sm:$0xff]
  %v28 = vld [vmem:[%s0 + $0x58] sm:$0xff]
  %v29 = vld [vmem:[%s0 + $0x60] sm:$0xff]
  %v30 = vld [vmem:[%s0 + $0x68] sm:$0xff]
  %v31 = vld [vmem:[%s0 + $0x70] sm:$0xff]
  %v32 = vld [vmem:[%s0 + $0x78] sm:$0xff]
  %v33 = vld [vmem:[%s0 + $0x80] sm:$0xff]
  %v34 = vld [vmem:[%s0 + $0x88] sm:$0xff]
  %v35 = vld [vmem:[%s0 + $0x90] sm:$0xff]
  %v36 = vld [vmem:[%s0 + $0x98] sm:$0xff]
  %v37 = vld [vmem:[%s0 + $0xa0] sm:$0xff]
  %v38 = vld [vmem:[%s0 + $0xa8] sm:$0xff]
  %v39 = vld [vmem:[%s0 + $0xb0] sm:$0xff]
  %v40 = vld [vmem:[%s0 + $0xb8] sm:$0xff]
  %v41 = vld [vmem:[%s0 + $0xc0] sm:$0xff]
  %v42 = vld [vmem:[%s0 + $0xc8] sm:$0xff]
  %v43 = vld [vmem:[%s0 + $0xd0] sm:$0xff]
  %v44 = vld [vmem:[%s0 + $0xd8] sm:$0xff]
  %v45 = vld [vmem:[%s0 + $0xe0] sm:$0xff]
  %v46 = vld [vmem:[%s0 + $0xe8] sm:$0xff]
  %v47 = vld [vmem:[%s0 + $0xf0] sm:$0xff]
  %v48 = vld [vmem:[%s0 + $0xf8] sm:$0xff]
  %v49 = vld [vmem:[%s0 + $0x100] sm:$0xff]
  %v50 = vld [vmem:[%s0 + $0x108] sm:$0xff]
  %v51 = vld [vmem:[%s0 + $0x110] sm:$0xff]
  %v52 = vld [vmem:[%s0 + $0x118] sm:$0xff]
  %v53 = vld [vmem:[%s0 + $0x120] sm:$0xff]
  %v54 = vld [vmem:[%s0 + $0x128] sm:$0xff]
  %v55 = vld [vmem:[%s0 + $0x130] sm:$0xff]
  %v56 = vld [vmem:[%s0 + $0x138] sm:$0xff]
  %v57 = vld [vmem:[%s0 + $0x140] sm:$0xff]
  %v58 = vld [vmem:[%s0 + $0x148] sm:$0xff]
  %v59 = vld [vmem:[%s0 + $0x150] sm:$0xff]
  %v60 = vld [vmem:[%s0 + $0x158] sm:$0xff]
  %v61 = vld [vmem:[%s0 + $0x160] sm:$0xff]
  %v62 = vld [vmem:[%s0 + $0x168] sm:$0xff]
  %v63 = vld [vmem:[%s0 + $0x170] sm:$0xff]
  %v64 = vld [vmem:[%s0 + $0x178] sm:$0xff]
  %v65 = vld [vmem:[%s0 + $0x180] sm:$0xff]
  %v66 = vld [vmem:[%s0 + $0x188] sm:$0xff]
  %v67 = vld [vmem:[%s2] sm:$0xff]
  %v68 = vld [vmem:[%s2 + $0x8] sm:$0xff]
  %70 = vset.pattern.permute.xlu0 0
  %71 = vperm.xlu0 %70, %v67
  %v72 = vpop.permute.xlu0 %71
  %75 = vset.pattern.permute.xlu0 0
  %76 = vperm.xlu0 %75, %v68
  %v77 = vpop.permute.xlu0 %76
  %v81 = vunpack.c.l.b16 %v15
  %v82 = vunpack.c.h.b16 %v15
  %v83 = vunpack.c.l.b16 %v16
  %v84 = vunpack.c.h.b16 %v16
  %v85 = vpack.c.b16 %v83, %v81
  %v86 = vpack.c.b16 %v84, %v82
  %v138 = vunpack.c.l.b16 %v17
  %v139 = vunpack.c.h.b16 %v17
  %v140 = vunpack.c.l.b16 %v18
  %v141 = vunpack.c.h.b16 %v18
  %v142 = vunpack.c.l.b16 %v19
  %v143 = vunpack.c.h.b16 %v19
  %v144 = vunpack.c.l.b16 %v20
  %v145 = vunpack.c.h.b16 %v20
  %v146 = vunpack.c.l.b16 %v21
  %v147 = vunpack.c.h.b16 %v21
  %v148 = vunpack.c.l.b16 %v22
  %v149 = vunpack.c.h.b16 %v22
  %v150 = vunpack.c.l.b16 %v23
  %v151 = vunpack.c.h.b16 %v23
  %v152 = vunpack.c.l.b16 %v24
  %v153 = vunpack.c.h.b16 %v24
  %v154 = vunpack.c.l.b16 %v25
  %v155 = vunpack.c.h.b16 %v25
  %v156 = vunpack.c.l.b16 %v26
  %v157 = vunpack.c.h.b16 %v26
  %v158 = vunpack.c.l.b16 %v27
  %v159 = vunpack.c.h.b16 %v27
  %v160 = vunpack.c.l.b16 %v28
  %v161 = vunpack.c.h.b16 %v28
  %v162 = vunpack.c.l.b16 %v29
  %v163 = vunpack.c.h.b16 %v29
  %v164 = vunpack.c.l.b16 %v30
  %v165 = vunpack.c.h.b16 %v30
  %v166 = vunpack.c.l.b16 %v31
  %v167 = vunpack.c.h.b16 %v31
  %v168 = vunpack.c.l.b16 %v32
  %v169 = vunpack.c.h.b16 %v32
  %v170 = vunpack.c.l.b16 %v33
  %v171 = vunpack.c.h.b16 %v33
  %v172 = vunpack.c.l.b16 %v34
  %v173 = vunpack.c.h.b16 %v34
  %v174 = vunpack.c.l.b16 %v35
  %v175 = vunpack.c.h.b16 %v35
  %v176 = vunpack.c.l.b16 %v36
  %v177 = vunpack.c.h.b16 %v36
  %v178 = vunpack.c.l.b16 %v37
  %v179 = vunpack.c.h.b16 %v37
  %v180 = vunpack.c.l.b16 %v38
  %v181 = vunpack.c.h.b16 %v38
  %v182 = vunpack.c.l.b16 %v39
  %v183 = vunpack.c.h.b16 %v39
  %v184 = vunpack.c.l.b16 %v40
  %v185 = vunpack.c.h.b16 %v40
  %v186 = vunpack.c.l.b16 %v41
  %v187 = vunpack.c.h.b16 %v41
  %v188 = vunpack.c.l.b16 %v42
  %v189 = vunpack.c.h.b16 %v42
  %v190 = vunpack.c.l.b16 %v43
  %v191 = vunpack.c.h.b16 %v43
  %v192 = vunpack.c.l.b16 %v44
  %v193 = vunpack.c.h.b16 %v44
  %v194 = vunpack.c.l.b16 %v45
  %v195 = vunpack.c.h.b16 %v45
  %v196 = vunpack.c.l.b16 %v46
  %v197 = vunpack.c.h.b16 %v46
  %v198 = vunpack.c.l.b16 %v47
  %v199 = vunpack.c.h.b16 %v47
  %v200 = vunpack.c.l.b16 %v48
  %v201 = vunpack.c.h.b16 %v48
  %v202 = vunpack.c.l.b16 %v49
  %v203 = vunpack.c.h.b16 %v49
  %v204 = vunpack.c.l.b16 %v50
  %v205 = vunpack.c.h.b16 %v50
  %v206 = vunpack.c.l.b16 %v51
  %v207 = vunpack.c.h.b16 %v51
  %v208 = vunpack.c.l.b16 %v52
  %v209 = vunpack.c.h.b16 %v52
  %v210 = vunpack.c.l.b16 %v53
  %v211 = vunpack.c.h.b16 %v53
  %v212 = vunpack.c.l.b16 %v54
  %v213 = vunpack.c.h.b16 %v54
  %v214 = vunpack.c.l.b16 %v55
  %v215 = vunpack.c.h.b16 %v55
  %v216 = vunpack.c.l.b16 %v56
  %v217 = vunpack.c.h.b16 %v56
  %v218 = vunpack.c.l.b16 %v57
  %v219 = vunpack.c.h.b16 %v57
  %v220 = vunpack.c.l.b16 %v58
  %v221 = vunpack.c.h.b16 %v58
  %v222 = vunpack.c.l.b16 %v59
  %v223 = vunpack.c.h.b16 %v59
  %v224 = vunpack.c.l.b16 %v60
  %v225 = vunpack.c.h.b16 %v60
  %v226 = vunpack.c.l.b16 %v61
  %v227 = vunpack.c.h.b16 %v61
  %v228 = vunpack.c.l.b16 %v62
  %v229 = vunpack.c.h.b16 %v62
  %v230 = vunpack.c.l.b16 %v63
  %v231 = vunpack.c.h.b16 %v63
  %v232 = vunpack.c.l.b16 %v64
  %v233 = vunpack.c.h.b16 %v64
  %v234 = vunpack.c.l.b16 %v65
  %v235 = vunpack.c.h.b16 %v65
  %v236 = vunpack.c.l.b16 %v66
  %v237 = vunpack.c.h.b16 %v66
  %v238 = vpack.c.b16 %v142, %v138
  %v239 = vpack.c.b16 %v143, %v139
  %v240 = vpack.c.b16 %v144, %v140
  %v241 = vpack.c.b16 %v145, %v141
  %v242 = vpack.c.b16 %v150, %v146
  %v243 = vpack.c.b16 %v151, %v147
  %v244 = vpack.c.b16 %v152, %v148
  %v245 = vpack.c.b16 %v153, %v149
  %v246 = vpack.c.b16 %v158, %v154
  %v247 = vpack.c.b16 %v159, %v155
  %v248 = vpack.c.b16 %v160, %v156
  %v249 = vpack.c.b16 %v161, %v157
  %v250 = vpack.c.b16 %v166, %v162
  %v251 = vpack.c.b16 %v167, %v163
  %v252 = vpack.c.b16 %v168, %v164
  %v253 = vpack.c.b16 %v169, %v165
  %v254 = vpack.c.b16 %v174, %v170
  %v255 = vpack.c.b16 %v175, %v171
  %v256 = vpack.c.b16 %v176, %v172
  %v257 = vpack.c.b16 %v177, %v173
  %v258 = vpack.c.b16 %v182, %v178
  %v259 = vpack.c.b16 %v183, %v179
  %v260 = vpack.c.b16 %v184, %v180
  %v261 = vpack.c.b16 %v185, %v181
  %v262 = vpack.c.b16 %v190, %v186
  %v263 = vpack.c.b16 %v191, %v187
  %v264 = vpack.c.b16 %v192, %v188
  %v265 = vpack.c.b16 %v193, %v189
  %v266 = vpack.c.b16 %v198, %v194
  %v267 = vpack.c.b16 %v199, %v195
  %v268 = vpack.c.b16 %v200, %v196
  %v269 = vpack.c.b16 %v201, %v197
  %v270 = vpack.c.b16 %v206, %v202
  %v271 = vpack.c.b16 %v207, %v203
  %v272 = vpack.c.b16 %v208, %v204
  %v273 = vpack.c.b16 %v209, %v205
  %v274 = vpack.c.b16 %v214, %v210
  %v275 = vpack.c.b16 %v215, %v211
  %v276 = vpack.c.b16 %v216, %v212
  %v277 = vpack.c.b16 %v217, %v213
  %v278 = vpack.c.b16 %v222, %v218
  %v279 = vpack.c.b16 %v223, %v219
  %v280 = vpack.c.b16 %v224, %v220
  %v281 = vpack.c.b16 %v225, %v221
  %v282 = vpack.c.b16 %v230, %v226
  %v283 = vpack.c.b16 %v231, %v227
  %v284 = vpack.c.b16 %v232, %v228
  %v285 = vpack.c.b16 %v233, %v229
  %v286 = vpack.c.b16 %v234, %v234
  %v287 = vpack.c.b16 %v235, %v235
  %v288 = vpack.c.b16 %v236, %v236
  %v289 = vpack.c.b16 %v237, %v237
  %vm338 = vcmask 588800
  %v340 = vsel %vm338, %v86, 0
  %vm342 = vcmask 1043456
  %v344 = vsel %vm342, %v286, 0
  %v347 = vsel %vm342, %v287, 0
  %v350 = vsel %vm342, %v288, 0
  %v353 = vsel %vm342, %v289, 0
  %355 = vmatprep.subr.bf16.mxu0 %v239
  %356 = vmatpush1.bf16.msra.mxu0 %v238
  %357 = vmatprep.subr.bf16.mxu0 %v243
  %358 = vmatpush1.bf16.msra.mxu0 %v242
  %359 = vmatprep.subr.bf16.mxu0 %v247
  %360 = vmatpush1.bf16.msra.mxu0 %v246
  %361 = vmatprep.subr.bf16.mxu0 %v251
  %362 = vmatpush1.bf16.msra.mxu0 %v250
  %363 = vmatprep.subr.bf16.mxu0 %v255
  %364 = vmatpush1.bf16.msra.mxu0 %v254
  %365 = vmatprep.subr.bf16.mxu0 %v259
  %366 = vmatpush1.bf16.msra.mxu0 %v258
  %367 = vmatprep.subr.bf16.mxu0 %v263
  %368 = vmatpush1.bf16.msra.mxu0 %v262
  %369 = vmatprep.subr.bf16.mxu0 %v267
  %370 = vmatpush1.bf16.msra.mxu0 %v266
  %371 = vmatprep.subr.bf16.mxu0 %v271
  %372 = vmatpush1.bf16.msra.mxu0 %v270
  %373 = vmatprep.subr.bf16.mxu0 %v275
  %374 = vmatpush1.bf16.msra.mxu0 %v274
  %375 = vmatprep.subr.bf16.mxu0 %v279
  %376 = vmatpush1.bf16.msra.mxu0 %v278
  %377 = vmatprep.subr.bf16.mxu0 %v283
  %378 = vmatpush1.bf16.msra.mxu0 %v282
  %379 = vmatprep.subr.bf16.mxu0 %v347
  %380 = vmatpush1.bf16.msra.mxu0 %v344
  %381 = vmatprep.subr.bf16.mxu0 0
  %382 = vmatpush1.bf16.msra.mxu0 0
  %383 = vmatprep.subr.bf16.mxu0 0
  %384 = vmatpush1.bf16.msra.mxu0 0
  %385 = vmatprep.subr.bf16.mxu0 0
  %386 = vmatpush1.bf16.msra.mxu0 0
  %387 = vmatprep.mubr.bf16.mxu0 %v340
  %388 = vmatmul.mubr.bf16.gmra.mrb[0].mxu0 %v85
  %v389 = vpop.f32.mrb[0].mxu0
  %v390 = vadd.f32 %v72, %v389
  %v391 = vpop.f32.mrb[0].mxu0
  %v392 = vadd.f32 %v72, %v391
  %v393 = vpop.f32.mrb[0].mxu0
  %v394 = vadd.f32 %v77, %v393
  %v395 = vpop.f32.mrb[0].mxu0
  %v396 = vadd.f32 %v77, %v395
  %397 = vdwg.mxu0
  %398 = vmatprep.subr.bf16.mxu0 %v241
  %399 = vmatpush1.bf16.msra.mxu0 %v240
  %400 = vmatprep.subr.bf16.mxu0 %v245
  %401 = vmatpush1.bf16.msra.mxu0 %v244
  %402 = vmatprep.subr.bf16.mxu0 %v249
  %403 = vmatpush1.bf16.msra.mxu0 %v248
  %404 = vmatprep.subr.bf16.mxu0 %v253
  %405 = vmatpush1.bf16.msra.mxu0 %v252
  %406 = vmatprep.subr.bf16.mxu0 %v257
  %407 = vmatpush1.bf16.msra.mxu0 %v256
  %408 = vmatprep.subr.bf16.mxu0 %v261
  %409 = vmatpush1.bf16.msra.mxu0 %v260
  %410 = vmatprep.subr.bf16.mxu0 %v265
  %411 = vmatpush1.bf16.msra.mxu0 %v264
  %412 = vmatprep.subr.bf16.mxu0 %v269
  %413 = vmatpush1.bf16.msra.mxu0 %v268
  %414 = vmatprep.subr.bf16.mxu0 %v273
  %415 = vmatpush1.bf16.msra.mxu0 %v272
  %416 = vmatprep.subr.bf16.mxu0 %v277
  %417 = vmatpush1.bf16.msra.mxu0 %v276
  %418 = vmatprep.subr.bf16.mxu0 %v281
  %419 = vmatpush1.bf16.msra.mxu0 %v280
  %420 = vmatprep.subr.bf16.mxu0 %v285
  %421 = vmatpush1.bf16.msra.mxu0 %v284
  %422 = vmatprep.subr.bf16.mxu0 %v353
  %423 = vmatpush1.bf16.msra.mxu0 %v350
  %424 = vmatprep.subr.bf16.mxu0 0
  %425 = vmatpush1.bf16.msra.mxu0 0
  %426 = vmatprep.subr.bf16.mxu0 0
  %427 = vmatpush1.bf16.msra.mxu0 0
  %428 = vmatprep.subr.bf16.mxu0 0
  %429 = vmatpush1.bf16.msra.mxu0 0
  %430 = vmatprep.mubr.bf16.mxu0 %v340
  %431 = vmatmul.mubr.bf16.gmra.mrb[0].mxu0 %v85
  %v432 = vpop.f32.mrb[0].mxu0
  %v433 = vadd.f32 %v72, %v432
  %v434 = vpop.f32.mrb[0].mxu0
  %v435 = vadd.f32 %v72, %v434
  %v436 = vpop.f32.mrb[0].mxu0
  %v437 = vadd.f32 %v77, %v436
  %v438 = vpop.f32.mrb[0].mxu0
  %v439 = vadd.f32 %v77, %v438
  %440 = vdwg.mxu0
  %v441 = vmax.f32 %v390, 0.0
  %v442 = vmax.f32 %v392, 0.0
  %v443 = vmax.f32 %v433, 0.0
  %v444 = vmax.f32 %v435, 0.0
  %v445 = vmax.f32 %v394, 0.0
  %v446 = vmax.f32 %v396, 0.0
  %v447 = vmax.f32 %v437, 0.0
  %v448 = vmax.f32 %v439, 0.0
  %v449 = vpack.c.bf16 %v445, %v441
  %v450 = vpack.c.bf16 %v446, %v442
  %v451 = vpack.c.bf16 %v447, %v443
  %v452 = vpack.c.bf16 %v448, %v444
  %v457 = vunpack.c.l.b16 %v449
  %v458 = vunpack.c.l.b16 %v450
  %v459 = vunpack.c.l.b16 %v451
  %v460 = vunpack.c.l.b16 %v452
  %v461 = vunpack.c.h.b16 %v449
  %v462 = vunpack.c.h.b16 %v450
  %v463 = vunpack.c.h.b16 %v451
  %v464 = vunpack.c.h.b16 %v452
  %v465 = vpack.c.b16 %v458, %v457
  %v466 = vpack.c.b16 %v460, %v459
  %v467 = vpack.c.b16 %v462, %v461
  %v468 = vpack.c.b16 %v464, %v463
  %473 = vst [vmem:[%s3] sm:$0xff] %v465
  %vm474 = vcmask 48132
  %vm475 = vmor %vm474, %vm342
  %476 = vst.msk [vmem:[%s3 + $0x8] sm:$0xff] %vm475, %v466
  %477 = vst [vmem:[%s3 + $0x10] sm:$0xff] %v467
  %478 = vst.msk [vmem:[%s3 + $0x18] sm:$0xff] %vm475, %v468
  // Predicated region
  $region14: #{net_forward.7} parent=0 // pred_check
    _
  $region15: #{net_forward.7} parent=0 // pred_check_branch
    %480 = sbr.rel (0) target = $region17
  $region16: #{net_forward.7} parent=0 // pred_region
    _
  $region17: #{net_forward.7} parent=0 // pred_fallthru
    _
  // Predicated region
  $region18: #{net_forward.7} parent=0 // pred_check
    _
  $region19: #{net_forward.7} parent=0 // pred_check_branch
    %482 = sbr.rel (0) target = $region21
  $region20: #{net_forward.7} parent=0 // pred_region
    _
  $region21: #{net_forward.7} parent=0 // pred_fallthru
    _

// kernel: net_forward.8
$region0: #{net_forward.8}
  #allocation0 [shape = 'u32[]', space=smem, size = 0x4, offset = 0x4, fixed_abs, tag = 'smem constant byte address 0x4 - core index']
  #allocation1 [shape = 'u32[144,128]{1,0:T(1,128)}', space=vmem, size = 0x12000, scoped, tag = 'internal scratch']
  %s0 = inlined_call_operand.vmem [shape: bf16[4,400,40], index: 0, kind: input, shape index: {}]
  %s1 = inlined_call_operand.vmem [shape: bf16[32,400], index: 1, kind: input, shape index: {}]
  %s2 = inlined_call_operand.vmem [shape: f32[32,1], index: 2, kind: input, shape index: {}]
  %s3 = inlined_call_operand.vmem [shape: bf16[32,40], index: 3, kind: output, shape index: {}]
  %s4 = sld [smem:[#allocation0]]
  $region22: #{net_forward.8} parent=0
    _
  %s6 = ssub.s32 1, %s4
  %s7 = scalar_select 0, %s6, %s4
  // Predicated region
  $region2: #{net_forward.8} parent=0 // pred_check
    _
  $region3: #{net_forward.8} parent=0 // pred_check_branch
    %9 = sbr.rel (0) target = $region5
  $region4: #{net_forward.8} parent=0 // pred_region
    _
  $region5: #{net_forward.8} parent=0 // pred_fallthru
    _
  // Predicated region
  $region6: #{net_forward.8} parent=0 // pred_check
    _
  $region7: #{net_forward.8} parent=0 // pred_check_branch
    %11 = sbr.rel (0) target = $region9
  $region8: #{net_forward.8} parent=0 // pred_region
    _
  $region9: #{net_forward.8} parent=0 // pred_fallthru
    _
  // Predicated region
  $region10: #{net_forward.8} parent=0 // pred_check
    _
  $region11: #{net_forward.8} parent=0 // pred_check_branch
    %13 = sbr.rel (0) target = $region13
  $region12: #{net_forward.8} parent=0 // pred_region
    _
  $region13: #{net_forward.8} parent=0 // pred_fallthru
    _
  %v15 = vld [vmem:[%s1] sm:$0xff]
  %v16 = vld [vmem:[%s1 + $0x8] sm:$0xff]
  %v17 = vld [vmem:[%s1 + $0x10] sm:$0xff]
  %v18 = vld [vmem:[%s1 + $0x18] sm:$0xff]
  %v19 = vld [vmem:[%s1 + $0x20] sm:$0xff]
  %v20 = vld [vmem:[%s1 + $0x28] sm:$0xff]
  %v21 = vld [vmem:[%s1 + $0x30] sm:$0xff]
  %v22 = vld [vmem:[%s1 + $0x38] sm:$0xff]
  %v23 = vld [vmem:[%s0] sm:$0xf]
  %v24 = vld [vmem:[%s0 + $0x4] sm:$0xf]
  %v25 = vld [vmem:[%s0 + $0x8] sm:$0xf]
  %v26 = vld [vmem:[%s0 + $0xc] sm:$0xf]
  %v27 = vld [vmem:[%s0 + $0x10] sm:$0xf]
  %v28 = vld [vmem:[%s0 + $0x14] sm:$0xf]
  %v29 = vld [vmem:[%s0 + $0x18] sm:$0xf]
  %v30 = vld [vmem:[%s0 + $0x1c] sm:$0xf]
  %v31 = vld [vmem:[%s0 + $0x20] sm:$0xf]
  %v32 = vld [vmem:[%s0 + $0x24] sm:$0xf]
  %v33 = vld [vmem:[%s0 + $0x28] sm:$0xf]
  %v34 = vld [vmem:[%s0 + $0x2c] sm:$0xf]
  %v35 = vld [vmem:[%s0 + $0x30] sm:$0xf]
  %v36 = vld [vmem:[%s0 + $0x34] sm:$0xf]
  %v37 = vld [vmem:[%s0 + $0x38] sm:$0xf]
  %v38 = vld [vmem:[%s0 + $0x3c] sm:$0xf]
  %v39 = vld [vmem:[%s0 + $0x40] sm:$0xf]
  %v40 = vld [vmem:[%s0 + $0x44] sm:$0xf]
  %v41 = vld [vmem:[%s0 + $0x48] sm:$0xf]
  %v42 = vld [vmem:[%s0 + $0x4c] sm:$0xf]
  %v43 = vld [vmem:[%s0 + $0x50] sm:$0xf]
  %v44 = vld [vmem:[%s0 + $0x54] sm:$0xf]
  %v45 = vld [vmem:[%s0 + $0x58] sm:$0xf]
  %v46 = vld [vmem:[%s0 + $0x5c] sm:$0xf]
  %v47 = vld [vmem:[%s0 + $0x60] sm:$0xf]
  %v48 = vld [vmem:[%s0 + $0x64] sm:$0xf]
  %v49 = vld [vmem:[%s0 + $0x68] sm:$0xf]
  %v50 = vld [vmem:[%s0 + $0x6c] sm:$0xf]
  %v51 = vld [vmem:[%s0 + $0x70] sm:$0xf]
  %v52 = vld [vmem:[%s0 + $0x74] sm:$0xf]
  %v53 = vld [vmem:[%s0 + $0x78] sm:$0xf]
  %v54 = vld [vmem:[%s0 + $0x7c] sm:$0xf]
  %v55 = vld [vmem:[%s0 + $0x80] sm:$0xf]
  %v56 = vld [vmem:[%s0 + $0x84] sm:$0xf]
  %v57 = vld [vmem:[%s0 + $0x88] sm:$0xf]
  %v58 = vld [vmem:[%s0 + $0x8c] sm:$0xf]
  %v59 = vld [vmem:[%s0 + $0x90] sm:$0xf]
  %v60 = vld [vmem:[%s0 + $0x94] sm:$0xf]
  %v61 = vld [vmem:[%s0 + $0x98] sm:$0xf]
  %v62 = vld [vmem:[%s0 + $0x9c] sm:$0xf]
  %v63 = vld [vmem:[%s0 + $0xa0] sm:$0xf]
  %v64 = vld [vmem:[%s0 + $0xa4] sm:$0xf]
  %v65 = vld [vmem:[%s0 + $0xa8] sm:$0xf]
  %v66 = vld [vmem:[%s0 + $0xac] sm:$0xf]
  %v67 = vld [vmem:[%s0 + $0xb0] sm:$0xf]
  %v68 = vld [vmem:[%s0 + $0xb4] sm:$0xf]
  %v69 = vld [vmem:[%s0 + $0xb8] sm:$0xf]
  %v70 = vld [vmem:[%s0 + $0xbc] sm:$0xf]
  %v71 = vld [vmem:[%s0 + $0xc0] sm:$0xf]
  %v72 = vld [vmem:[%s0 + $0xc4] sm:$0xf]
  %v81 = vunpack.c.l.b16 %v15
  %v82 = vunpack.c.h.b16 %v15
  %v83 = vunpack.c.l.b16 %v16
  %v84 = vunpack.c.h.b16 %v16
  %v85 = vunpack.c.l.b16 %v17
  %v86 = vunpack.c.h.b16 %v17
  %v87 = vunpack.c.l.b16 %v18
  %v88 = vunpack.c.h.b16 %v18
  %v89 = vunpack.c.l.b16 %v19
  %v90 = vunpack.c.h.b16 %v19
  %v91 = vunpack.c.l.b16 %v20
  %v92 = vunpack.c.h.b16 %v20
  %v93 = vunpack.c.l.b16 %v21
  %v94 = vunpack.c.h.b16 %v21
  %v95 = vunpack.c.l.b16 %v22
  %v96 = vunpack.c.h.b16 %v22
  %v97 = vpack.c.b16 %v85, %v81
  %v98 = vpack.c.b16 %v86, %v82
  %v99 = vpack.c.b16 %v87, %v83
  %v100 = vpack.c.b16 %v88, %v84
  %v101 = vpack.c.b16 %v93, %v89
  %v102 = vpack.c.b16 %v94, %v90
  %v103 = vpack.c.b16 %v95, %v91
  %v104 = vpack.c.b16 %v96, %v92
  %v161 = vunpack.c.l.b16 %v23
  %v162 = vunpack.c.l.b16 %v24
  %v163 = vunpack.c.l.b16 %v25
  %v164 = vunpack.c.l.b16 %v26
  %v165 = vunpack.c.l.b16 %v27
  %v166 = vunpack.c.l.b16 %v28
  %v167 = vunpack.c.l.b16 %v29
  %v168 = vunpack.c.l.b16 %v30
  %v169 = vunpack.c.l.b16 %v31
  %v170 = vunpack.c.l.b16 %v32
  %v171 = vunpack.c.l.b16 %v33
  %v172 = vunpack.c.l.b16 %v34
  %v173 = vunpack.c.l.b16 %v35
  %v174 = vunpack.c.l.b16 %v36
  %v175 = vunpack.c.l.b16 %v37
  %v176 = vunpack.c.l.b16 %v38
  %v177 = vunpack.c.l.b16 %v39
  %v178 = vunpack.c.l.b16 %v40
  %v179 = vunpack.c.l.b16 %v41
  %v180 = vunpack.c.l.b16 %v42
  %v181 = vunpack.c.l.b16 %v43
  %v182 = vunpack.c.l.b16 %v44
  %v183 = vunpack.c.l.b16 %v45
  %v184 = vunpack.c.l.b16 %v46
  %v185 = vunpack.c.l.b16 %v47
  %v186 = vunpack.c.l.b16 %v48
  %v187 = vunpack.c.l.b16 %v49
  %v188 = vunpack.c.l.b16 %v50
  %v189 = vunpack.c.l.b16 %v51
  %v190 = vunpack.c.l.b16 %v52
  %v191 = vunpack.c.l.b16 %v53
  %v192 = vunpack.c.l.b16 %v54
  %v193 = vunpack.c.l.b16 %v55
  %v194 = vunpack.c.l.b16 %v56
  %v195 = vunpack.c.l.b16 %v57
  %v196 = vunpack.c.l.b16 %v58
  %v197 = vunpack.c.l.b16 %v59
  %v198 = vunpack.c.l.b16 %v60
  %v199 = vunpack.c.l.b16 %v61
  %v200 = vunpack.c.l.b16 %v62
  %v201 = vunpack.c.l.b16 %v63
  %v202 = vunpack.c.l.b16 %v64
  %v203 = vunpack.c.l.b16 %v65
  %v204 = vunpack.c.l.b16 %v66
  %v205 = vunpack.c.l.b16 %v67
  %v206 = vunpack.c.l.b16 %v68
  %v207 = vunpack.c.l.b16 %v69
  %v208 = vunpack.c.l.b16 %v70
  %v209 = vunpack.c.l.b16 %v71
  %v210 = vunpack.c.l.b16 %v72
  %v211 = vpack.c.b16 %v162, %v161
  %v212 = vpack.c.b16 %v164, %v163
  %v213 = vpack.c.b16 %v166, %v165
  %v214 = vpack.c.b16 %v168, %v167
  %v215 = vpack.c.b16 %v170, %v169
  %v216 = vpack.c.b16 %v172, %v171
  %v217 = vpack.c.b16 %v174, %v173
  %v218 = vpack.c.b16 %v176, %v175
  %v219 = vpack.c.b16 %v178, %v177
  %v220 = vpack.c.b16 %v180, %v179
  %v221 = vpack.c.b16 %v182, %v181
  %v222 = vpack.c.b16 %v184, %v183
  %v223 = vpack.c.b16 %v186, %v185
  %v224 = vpack.c.b16 %v188, %v187
  %v225 = vpack.c.b16 %v190, %v189
  %v226 = vpack.c.b16 %v192, %v191
  %v227 = vpack.c.b16 %v194, %v193
  %v228 = vpack.c.b16 %v196, %v195
  %v229 = vpack.c.b16 %v198, %v197
  %v230 = vpack.c.b16 %v200, %v199
  %v231 = vpack.c.b16 %v202, %v201
  %v232 = vpack.c.b16 %v204, %v203
  %v233 = vpack.c.b16 %v206, %v205
  %v234 = vpack.c.b16 %v208, %v207
  %v235 = vpack.c.b16 %v210, %v209
  %vm261 = vcmask 130048
  %v263 = vsel %vm261, %v100, 0
  %v266 = vsel %vm261, %v104, 0
  %268 = vmatprep.subr.bf16.mxu0 0
  %269 = vmatpush1.bf16.msra.mxu0 %v211
  %270 = vmatprep.subr.bf16.mxu0 0
  %271 = vmatpush1.bf16.msra.mxu0 %v212
  %272 = vmatprep.subr.bf16.mxu0 0
  %273 = vmatpush1.bf16.msra.mxu0 %v213
  %274 = vmatprep.subr.bf16.mxu0 0
  %275 = vmatpush1.bf16.msra.mxu0 %v214
  %276 = vmatprep.subr.bf16.mxu0 0
  %277 = vmatpush1.bf16.msra.mxu0 %v215
  %278 = vmatprep.subr.bf16.mxu0 0
  %279 = vmatpush1.bf16.msra.mxu0 %v216
  %280 = vmatprep.subr.bf16.mxu0 0
  %281 = vmatpush1.bf16.msra.mxu0 %v217
  %282 = vmatprep.subr.bf16.mxu0 0
  %283 = vmatpush1.bf16.msra.mxu0 %v218
  %284 = vmatprep.subr.bf16.mxu0 0
  %285 = vmatpush1.bf16.msra.mxu0 %v219
  %286 = vmatprep.subr.bf16.mxu0 0
  %287 = vmatpush1.bf16.msra.mxu0 %v220
  %288 = vmatprep.subr.bf16.mxu0 0
  %289 = vmatpush1.bf16.msra.mxu0 %v221
  %290 = vmatprep.subr.bf16.mxu0 0
  %291 = vmatpush1.bf16.msra.mxu0 %v222
  %292 = vmatprep.subr.bf16.mxu0 0
  %293 = vmatpush1.bf16.msra.mxu0 %v223
  %294 = vmatprep.subr.bf16.mxu0 0
  %295 = vmatpush1.bf16.msra.mxu0 %v224
  %296 = vmatprep.subr.bf16.mxu0 0
  %297 = vmatpush1.bf16.msra.mxu0 %v225
  %298 = vmatprep.subr.bf16.mxu0 0
  %299 = vmatpush1.bf16.msra.mxu0 %v226
  %300 = vmatprep.mubr.bf16.mxu0 %v98
  %301 = vmatmul.mubr.bf16.gmra.mrb[0].mxu0 %v97
  %v302 = vpop.f32.mrb[0].mxu0
  %v303 = vadd.f32 0.0, %v302
  %v304 = vpop.f32.mrb[0].mxu0
  %v305 = vpop.f32.mrb[0].mxu0
  %v306 = vadd.f32 0.0, %v305
  %v307 = vpop.f32.mrb[0].mxu0
  %308 = vmatprep.mubr.bf16.mxu0 %v102
  %309 = vmatmul.mubr.bf16.gmra.mrb[0].mxu0 %v101
  %v310 = vpop.f32.mrb[0].mxu0
  %v311 = vadd.f32 0.0, %v310
  %v312 = vpop.f32.mrb[0].mxu0
  %v313 = vpop.f32.mrb[0].mxu0
  %v314 = vadd.f32 0.0, %v313
  %v315 = vpop.f32.mrb[0].mxu0
  %316 = vdwg.mxu0
  %317 = vmatprep.subr.bf16.mxu0 0
  %318 = vmatpush1.bf16.msra.mxu0 %v227
  %319 = vmatprep.subr.bf16.mxu0 0
  %320 = vmatpush1.bf16.msra.mxu0 %v228
  %321 = vmatprep.subr.bf16.mxu0 0
  %322 = vmatpush1.bf16.msra.mxu0 %v229
  %323 = vmatprep.subr.bf16.mxu0 0
  %324 = vmatpush1.bf16.msra.mxu0 %v230
  %325 = vmatprep.subr.bf16.mxu0 0
  %326 = vmatpush1.bf16.msra.mxu0 %v231
  %327 = vmatprep.subr.bf16.mxu0 0
  %328 = vmatpush1.bf16.msra.mxu0 %v232
  %329 = vmatprep.subr.bf16.mxu0 0
  %330 = vmatpush1.bf16.msra.mxu0 %v233
  %331 = vmatprep.subr.bf16.mxu0 0
  %332 = vmatpush1.bf16.msra.mxu0 %v234
  %333 = vmatprep.subr.bf16.mxu0 0
  %334 = vmatpush1.bf16.msra.mxu0 %v235
  %335 = vmatprep.subr.bf16.mxu0 0
  %336 = vmatpush1.bf16.msra.mxu0 0
  %337 = vmatprep.subr.bf16.mxu0 0
  %338 = vmatpush1.bf16.msra.mxu0 0
  %339 = vmatprep.subr.bf16.mxu0 0
  %340 = vmatpush1.bf16.msra.mxu0 0
  %341 = vmatprep.subr.bf16.mxu0 0
  %342 = vmatpush1.bf16.msra.mxu0 0
  %343 = vmatprep.subr.bf16.mxu0 0
  %344 = vmatpush1.bf16.msra.mxu0 0
  %345 = vmatprep.subr.bf16.mxu0 0
  %346 = vmatpush1.bf16.msra.mxu0 0
  %347 = vmatprep.subr.bf16.mxu0 0
  %348 = vmatpush1.bf16.msra.mxu0 0
  %349 = vmatprep.mubr.bf16.mxu0 %v263
  %350 = vmatmul.mubr.bf16.gmra.mrb[0].mxu0 %v99
  %v351 = vpop.f32.mrb[0].mxu0
  %v352 = vadd.f32 %v303, %v351
  %v353 = vpop.f32.mrb[0].mxu0
  %v354 = vpop.f32.mrb[0].mxu0
  %v355 = vadd.f32 %v306, %v354
  %v356 = vpop.f32.mrb[0].mxu0
  %357 = vmatprep.mubr.bf16.mxu0 %v266
  %358 = vmatmul.mubr.bf16.gmra.mrb[0].mxu0 %v103
  %v359 = vpop.f32.mrb[0].mxu0
  %v360 = vadd.f32 %v311, %v359
  %v361 = vpop.f32.mrb[0].mxu0
  %v362 = vpop.f32.mrb[0].mxu0
  %v363 = vadd.f32 %v314, %v362
  %v364 = vpop.f32.mrb[0].mxu0
  %365 = vdwg.mxu0
  %s366 = scalar_lea.vmem %s0, 200
  %v367 = vld [vmem:[%s366] sm:$0xf]
  %v368 = vld [vmem:[%s366 + $0x4] sm:$0xf]
  %v369 = vld [vmem:[%s366 + $0x8] sm:$0xf]
  %v370 = vld [vmem:[%s366 + $0xc] sm:$0xf]
  %v371 = vld [vmem:[%s366 + $0x10] sm:$0xf]
  %v372 = vld [vmem:[%s366 + $0x14] sm:$0xf]
  %v373 = vld [vmem:[%s366 + $0x18] sm:$0xf]
  %v374 = vld [vmem:[%s366 + $0x1c] sm:$0xf]
  %v375 = vld [vmem:[%s366 + $0x20] sm:$0xf]
  %v376 = vld [vmem:[%s366 + $0x24] sm:$0xf]
  %v377 = vld [vmem:[%s366 + $0x28] sm:$0xf]
  %v378 = vld [vmem:[%s366 + $0x2c] sm:$0xf]
  %v379 = vld [vmem:[%s366 + $0x30] sm:$0xf]
  %v380 = vld [vmem:[%s366 + $0x34] sm:$0xf]
  %v381 = vld [vmem:[%s366 + $0x38] sm:$0xf]
  %v382 = vld [vmem:[%s366 + $0x3c] sm:$0xf]
  %v383 = vld [vmem:[%s366 + $0x40] sm:$0xf]
  %v384 = vld [vmem:[%s366 + $0x44] sm:$0xf]
  %v385 = vld [vmem:[%s366 + $0x48] sm:$0xf]
  %v386 = vld [vmem:[%s366 + $0x4c] sm:$0xf]
  %v387 = vld [vmem:[%s366 + $0x50] sm:$0xf]
  %v388 = vld [vmem:[%s366 + $0x54] sm:$0xf]
  %v389 = vld [vmem:[%s366 + $0x58] sm:$0xf]
  %v390 = vld [vmem:[%s366 + $0x5c] sm:$0xf]
  %v391 = vld [vmem:[%s366 + $0x60] sm:$0xf]
  %v392 = vld [vmem:[%s366 + $0x64] sm:$0xf]
  %v393 = vld [vmem:[%s366 + $0x68] sm:$0xf]
  %v394 = vld [vmem:[%s366 + $0x6c] sm:$0xf]
  %v395 = vld [vmem:[%s366 + $0x70] sm:$0xf]
  %v396 = vld [vmem:[%s366 + $0x74] sm:$0xf]
  %v397 = vld [vmem:[%s366 + $0x78] sm:$0xf]
  %v398 = vld [vmem:[%s366 + $0x7c] sm:$0xf]
  %v399 = vld [vmem:[%s366 + $0x80] sm:$0xf]
  %v400 = vld [vmem:[%s366 + $0x84] sm:$0xf]
  %v401 = vld [vmem:[%s366 + $0x88] sm:$0xf]
  %v402 = vld [vmem:[%s366 + $0x8c] sm:$0xf]
  %v403 = vld [vmem:[%s366 + $0x90] sm:$0xf]
  %v404 = vld [vmem:[%s366 + $0x94] sm:$0xf]
  %v405 = vld [vmem:[%s366 + $0x98] sm:$0xf]
  %v406 = vld [vmem:[%s366 + $0x9c] sm:$0xf]
  %v407 = vld [vmem:[%s366 + $0xa0] sm:$0xf]
  %v408 = vld [vmem:[%s366 + $0xa4] sm:$0xf]
  %v409 = vld [vmem:[%s366 + $0xa8] sm:$0xf]
  %v410 = vld [vmem:[%s366 + $0xac] sm:$0xf]
  %v411 = vld [vmem:[%s366 + $0xb0] sm:$0xf]
  %v412 = vld [vmem:[%s366 + $0xb4] sm:$0xf]
  %v413 = vld [vmem:[%s366 + $0xb8] sm:$0xf]
  %v414 = vld [vmem:[%s366 + $0xbc] sm:$0xf]
  %v415 = vld [vmem:[%s366 + $0xc0] sm:$0xf]
  %v416 = vld [vmem:[%s366 + $0xc4] sm:$0xf]
  %v467 = vunpack.c.l.b16 %v367
  %v468 = vunpack.c.l.b16 %v368
  %v469 = vunpack.c.l.b16 %v369
  %v470 = vunpack.c.l.b16 %v370
  %v471 = vunpack.c.l.b16 %v371
  %v472 = vunpack.c.l.b16 %v372
  %v473 = vunpack.c.l.b16 %v373
  %v474 = vunpack.c.l.b16 %v374
  %v475 = vunpack.c.l.b16 %v375
  %v476 = vunpack.c.l.b16 %v376
  %v477 = vunpack.c.l.b16 %v377
  %v478 = vunpack.c.l.b16 %v378
  %v479 = vunpack.c.l.b16 %v379
  %v480 = vunpack.c.l.b16 %v380
  %v481 = vunpack.c.l.b16 %v381
  %v482 = vunpack.c.l.b16 %v382
  %v483 = vunpack.c.l.b16 %v383
  %v484 = vunpack.c.l.b16 %v384
  %v485 = vunpack.c.l.b16 %v385
  %v486 = vunpack.c.l.b16 %v386
  %v487 = vunpack.c.l.b16 %v387
  %v488 = vunpack.c.l.b16 %v388
  %v489 = vunpack.c.l.b16 %v389
  %v490 = vunpack.c.l.b16 %v390
  %v491 = vunpack.c.l.b16 %v391
  %v492 = vunpack.c.l.b16 %v392
  %v493 = vunpack.c.l.b16 %v393
  %v494 = vunpack.c.l.b16 %v394
  %v495 = vunpack.c.l.b16 %v395
  %v496 = vunpack.c.l.b16 %v396
  %v497 = vunpack.c.l.b16 %v397
  %v498 = vunpack.c.l.b16 %v398
  %v499 = vunpack.c.l.b16 %v399
  %v500 = vunpack.c.l.b16 %v400
  %v501 = vunpack.c.l.b16 %v401
  %v502 = vunpack.c.l.b16 %v402
  %v503 = vunpack.c.l.b16 %v403
  %v504 = vunpack.c.l.b16 %v404
  %v505 = vunpack.c.l.b16 %v405
  %v506 = vunpack.c.l.b16 %v406
  %v507 = vunpack.c.l.b16 %v407
  %v508 = vunpack.c.l.b16 %v408
  %v509 = vunpack.c.l.b16 %v409
  %v510 = vunpack.c.l.b16 %v410
  %v511 = vunpack.c.l.b16 %v411
  %v512 = vunpack.c.l.b16 %v412
  %v513 = vunpack.c.l.b16 %v413
  %v514 = vunpack.c.l.b16 %v414
  %v515 = vunpack.c.l.b16 %v415
  %v516 = vunpack.c.l.b16 %v416
  %v517 = vpack.c.b16 %v468, %v467
  %v518 = vpack.c.b16 %v470, %v469
  %v519 = vpack.c.b16 %v472, %v471
  %v520 = vpack.c.b16 %v474, %v473
  %v521 = vpack.c.b16 %v476, %v475
  %v522 = vpack.c.b16 %v478, %v477
  %v523 = vpack.c.b16 %v480, %v479
  %v524 = vpack.c.b16 %v482, %v481
  %v525 = vpack.c.b16 %v484, %v483
  %v526 = vpack.c.b16 %v486, %v485
  %v527 = vpack.c.b16 %v488, %v487
  %v528 = vpack.c.b16 %v490, %v489
  %v529 = vpack.c.b16 %v492, %v491
  %v530 = vpack.c.b16 %v494, %v493
  %v531 = vpack.c.b16 %v496, %v495
  %v532 = vpack.c.b16 %v498, %v497
  %v533 = vpack.c.b16 %v500, %v499
  %v534 = vpack.c.b16 %v502, %v501
  %v535 = vpack.c.b16 %v504, %v503
  %v536 = vpack.c.b16 %v506, %v505
  %v537 = vpack.c.b16 %v508, %v507
  %v538 = vpack.c.b16 %v510, %v509
  %v539 = vpack.c.b16 %v512, %v511
  %v540 = vpack.c.b16 %v514, %v513
  %v541 = vpack.c.b16 %v516, %v515
  %567 = vmatprep.subr.bf16.mxu0 0
  %568 = vmatpush1.bf16.msra.mxu0 %v517
  %569 = vmatprep.subr.bf16.mxu0 0
  %570 = vmatpush1.bf16.msra.mxu0 %v518
  %571 = vmatprep.subr.bf16.mxu0 0
  %572 = vmatpush1.bf16.msra.mxu0 %v519
  %573 = vmatprep.subr.bf16.mxu0 0
  %574 = vmatpush1.bf16.msra.mxu0 %v520
  %575 = vmatprep.subr.bf16.mxu0 0
  %576 = vmatpush1.bf16.msra.mxu0 %v521
  %577 = vmatprep.subr.bf16.mxu0 0
  %578 = vmatpush1.bf16.msra.mxu0 %v522
  %579 = vmatprep.subr.bf16.mxu0 0
  %580 = vmatpush1.bf16.msra.mxu0 %v523
  %581 = vmatprep.subr.bf16.mxu0 0
  %582 = vmatpush1.bf16.msra.mxu0 %v524
  %583 = vmatprep.subr.bf16.mxu0 0
  %584 = vmatpush1.bf16.msra.mxu0 %v525
  %585 = vmatprep.subr.bf16.mxu0 0
  %586 = vmatpush1.bf16.msra.mxu0 %v526
  %587 = vmatprep.subr.bf16.mxu0 0
  %588 = vmatpush1.bf16.msra.mxu0 %v527
  %589 = vmatprep.subr.bf16.mxu0 0
  %590 = vmatpush1.bf16.msra.mxu0 %v528
  %591 = vmatprep.subr.bf16.mxu0 0
  %592 = vmatpush1.bf16.msra.mxu0 %v529
  %593 = vmatprep.subr.bf16.mxu0 0
  %594 = vmatpush1.bf16.msra.mxu0 %v530
  %595 = vmatprep.subr.bf16.mxu0 0
  %596 = vmatpush1.bf16.msra.mxu0 %v531
  %597 = vmatprep.subr.bf16.mxu0 0
  %598 = vmatpush1.bf16.msra.mxu0 %v532
  %599 = vmatprep.mubr.bf16.mxu0 %v98
  %600 = vmatmul.mubr.bf16.gmra.mrb[0].mxu0 %v97
  %v601 = vpop.f32.mrb[0].mxu0
  %v602 = vadd.f32 0.0, %v601
  %v603 = vpop.f32.mrb[0].mxu0
  %v604 = vpop.f32.mrb[0].mxu0
  %v605 = vadd.f32 0.0, %v604
  %v606 = vpop.f32.mrb[0].mxu0
  %607 = vmatprep.mubr.bf16.mxu0 %v102
  %608 = vmatmul.mubr.bf16.gmra.mrb[0].mxu0 %v101
  %v609 = vpop.f32.mrb[0].mxu0
  %v610 = vadd.f32 0.0, %v609
  %v611 = vpop.f32.mrb[0].mxu0
  %v612 = vpop.f32.mrb[0].mxu0
  %v613 = vadd.f32 0.0, %v612
  %v614 = vpop.f32.mrb[0].mxu0
  %615 = vdwg.mxu0
  %616 = vmatprep.subr.bf16.mxu0 0
  %617 = vmatpush1.bf16.msra.mxu0 %v533
  %618 = vmatprep.subr.bf16.mxu0 0
  %619 = vmatpush1.bf16.msra.mxu0 %v534
  %620 = vmatprep.subr.bf16.mxu0 0
  %621 = vmatpush1.bf16.msra.mxu0 %v535
  %622 = vmatprep.subr.bf16.mxu0 0
  %623 = vmatpush1.bf16.msra.mxu0 %v536
  %624 = vmatprep.subr.bf16.mxu0 0
  %625 = vmatpush1.bf16.msra.mxu0 %v537
  %626 = vmatprep.subr.bf16.mxu0 0
  %627 = vmatpush1.bf16.msra.mxu0 %v538
  %628 = vmatprep.subr.bf16.mxu0 0
  %629 = vmatpush1.bf16.msra.mxu0 %v539
  %630 = vmatprep.subr.bf16.mxu0 0
  %631 = vmatpush1.bf16.msra.mxu0 %v540
  %632 = vmatprep.subr.bf16.mxu0 0
  %633 = vmatpush1.bf16.msra.mxu0 %v541
  %634 = vmatprep.subr.bf16.mxu0 0
  %635 = vmatpush1.bf16.msra.mxu0 0
  %636 = vmatprep.subr.bf16.mxu0 0
  %637 = vmatpush1.bf16.msra.mxu0 0
  %638 = vmatprep.subr.bf16.mxu0 0
  %639 = vmatpush1.bf16.msra.mxu0 0
  %640 = vmatprep.subr.bf16.mxu0 0
  %641 = vmatpush1.bf16.msra.mxu0 0
  %642 = vmatprep.subr.bf16.mxu0 0
  %643 = vmatpush1.bf16.msra.mxu0 0
  %644 = vmatprep.subr.bf16.mxu0 0
  %645 = vmatpush1.bf16.msra.mxu0 0
  %646 = vmatprep.subr.bf16.mxu0 0
  %647 = vmatpush1.bf16.msra.mxu0 0
  %648 = vmatprep.mubr.bf16.mxu0 %v263
  %649 = vmatmul.mubr.bf16.gmra.mrb[0].mxu0 %v99
  %v650 = vpop.f32.mrb[0].mxu0
  %v651 = vadd.f32 %v602, %v650
  %v652 = vpop.f32.mrb[0].mxu0
  %v653 = vpop.f32.mrb[0].mxu0
  %v654 = vadd.f32 %v605, %v653
  %v655 = vpop.f32.mrb[0].mxu0
  %656 = vmatprep.mubr.bf16.mxu0 %v266
  %657 = vmatmul.mubr.bf16.gmra.mrb[0].mxu0 %v103
  %v658 = vpop.f32.mrb[0].mxu0
  %v659 = vadd.f32 %v610, %v658
  %v660 = vpop.f32.mrb[0].mxu0
  %v661 = vpop.f32.mrb[0].mxu0
  %v662 = vadd.f32 %v613, %v661
  %v663 = vpop.f32.mrb[0].mxu0
  %664 = vdwg.mxu0
  %v665 = vmax.f32 %v352, %v651
  %v666 = vmax.f32 %v355, %v654
  %v667 = vmax.f32 %v360, %v659
  %v668 = vmax.f32 %v363, %v662
  %s669 = scalar_lea.vmem %s0, 400
  %v670 = vld [vmem:[%s669] sm:$0xf]
  %v671 = vld [vmem:[%s669 + $0x4] sm:$0xf]
  %v672 = vld [vmem:[%s669 + $0x8] sm:$0xf]
  %v673 = vld [vmem:[%s669 + $0xc] sm:$0xf]
  %v674 = vld [vmem:[%s669 + $0x10] sm:$0xf]
  %v675 = vld [vmem:[%s669 + $0x14] sm:$0xf]
  %v676 = vld [vmem:[%s669 + $0x18] sm:$0xf]
  %v677 = vld [vmem:[%s669 + $0x1c] sm:$0xf]
  %v678 = vld [vmem:[%s669 + $0x20] sm:$0xf]
  %v679 = vld [vmem:[%s669 + $0x24] sm:$0xf]
  %v680 = vld [vmem:[%s669 + $0x28] sm:$0xf]
  %v681 = vld [vmem:[%s669 + $0x2c] sm:$0xf]
  %v682 = vld [vmem:[%s669 + $0x30] sm:$0xf]
  %v683 = vld [vmem:[%s669 + $0x34] sm:$0xf]
  %v684 = vld [vmem:[%s669 + $0x38] sm:$0xf]
  %v685 = vld [vmem:[%s669 + $0x3c] sm:$0xf]
  %v686 = vld [vmem:[%s669 + $0x40] sm:$0xf]
  %v687 = vld [vmem:[%s669 + $0x44] sm:$0xf]
  %v688 = vld [vmem:[%s669 + $0x48] sm:$0xf]
  %v689 = vld [vmem:[%s669 + $0x4c] sm:$0xf]
  %v690 = vld [vmem:[%s669 + $0x50] sm:$0xf]
  %v691 = vld [vmem:[%s669 + $0x54] sm:$0xf]
  %v692 = vld [vmem:[%s669 + $0x58] sm:$0xf]
  %v693 = vld [vmem:[%s669 + $0x5c] sm:$0xf]
  %v694 = vld [vmem:[%s669 + $0x60] sm:$0xf]
  %v695 = vld [vmem:[%s669 + $0x64] sm:$0xf]
  %v696 = vld [vmem:[%s669 + $0x68] sm:$0xf]
  %v697 = vld [vmem:[%s669 + $0x6c] sm:$0xf]
  %v698 = vld [vmem:[%s669 + $0x70] sm:$0xf]
  %v699 = vld [vmem:[%s669 + $0x74] sm:$0xf]
  %v700 = vld [vmem:[%s669 + $0x78] sm:$0xf]
  %v701 = vld [vmem:[%s669 + $0x7c] sm:$0xf]
  %v702 = vld [vmem:[%s669 + $0x80] sm:$0xf]
  %v703 = vld [vmem:[%s669 + $0x84] sm:$0xf]
  %v704 = vld [vmem:[%s669 + $0x88] sm:$0xf]
  %v705 = vld [vmem:[%s669 + $0x8c] sm:$0xf]
  %v706 = vld [vmem:[%s669 + $0x90] sm:$0xf]
  %v707 = vld [vmem:[%s669 + $0x94] sm:$0xf]
  %v708 = vld [vmem:[%s669 + $0x98] sm:$0xf]
  %v709 = vld [vmem:[%s669 + $0x9c] sm:$0xf]
  %v710 = vld [vmem:[%s669 + $0xa0] sm:$0xf]
  %v711 = vld [vmem:[%s669 + $0xa4] sm:$0xf]
  %v712 = vld [vmem:[%s669 + $0xa8] sm:$0xf]
  %v713 = vld [vmem:[%s669 + $0xac] sm:$0xf]
  %v714 = vld [vmem:[%s669 + $0xb0] sm:$0xf]
  %v715 = vld [vmem:[%s669 + $0xb4] sm:$0xf]
  %v716 = vld [vmem:[%s669 + $0xb8] sm:$0xf]
  %v717 = vld [vmem:[%s669 + $0xbc] sm:$0xf]
  %v718 = vld [vmem:[%s669 + $0xc0] sm:$0xf]
  %v719 = vld [vmem:[%s669 + $0xc4] sm:$0xf]
  %v770 = vunpack.c.l.b16 %v670
  %v771 = vunpack.c.l.b16 %v671
  %v772 = vunpack.c.l.b16 %v672
  %v773 = vunpack.c.l.b16 %v673
  %v774 = vunpack.c.l.b16 %v674
  %v775 = vunpack.c.l.b16 %v675
  %v776 = vunpack.c.l.b16 %v676
  %v777 = vunpack.c.l.b16 %v677
  %v778 = vunpack.c.l.b16 %v678
  %v779 = vunpack.c.l.b16 %v679
  %v780 = vunpack.c.l.b16 %v680
  %v781 = vunpack.c.l.b16 %v681
  %v782 = vunpack.c.l.b16 %v682
  %v783 = vunpack.c.l.b16 %v683
  %v784 = vunpack.c.l.b16 %v684
  %v785 = vunpack.c.l.b16 %v685
  %v786 = vunpack.c.l.b16 %v686
  %v787 = vunpack.c.l.b16 %v687
  %v788 = vunpack.c.l.b16 %v688
  %v789 = vunpack.c.l.b16 %v689
  %v790 = vunpack.c.l.b16 %v690
  %v791 = vunpack.c.l.b16 %v691
  %v792 = vunpack.c.l.b16 %v692
  %v793 = vunpack.c.l.b16 %v693
  %v794 = vunpack.c.l.b16 %v694
  %v795 = vunpack.c.l.b16 %v695
  %v796 = vunpack.c.l.b16 %v696
  %v797 = vunpack.c.l.b16 %v697
  %v798 = vunpack.c.l.b16 %v698
  %v799 = vunpack.c.l.b16 %v699
  %v800 = vunpack.c.l.b16 %v700
  %v801 = vunpack.c.l.b16 %v701
  %v802 = vunpack.c.l.b16 %v702
  %v803 = vunpack.c.l.b16 %v703
  %v804 = vunpack.c.l.b16 %v704
  %v805 = vunpack.c.l.b16 %v705
  %v806 = vunpack.c.l.b16 %v706
  %v807 = vunpack.c.l.b16 %v707
  %v808 = vunpack.c.l.b16 %v708
  %v809 = vunpack.c.l.b16 %v709
  %v810 = vunpack.c.l.b16 %v710
  %v811 = vunpack.c.l.b16 %v711
  %v812 = vunpack.c.l.b16 %v712
  %v813 = vunpack.c.l.b16 %v713
  %v814 = vunpack.c.l.b16 %v714
  %v815 = vunpack.c.l.b16 %v715
  %v816 = vunpack.c.l.b16 %v716
  %v817 = vunpack.c.l.b16 %v717
  %v818 = vunpack.c.l.b16 %v718
  %v819 = vunpack.c.l.b16 %v719
  %v820 = vpack.c.b16 %v771, %v770
  %v821 = vpack.c.b16 %v773, %v772
  %v822 = vpack.c.b16 %v775, %v774
  %v823 = vpack.c.b16 %v777, %v776
  %v824 = vpack.c.b16 %v779, %v778
  %v825 = vpack.c.b16 %v781, %v780
  %v826 = vpack.c.b16 %v783, %v782
  %v827 = vpack.c.b16 %v785, %v784
  %v828 = vpack.c.b16 %v787, %v786
  %v829 = vpack.c.b16 %v789, %v788
  %v830 = vpack.c.b16 %v791, %v790
  %v831 = vpack.c.b16 %v793, %v792
  %v832 = vpack.c.b16 %v795, %v794
  %v833 = vpack.c.b16 %v797, %v796
  %v834 = vpack.c.b16 %v799, %v798
  %v835 = vpack.c.b16 %v801, %v800
  %v836 = vpack.c.b16 %v803, %v802
  %v837 = vpack.c.b16 %v805, %v804
  %v838 = vpack.c.b16 %v807, %v806
  %v839 = vpack.c.b16 %v809, %v808
  %v840 = vpack.c.b16 %v811, %v810
  %v841 = vpack.c.b16 %v813, %v812
  %v842 = vpack.c.b16 %v815, %v814
  %v843 = vpack.c.b16 %v817, %v816
  %v844 = vpack.c.b16 %v819, %v818
  %870 = vmatprep.subr.bf16.mxu0 0
  %871 = vmatpush1.bf16.msra.mxu0 %v820
  %872 = vmatprep.subr.bf16.mxu0 0
  %873 = vmatpush1.bf16.msra.mxu0 %v821
  %874 = vmatprep.subr.bf16.mxu0 0
  %875 = vmatpush1.bf16.msra.mxu0 %v822
  %876 = vmatprep.subr.bf16.mxu0 0
  %877 = vmatpush1.bf16.msra.mxu0 %v823
  %878 = vmatprep.subr.bf16.mxu0 0
  %879 = vmatpush1.bf16.msra.mxu0 %v824
  %880 = vmatprep.subr.bf16.mxu0 0
  %881 = vmatpush1.bf16.msra.mxu0 %v825
  %882 = vmatprep.subr.bf16.mxu0 0
  %883 = vmatpush1.bf16.msra.mxu0 %v826
  %884 = vmatprep.subr.bf16.mxu0 0
  %885 = vmatpush1.bf16.msra.mxu0 %v827
  %886 = vmatprep.subr.bf16.mxu0 0
  %887 = vmatpush1.bf16.msra.mxu0 %v828
  %888 = vmatprep.subr.bf16.mxu0 0
  %889 = vmatpush1.bf16.msra.mxu0 %v829
  %890 = vmatprep.subr.bf16.mxu0 0
  %891 = vmatpush1.bf16.msra.mxu0 %v830
  %892 = vmatprep.subr.bf16.mxu0 0
  %893 = vmatpush1.bf16.msra.mxu0 %v831
  %894 = vmatprep.subr.bf16.mxu0 0
  %895 = vmatpush1.bf16.msra.mxu0 %v832
  %896 = vmatprep.subr.bf16.mxu0 0
  %897 = vmatpush1.bf16.msra.mxu0 %v833
  %898 = vmatprep.subr.bf16.mxu0 0
  %899 = vmatpush1.bf16.msra.mxu0 %v834
  %900 = vmatprep.subr.bf16.mxu0 0
  %901 = vmatpush1.bf16.msra.mxu0 %v835
  %902 = vmatprep.mubr.bf16.mxu0 %v98
  %903 = vmatmul.mubr.bf16.gmra.mrb[0].mxu0 %v97
  %v904 = vpop.f32.mrb[0].mxu0
  %v905 = vadd.f32 0.0, %v904
  %v906 = vpop.f32.mrb[0].mxu0
  %v907 = vpop.f32.mrb[0].mxu0
  %v908 = vadd.f32 0.0, %v907
  %v909 = vpop.f32.mrb[0].mxu0
  %910 = vmatprep.mubr.bf16.mxu0 %v102
  %911 = vmatmul.mubr.bf16.gmra.mrb[0].mxu0 %v101
  %v912 = vpop.f32.mrb[0].mxu0
  %v913 = vadd.f32 0.0, %v912
  %v914 = vpop.f32.mrb[0].mxu0
  %v915 = vpop.f32.mrb[0].mxu0
  %v916 = vadd.f32 0.0, %v915
  %v917 = vpop.f32.mrb[0].mxu0
  %918 = vdwg.mxu0
  %919 = vmatprep.subr.bf16.mxu0 0
  %920 = vmatpush1.bf16.msra.mxu0 %v836
  %921 = vmatprep.subr.bf16.mxu0 0
  %922 = vmatpush1.bf16.msra.mxu0 %v837
  %923 = vmatprep.subr.bf16.mxu0 0
  %924 = vmatpush1.bf16.msra.mxu0 %v838
  %925 = vmatprep.subr.bf16.mxu0 0
  %926 = vmatpush1.bf16.msra.mxu0 %v839
  %927 = vmatprep.subr.bf16.mxu0 0
  %928 = vmatpush1.bf16.msra.mxu0 %v840
  %929 = vmatprep.subr.bf16.mxu0 0
  %930 = vmatpush1.bf16.msra.mxu0 %v841
  %931 = vmatprep.subr.bf16.mxu0 0
  %932 = vmatpush1.bf16.msra.mxu0 %v842
  %933 = vmatprep.subr.bf16.mxu0 0
  %934 = vmatpush1.bf16.msra.mxu0 %v843
  %935 = vmatprep.subr.bf16.mxu0 0
  %936 = vmatpush1.bf16.msra.mxu0 %v844
  %937 = vmatprep.subr.bf16.mxu0 0
  %938 = vmatpush1.bf16.msra.mxu0 0
  %939 = vmatprep.subr.bf16.mxu0 0
  %940 = vmatpush1.bf16.msra.mxu0 0
  %941 = vmatprep.subr.bf16.mxu0 0
  %942 = vmatpush1.bf16.msra.mxu0 0
  %943 = vmatprep.subr.bf16.mxu0 0
  %944 = vmatpush1.bf16.msra.mxu0 0
  %945 = vmatprep.subr.bf16.mxu0 0
  %946 = vmatpush1.bf16.msra.mxu0 0
  %947 = vmatprep.subr.bf16.mxu0 0
  %948 = vmatpush1.bf16.msra.mxu0 0
  %949 = vmatprep.subr.bf16.mxu0 0
  %950 = vmatpush1.bf16.msra.mxu0 0
  %951 = vmatprep.mubr.bf16.mxu0 %v263
  %952 = vmatmul.mubr.bf16.gmra.mrb[0].mxu0 %v99
  %v953 = vpop.f32.mrb[0].mxu0
  %v954 = vadd.f32 %v905, %v953
  %v955 = vpop.f32.mrb[0].mxu0
  %v956 = vpop.f32.mrb[0].mxu0
  %v957 = vadd.f32 %v908, %v956
  %v958 = vpop.f32.mrb[0].mxu0
  %959 = vmatprep.mubr.bf16.mxu0 %v266
  %960 = vmatmul.mubr.bf16.gmra.mrb[0].mxu0 %v103
  %v961 = vpop.f32.mrb[0].mxu0
  %v962 = vadd.f32 %v913, %v961
  %v963 = vpop.f32.mrb[0].mxu0
  %v964 = vpop.f32.mrb[0].mxu0
  %v965 = vadd.f32 %v916, %v964
  %v966 = vpop.f32.mrb[0].mxu0
  %967 = vdwg.mxu0
  %v968 = vmax.f32 %v665, %v954
  %v969 = vmax.f32 %v666, %v957
  %v970 = vmax.f32 %v667, %v962
  %v971 = vmax.f32 %v668, %v965
  %s972 = scalar_lea.vmem %s0, 600
  %v973 = vld [vmem:[%s972] sm:$0xf]
  %v974 = vld [vmem:[%s972 + $0x4] sm:$0xf]
  %v975 = vld [vmem:[%s972 + $0x8] sm:$0xf]
  %v976 = vld [vmem:[%s972 + $0xc] sm:$0xf]
  %v977 = vld [vmem:[%s972 + $0x10] sm:$0xf]
  %v978 = vld [vmem:[%s972 + $0x14] sm:$0xf]
  %v979 = vld [vmem:[%s972 + $0x18] sm:$0xf]
  %v980 = vld [vmem:[%s972 + $0x1c] sm:$0xf]
  %v981 = vld [vmem:[%s972 + $0x20] sm:$0xf]
  %v982 = vld [vmem:[%s972 + $0x24] sm:$0xf]
  %v983 = vld [vmem:[%s972 + $0x28] sm:$0xf]
  %v984 = vld [vmem:[%s972 + $0x2c] sm:$0xf]
  %v985 = vld [vmem:[%s972 + $0x30] sm:$0xf]
  %v986 = vld [vmem:[%s972 + $0x34] sm:$0xf]
  %v987 = vld [vmem:[%s972 + $0x38] sm:$0xf]
  %v988 = vld [vmem:[%s972 + $0x3c] sm:$0xf]
  %v989 = vld [vmem:[%s972 + $0x40] sm:$0xf]
  %v990 = vld [vmem:[%s972 + $0x44] sm:$0xf]
  %v991 = vld [vmem:[%s972 + $0x48] sm:$0xf]
  %v992 = vld [vmem:[%s972 + $0x4c] sm:$0xf]
  %v993 = vld [vmem:[%s972 + $0x50] sm:$0xf]
  %v994 = vld [vmem:[%s972 + $0x54] sm:$0xf]
  %v995 = vld [vmem:[%s972 + $0x58] sm:$0xf]
  %v996 = vld [vmem:[%s972 + $0x5c] sm:$0xf]
  %v997 = vld [vmem:[%s972 + $0x60] sm:$0xf]
  %v998 = vld [vmem:[%s972 + $0x64] sm:$0xf]
  %v999 = vld [vmem:[%s972 + $0x68] sm:$0xf]
  %v1000 = vld [vmem:[%s972 + $0x6c] sm:$0xf]
  %v1001 = vld [vmem:[%s972 + $0x70] sm:$0xf]
  %v1002 = vld [vmem:[%s972 + $0x74] sm:$0xf]
  %v1003 = vld [vmem:[%s972 + $0x78] sm:$0xf]
  %v1004 = vld [vmem:[%s972 + $0x7c] sm:$0xf]
  %v1005 = vld [vmem:[%s972 + $0x80] sm:$0xf]
  %v1006 = vld [vmem:[%s972 + $0x84] sm:$0xf]
  %v1007 = vld [vmem:[%s972 + $0x88] sm:$0xf]
  %v1008 = vld [vmem:[%s972 + $0x8c] sm:$0xf]
  %v1009 = vld [vmem:[%s972 + $0x90] sm:$0xf]
  %v1010 = vld [vmem:[%s972 + $0x94] sm:$0xf]
  %v1011 = vld [vmem:[%s972 + $0x98] sm:$0xf]
  %v1012 = vld [vmem:[%s972 + $0x9c] sm:$0xf]
  %v1013 = vld [vmem:[%s972 + $0xa0] sm:$0xf]
  %v1014 = vld [vmem:[%s972 + $0xa4] sm:$0xf]
  %v1015 = vld [vmem:[%s972 + $0xa8] sm:$0xf]
  %v1016 = vld [vmem:[%s972 + $0xac] sm:$0xf]
  %v1017 = vld [vmem:[%s972 + $0xb0] sm:$0xf]
  %v1018 = vld [vmem:[%s972 + $0xb4] sm:$0xf]
  %v1019 = vld [vmem:[%s972 + $0xb8] sm:$0xf]
  %v1020 = vld [vmem:[%s972 + $0xbc] sm:$0xf]
  %v1021 = vld [vmem:[%s972 + $0xc0] sm:$0xf]
  %v1022 = vld [vmem:[%s972 + $0xc4] sm:$0xf]
  %v1073 = vunpack.c.l.b16 %v973
  %v1074 = vunpack.c.l.b16 %v974
  %v1075 = vunpack.c.l.b16 %v975
  %v1076 = vunpack.c.l.b16 %v976
  %v1077 = vunpack.c.l.b16 %v977
  %v1078 = vunpack.c.l.b16 %v978
  %v1079 = vunpack.c.l.b16 %v979
  %v1080 = vunpack.c.l.b16 %v980
  %v1081 = vunpack.c.l.b16 %v981
  %v1082 = vunpack.c.l.b16 %v982
  %v1083 = vunpack.c.l.b16 %v983
  %v1084 = vunpack.c.l.b16 %v984
  %v1085 = vunpack.c.l.b16 %v985
  %v1086 = vunpack.c.l.b16 %v986
  %v1087 = vunpack.c.l.b16 %v987
  %v1088 = vunpack.c.l.b16 %v988
  %v1089 = vunpack.c.l.b16 %v989
  %v1090 = vunpack.c.l.b16 %v990
  %v1091 = vunpack.c.l.b16 %v991
  %v1092 = vunpack.c.l.b16 %v992
  %v1093 = vunpack.c.l.b16 %v993
  %v1094 = vunpack.c.l.b16 %v994
  %v1095 = vunpack.c.l.b16 %v995
  %v1096 = vunpack.c.l.b16 %v996
  %v1097 = vunpack.c.l.b16 %v997
  %v1098 = vunpack.c.l.b16 %v998
  %v1099 = vunpack.c.l.b16 %v999
  %v1100 = vunpack.c.l.b16 %v1000
  %v1101 = vunpack.c.l.b16 %v1001
  %v1102 = vunpack.c.l.b16 %v1002
  %v1103 = vunpack.c.l.b16 %v1003
  %v1104 = vunpack.c.l.b16 %v1004
  %v1105 = vunpack.c.l.b16 %v1005
  %v1106 = vunpack.c.l.b16 %v1006
  %v1107 = vunpack.c.l.b16 %v1007
  %v1108 = vunpack.c.l.b16 %v1008
  %v1109 = vunpack.c.l.b16 %v1009
  %v1110 = vunpack.c.l.b16 %v1010
  %v1111 = vunpack.c.l.b16 %v1011
  %v1112 = vunpack.c.l.b16 %v1012
  %v1113 = vunpack.c.l.b16 %v1013
  %v1114 = vunpack.c.l.b16 %v1014
  %v1115 = vunpack.c.l.b16 %v1015
  %v1116 = vunpack.c.l.b16 %v1016
  %v1117 = vunpack.c.l.b16 %v1017
  %v1118 = vunpack.c.l.b16 %v1018
  %v1119 = vunpack.c.l.b16 %v1019
  %v1120 = vunpack.c.l.b16 %v1020
  %v1121 = vunpack.c.l.b16 %v1021
  %v1122 = vunpack.c.l.b16 %v1022
  %v1123 = vpack.c.b16 %v1074, %v1073
  %v1124 = vpack.c.b16 %v1076, %v1075
  %v1125 = vpack.c.b16 %v1078, %v1077
  %v1126 = vpack.c.b16 %v1080, %v1079
  %v1127 = vpack.c.b16 %v1082, %v1081
  %v1128 = vpack.c.b16 %v1084, %v1083
  %v1129 = vpack.c.b16 %v1086, %v1085
  %v1130 = vpack.c.b16 %v1088, %v1087
  %v1131 = vpack.c.b16 %v1090, %v1089
  %v1132 = vpack.c.b16 %v1092, %v1091
  %v1133 = vpack.c.b16 %v1094, %v1093
  %v1134 = vpack.c.b16 %v1096, %v1095
  %v1135 = vpack.c.b16 %v1098, %v1097
  %v1136 = vpack.c.b16 %v1100, %v1099
  %v1137 = vpack.c.b16 %v1102, %v1101
  %v1138 = vpack.c.b16 %v1104, %v1103
  %v1139 = vpack.c.b16 %v1106, %v1105
  %v1140 = vpack.c.b16 %v1108, %v1107
  %v1141 = vpack.c.b16 %v1110, %v1109
  %v1142 = vpack.c.b16 %v1112, %v1111
  %v1143 = vpack.c.b16 %v1114, %v1113
  %v1144 = vpack.c.b16 %v1116, %v1115
  %v1145 = vpack.c.b16 %v1118, %v1117
  %v1146 = vpack.c.b16 %v1120, %v1119
  %v1147 = vpack.c.b16 %v1122, %v1121
  %1173 = vmatprep.subr.bf16.mxu0 0
  %1174 = vmatpush1.bf16.msra.mxu0 %v1123
  %1175 = vmatprep.subr.bf16.mxu0 0
  %1176 = vmatpush1.bf16.msra.mxu0 %v1124
  %1177 = vmatprep.subr.bf16.mxu0 0
  %1178 = vmatpush1.bf16.msra.mxu0 %v1125
  %1179 = vmatprep.subr.bf16.mxu0 0
  %1180 = vmatpush1.bf16.msra.mxu0 %v1126
  %1181 = vmatprep.subr.bf16.mxu0 0
  %1182 = vmatpush1.bf16.msra.mxu0 %v1127
  %1183 = vmatprep.subr.bf16.mxu0 0
  %1184 = vmatpush1.bf16.msra.mxu0 %v1128
  %1185 = vmatprep.subr.bf16.mxu0 0
  %1186 = vmatpush1.bf16.msra.mxu0 %v1129
  %1187 = vmatprep.subr.bf16.mxu0 0
  %1188 = vmatpush1.bf16.msra.mxu0 %v1130
  %1189 = vmatprep.subr.bf16.mxu0 0
  %1190 = vmatpush1.bf16.msra.mxu0 %v1131
  %1191 = vmatprep.subr.bf16.mxu0 0
  %1192 = vmatpush1.bf16.msra.mxu0 %v1132
  %1193 = vmatprep.subr.bf16.mxu0 0
  %1194 = vmatpush1.bf16.msra.mxu0 %v1133
  %1195 = vmatprep.subr.bf16.mxu0 0
  %1196 = vmatpush1.bf16.msra.mxu0 %v1134
  %1197 = vmatprep.subr.bf16.mxu0 0
  %1198 = vmatpush1.bf16.msra.mxu0 %v1135
  %1199 = vmatprep.subr.bf16.mxu0 0
  %1200 = vmatpush1.bf16.msra.mxu0 %v1136
  %1201 = vmatprep.subr.bf16.mxu0 0
  %1202 = vmatpush1.bf16.msra.mxu0 %v1137
  %1203 = vmatprep.subr.bf16.mxu0 0
  %1204 = vmatpush1.bf16.msra.mxu0 %v1138
  %1205 = vmatprep.mubr.bf16.mxu0 %v98
  %1206 = vmatmul.mubr.bf16.gmra.mrb[0].mxu0 %v97
  %v1207 = vpop.f32.mrb[0].mxu0
  %v1208 = vadd.f32 0.0, %v1207
  %v1209 = vpop.f32.mrb[0].mxu0
  %v1210 = vpop.f32.mrb[0].mxu0
  %v1211 = vadd.f32 0.0, %v1210
  %v1212 = vpop.f32.mrb[0].mxu0
  %1213 = vmatprep.mubr.bf16.mxu0 %v102
  %1214 = vmatmul.mubr.bf16.gmra.mrb[0].mxu0 %v101
  %v1215 = vpop.f32.mrb[0].mxu0
  %v1216 = vadd.f32 0.0, %v1215
  %v1217 = vpop.f32.mrb[0].mxu0
  %v1218 = vpop.f32.mrb[0].mxu0
  %v1219 = vadd.f32 0.0, %v1218
  %v1220 = vpop.f32.mrb[0].mxu0
  %1221 = vdwg.mxu0
  %1222 = vmatprep.subr.bf16.mxu0 0
  %1223 = vmatpush1.bf16.msra.mxu0 %v1139
  %1224 = vmatprep.subr.bf16.mxu0 0
  %1225 = vmatpush1.bf16.msra.mxu0 %v1140
  %1226 = vmatprep.subr.bf16.mxu0 0
  %1227 = vmatpush1.bf16.msra.mxu0 %v1141
  %1228 = vmatprep.subr.bf16.mxu0 0
  %1229 = vmatpush1.bf16.msra.mxu0 %v1142
  %1230 = vmatprep.subr.bf16.mxu0 0
  %1231 = vmatpush1.bf16.msra.mxu0 %v1143
  %1232 = vmatprep.subr.bf16.mxu0 0
  %1233 = vmatpush1.bf16.msra.mxu0 %v1144
  %1234 = vmatprep.subr.bf16.mxu0 0
  %1235 = vmatpush1.bf16.msra.mxu0 %v1145
  %1236 = vmatprep.subr.bf16.mxu0 0
  %1237 = vmatpush1.bf16.msra.mxu0 %v1146
  %1238 = vmatprep.subr.bf16.mxu0 0
  %1239 = vmatpush1.bf16.msra.mxu0 %v1147
  %1240 = vmatprep.subr.bf16.mxu0 0
  %1241 = vmatpush1.bf16.msra.mxu0 0
  %1242 = vmatprep.subr.bf16.mxu0 0
  %1243 = vmatpush1.bf16.msra.mxu0 0
  %1244 = vmatprep.subr.bf16.mxu0 0
  %1245 = vmatpush1.bf16.msra.mxu0 0
  %1246 = vmatprep.subr.bf16.mxu0 0
  %1247 = vmatpush1.bf16.msra.mxu0 0
  %1248 = vmatprep.subr.bf16.mxu0 0
  %1249 = vmatpush1.bf16.msra.mxu0 0
  %1250 = vmatprep.subr.bf16.mxu0 0
  %1251 = vmatpush1.bf16.msra.mxu0 0
  %1252 = vmatprep.subr.bf16.mxu0 0
  %1253 = vmatpush1.bf16.msra.mxu0 0
  %1254 = vmatprep.mubr.bf16.mxu0 %v263
  %1255 = vmatmul.mubr.bf16.gmra.mrb[0].mxu0 %v99
  %v1256 = vpop.f32.mrb[0].mxu0
  %v1257 = vadd.f32 %v1208, %v1256
  %v1258 = vpop.f32.mrb[0].mxu0
  %v1259 = vpop.f32.mrb[0].mxu0
  %v1260 = vadd.f32 %v1211, %v1259
  %v1261 = vpop.f32.mrb[0].mxu0
  %1262 = vmatprep.mubr.bf16.mxu0 %v266
  %1263 = vmatmul.mubr.bf16.gmra.mrb[0].mxu0 %v103
  %v1264 = vpop.f32.mrb[0].mxu0
  %v1265 = vadd.f32 %v1216, %v1264
  %v1266 = vpop.f32.mrb[0].mxu0
  %v1267 = vpop.f32.mrb[0].mxu0
  %v1268 = vadd.f32 %v1219, %v1267
  %v1269 = vpop.f32.mrb[0].mxu0
  %1270 = vdwg.mxu0
  %v1271 = vmax.f32 %v968, %v1257
  %v1272 = vmax.f32 %v969, %v1260
  %v1273 = vmax.f32 %v970, %v1265
  %v1274 = vmax.f32 %v971, %v1268
  %v1275 = vld [vmem:[%s2] sm:$0xff]
  %v1276 = vld [vmem:[%s2 + $0x8] sm:$0xff]
  %v1277 = vld [vmem:[%s2 + $0x10] sm:$0xff]
  %v1278 = vld [vmem:[%s2 + $0x18] sm:$0xff]
  %1280 = vset.pattern.permute.xlu0 0
  %1281 = vperm.xlu0 %1280, %v1275
  %v1282 = vpop.permute.xlu0 %1281
  %1285 = vset.pattern.permute.xlu0 0
  %1286 = vperm.xlu0 %1285, %v1276
  %v1287 = vpop.permute.xlu0 %1286
  %1290 = vset.pattern.permute.xlu0 0
  %1291 = vperm.xlu0 %1290, %v1277
  %v1292 = vpop.permute.xlu0 %1291
  %1295 = vset.pattern.permute.xlu0 0
  %1296 = vperm.xlu0 %1295, %v1278
  %v1297 = vpop.permute.xlu0 %1296
  %v1299 = vadd.f32 %v1271, %v1282
  %v1300 = vadd.f32 %v1272, %v1287
  %v1301 = vadd.f32 %v1273, %v1292
  %v1302 = vadd.f32 %v1274, %v1297
  %v1303 = vmax.f32 %v1299, 0.0
  %v1304 = vmax.f32 %v1300, 0.0
  %v1305 = vmax.f32 %v1301, 0.0
  %v1306 = vmax.f32 %v1302, 0.0
  %v1307 = vpack.c.bf16 %v1304, %v1303
  %v1308 = vpack.c.bf16 %v1306, %v1305
  %v1311 = vunpack.c.l.b16 %v1307
  %v1312 = vunpack.c.h.b16 %v1307
  %v1313 = vunpack.c.l.b16 %v1308
  %v1314 = vunpack.c.h.b16 %v1308
  %v1315 = vpack.c.b16 %v1311, %v1311
  %v1316 = vpack.c.b16 %v1312, %v1312
  %v1317 = vpack.c.b16 %v1313, %v1313
  %v1318 = vpack.c.b16 %v1314, %v1314
  %vm1323 = vcmask 322560
  %1324 = vst.msk [vmem:[%s3] sm:$0xf] %vm1323, %v1315
  %1325 = vst.msk [vmem:[%s3 + $0x4] sm:$0xf] %vm1323, %v1316
  %1326 = vst.msk [vmem:[%s3 + $0x8] sm:$0xf] %vm1323, %v1317
  %1327 = vst.msk [vmem:[%s3 + $0xc] sm:$0xf] %vm1323, %v1318
  // Predicated region
  $region14: #{net_forward.8} parent=0 // pred_check
    _
  $region15: #{net_forward.8} parent=0 // pred_check_branch
    %1329 = sbr.rel (0) target = $region17
  $region16: #{net_forward.8} parent=0 // pred_region
    _
  $region17: #{net_forward.8} parent=0 // pred_fallthru
    _
  // Predicated region
  $region18: #{net_forward.8} parent=0 // pred_check
    _
  $region19: #{net_forward.8} parent=0 // pred_check_branch
    %1331 = sbr.rel (0) target = $region21
  $region20: #{net_forward.8} parent=0 // pred_region
    _
  $region21: #{net_forward.8} parent=0 // pred_fallthru
    _

// kernel: net_forward.9
$region0: #{net_forward.9}
  #allocation0 [shape = 'u32[]', space=smem, size = 0x4, offset = 0x4, fixed_abs, tag = 'smem constant byte address 0x4 - core index']
  #allocation1 [shape = 'u32[144,128]{1,0:T(1,128)}', space=vmem, size = 0x12000, scoped, tag = 'internal scratch']
  %s0 = inlined_call_operand.vmem [shape: bf16[2,640], index: 0, kind: input, shape index: {}]
  %s1 = inlined_call_operand.vmem [shape: bf16[640,128], index: 1, kind: input, shape index: {}]
  %s2 = inlined_call_operand.vmem [shape: f32[1,128], index: 2, kind: input, shape index: {}]
  %s3 = inlined_call_operand.vmem [shape: bf16[128,64], index: 3, kind: input, shape index: {}]
  %s4 = inlined_call_operand.vmem [shape: f32[1,64], index: 4, kind: input, shape index: {}]
  %s5 = inlined_call_operand.vmem [shape: bf16[64,10], index: 5, kind: input, shape index: {}]
  %s6 = inlined_call_operand.vmem [shape: f32[1,10], index: 6, kind: input, shape index: {}]
  %s7 = inlined_call_operand.hbm [shape: f32[2,10], index: 7, kind: output, shape index: {}]
  %s8 = sld [smem:[#allocation0]]
  $region38: #{net_forward.9} parent=0
    _
  %s10 = ssub.s32 1, %s8
  %s11 = scalar_select 0, %s10, %s8
  $region1: #{net_forward.9} parent=0
    #allocation2 [shape = 'u8[1024]{0}', space=vmem, size = 0x400, scoped, tag = 'output window, operand 0, single buffered']
    #allocation3 [shape = 's32[1]{0}', space=sflag, size = 0x4, scoped, tag = 'scoped memory for net_forward.9']
    %12 = vsyncpa [#allocation3], 0
    // Predicated region
    $region2: #{net_forward.9} parent=1 // pred_check
      _
    $region3: #{net_forward.9} parent=1 // pred_check_branch
      %14 = sbr.rel (0) target = $region5
    $region4: #{net_forward.9} parent=1 // pred_region
      _
    $region5: #{net_forward.9} parent=1 // pred_fallthru
      _
    // Predicated region
    $region6: #{net_forward.9} parent=1 // pred_check
      _
    $region7: #{net_forward.9} parent=1 // pred_check_branch
      %16 = sbr.rel (0) target = $region9
    $region8: #{net_forward.9} parent=1 // pred_region
      _
    $region9: #{net_forward.9} parent=1 // pred_fallthru
      _
    // Predicated region
    $region10: #{net_forward.9} parent=1 // pred_check
      _
    $region11: #{net_forward.9} parent=1 // pred_check_branch
      %18 = sbr.rel (0) target = $region13
    $region12: #{net_forward.9} parent=1 // pred_region
      _
    $region13: #{net_forward.9} parent=1 // pred_fallthru
      _
    // Predicated region
    $region14: #{net_forward.9} parent=1 // pred_check
      _
    $region15: #{net_forward.9} parent=1 // pred_check_branch
      %20 = sbr.rel (0) target = $region17
    $region16: #{net_forward.9} parent=1 // pred_region
      _
    $region17: #{net_forward.9} parent=1 // pred_fallthru
      _
    // Predicated region
    $region18: #{net_forward.9} parent=1 // pred_check
      _
    $region19: #{net_forward.9} parent=1 // pred_check_branch
      %22 = sbr.rel (0) target = $region21
    $region20: #{net_forward.9} parent=1 // pred_region
      _
    $region21: #{net_forward.9} parent=1 // pred_fallthru
      _
    // Predicated region
    $region22: #{net_forward.9} parent=1 // pred_check
      _
    $region23: #{net_forward.9} parent=1 // pred_check_branch
      %24 = sbr.rel (0) target = $region25
    $region24: #{net_forward.9} parent=1 // pred_region
      _
    $region25: #{net_forward.9} parent=1 // pred_fallthru
      _
    // Predicated region
    $region26: #{net_forward.9} parent=1 // pred_check
      _
    $region27: #{net_forward.9} parent=1 // pred_check_branch
      %26 = sbr.rel (0) target = $region29
    $region28: #{net_forward.9} parent=1 // pred_region
      _
    $region29: #{net_forward.9} parent=1 // pred_fallthru
      _
    %v28 = vld [vmem:[%s0] sm:$0x1f]
    %v29 = vld [vmem:[%s1] sm:$0xf]
    %v30 = vld [vmem:[%s1 + $0x4] sm:$0xf]
    %v31 = vld [vmem:[%s1 + $0x8] sm:$0xf]
    %v32 = vld [vmem:[%s1 + $0xc] sm:$0xf]
    %v33 = vld [vmem:[%s1 + $0x10] sm:$0xf]
    %v34 = vld [vmem:[%s1 + $0x14] sm:$0xf]
    %v35 = vld [vmem:[%s1 + $0x18] sm:$0xf]
    %v36 = vld [vmem:[%s1 + $0x1c] sm:$0xf]
    %v37 = vld [vmem:[%s1 + $0x20] sm:$0xf]
    %v38 = vld [vmem:[%s1 + $0x24] sm:$0xf]
    %v39 = vld [vmem:[%s1 + $0x28] sm:$0xf]
    %v40 = vld [vmem:[%s1 + $0x2c] sm:$0xf]
    %v41 = vld [vmem:[%s1 + $0x30] sm:$0xf]
    %v42 = vld [vmem:[%s1 + $0x34] sm:$0xf]
    %v43 = vld [vmem:[%s1 + $0x38] sm:$0xf]
    %v44 = vld [vmem:[%s1 + $0x3c] sm:$0xf]
    %v45 = vld [vmem:[%s1 + $0x40] sm:$0xf]
    %v46 = vld [vmem:[%s1 + $0x44] sm:$0xf]
    %v47 = vld [vmem:[%s1 + $0x48] sm:$0xf]
    %v48 = vld [vmem:[%s1 + $0x4c] sm:$0xf]
    %v49 = vld [vmem:[%s1 + $0x50] sm:$0xf]
    %v50 = vld [vmem:[%s1 + $0x54] sm:$0xf]
    %v51 = vld [vmem:[%s1 + $0x58] sm:$0xf]
    %v52 = vld [vmem:[%s1 + $0x5c] sm:$0xf]
    %v53 = vld [vmem:[%s1 + $0x60] sm:$0xf]
    %v54 = vld [vmem:[%s1 + $0x64] sm:$0xf]
    %v55 = vld [vmem:[%s1 + $0x68] sm:$0xf]
    %v56 = vld [vmem:[%s1 + $0x6c] sm:$0xf]
    %v57 = vld [vmem:[%s1 + $0x70] sm:$0xf]
    %v58 = vld [vmem:[%s1 + $0x74] sm:$0xf]
    %v59 = vld [vmem:[%s1 + $0x78] sm:$0xf]
    %v60 = vld [vmem:[%s1 + $0x7c] sm:$0xf]
    %v61 = vld [vmem:[%s1 + $0x80] sm:$0xf]
    %v62 = vld [vmem:[%s1 + $0x84] sm:$0xf]
    %v63 = vld [vmem:[%s1 + $0x88] sm:$0xf]
    %v64 = vld [vmem:[%s1 + $0x8c] sm:$0xf]
    %v65 = vld [vmem:[%s1 + $0x90] sm:$0xf]
    %v66 = vld [vmem:[%s1 + $0x94] sm:$0xf]
    %v67 = vld [vmem:[%s1 + $0x98] sm:$0xf]
    %v68 = vld [vmem:[%s1 + $0x9c] sm:$0xf]
    %v69 = vld [vmem:[%s1 + $0xa0] sm:$0xf]
    %v70 = vld [vmem:[%s1 + $0xa4] sm:$0xf]
    %v71 = vld [vmem:[%s1 + $0xa8] sm:$0xf]
    %v72 = vld [vmem:[%s1 + $0xac] sm:$0xf]
    %v73 = vld [vmem:[%s1 + $0xb0] sm:$0xf]
    %v74 = vld [vmem:[%s1 + $0xb4] sm:$0xf]
    %v75 = vld [vmem:[%s1 + $0xb8] sm:$0xf]
    %v76 = vld [vmem:[%s1 + $0xbc] sm:$0xf]
    %v77 = vld [vmem:[%s1 + $0xc0] sm:$0xf]
    %v78 = vld [vmem:[%s1 + $0xc4] sm:$0xf]
    %v79 = vld [vmem:[%s1 + $0xc8] sm:$0xf]
    %v80 = vld [vmem:[%s1 + $0xcc] sm:$0xf]
    %v81 = vld [vmem:[%s1 + $0xd0] sm:$0xf]
    %v82 = vld [vmem:[%s1 + $0xd4] sm:$0xf]
    %v83 = vld [vmem:[%s1 + $0xd8] sm:$0xf]
    %v84 = vld [vmem:[%s1 + $0xdc] sm:$0xf]
    %v85 = vld [vmem:[%s1 + $0xe0] sm:$0xf]
    %v86 = vld [vmem:[%s1 + $0xe4] sm:$0xf]
    %v87 = vld [vmem:[%s1 + $0xe8] sm:$0xf]
    %v88 = vld [vmem:[%s1 + $0xec] sm:$0xf]
    %v89 = vld [vmem:[%s1 + $0xf0] sm:$0xf]
    %v90 = vld [vmem:[%s1 + $0xf4] sm:$0xf]
    %v91 = vld [vmem:[%s1 + $0xf8] sm:$0xf]
    %v92 = vld [vmem:[%s1 + $0xfc] sm:$0xf]
    %v93 = vld [vmem:[%s1 + $0x100] sm:$0xf]
    %v94 = vld [vmem:[%s1 + $0x104] sm:$0xf]
    %v95 = vld [vmem:[%s1 + $0x108] sm:$0xf]
    %v96 = vld [vmem:[%s1 + $0x10c] sm:$0xf]
    %v97 = vld [vmem:[%s1 + $0x110] sm:$0xf]
    %v98 = vld [vmem:[%s1 + $0x114] sm:$0xf]
    %v99 = vld [vmem:[%s1 + $0x118] sm:$0xf]
    %v100 = vld [vmem:[%s1 + $0x11c] sm:$0xf]
    %v101 = vld [vmem:[%s1 + $0x120] sm:$0xf]
    %v102 = vld [vmem:[%s1 + $0x124] sm:$0xf]
    %v103 = vld [vmem:[%s1 + $0x128] sm:$0xf]
    %v104 = vld [vmem:[%s1 + $0x12c] sm:$0xf]
    %v105 = vld [vmem:[%s1 + $0x130] sm:$0xf]
    %v106 = vld [vmem:[%s1 + $0x134] sm:$0xf]
    %v107 = vld [vmem:[%s1 + $0x138] sm:$0xf]
    %v108 = vld [vmem:[%s1 + $0x13c] sm:$0xf]
    %v109 = vld [vmem:[%s2] sm:$0x1]
    %v111 = vlaneseq
    %v112 = vshrl.u32 %v111, 7
    %v113 = vsub.s32 0, %v112
    %v114 = vrot.slane %v109, %v113
    %v117 = vcombine.high %v28, %v28
    %v119 = vunpack.c.l.s4 1966171168
    %v120 = vunpack.c.0.s8 %v119
    %v121 = vlaneseq
    %v122 = vshrl.u32 %v121, 7
    %v123 = vsub.s32 %v120, %v122
    %v124 = vrot.slane %v28, %v123
    %v126 = vunpack.c.l.s4 1966171168
    %v127 = vunpack.c.0.s8 %v126
    %v128 = vlaneseq
    %v129 = vshrl.u32 %v128, 7
    %v130 = vsub.s32 %v127, %v129
    %v131 = vrot.slane %v117, %v130
    %v132 = vcombine.high %v124, %v124
    %v134 = vunpack.c.l.s4 1966171168
    %v135 = vunpack.c.0.s8 %v134
    %v136 = vlaneseq
    %v137 = vshrl.u32 %v136, 7
    %v138 = vsub.s32 %v135, %v137
    %v139 = vrot.slane %v124, %v138
    %v141 = vunpack.c.l.s4 1966171168
    %v142 = vunpack.c.0.s8 %v141
    %v143 = vlaneseq
    %v144 = vshrl.u32 %v143, 7
    %v145 = vsub.s32 %v142, %v144
    %v146 = vrot.slane %v131, %v145
    %v148 = vunpack.c.l.s4 1966171168
    %v149 = vunpack.c.0.s8 %v148
    %v150 = vlaneseq
    %v151 = vshrl.u32 %v150, 7
    %v152 = vsub.s32 %v149, %v151
    %v153 = vrot.slane %v132, %v152
    %v154 = vcombine.high %v139, %v139
    %v155 = vcombine.high %v153, %v153
    %v241 = vunpack.c.l.b16 %v29
    %v242 = vunpack.c.l.b16 %v30
    %v243 = vunpack.c.l.b16 %v31
    %v244 = vunpack.c.l.b16 %v32
    %v245 = vunpack.c.l.b16 %v33
    %v246 = vunpack.c.l.b16 %v34
    %v247 = vunpack.c.l.b16 %v35
    %v248 = vunpack.c.l.b16 %v36
    %v249 = vunpack.c.l.b16 %v37
    %v250 = vunpack.c.l.b16 %v38
    %v251 = vunpack.c.l.b16 %v39
    %v252 = vunpack.c.l.b16 %v40
    %v253 = vunpack.c.l.b16 %v41
    %v254 = vunpack.c.l.b16 %v42
    %v255 = vunpack.c.l.b16 %v43
    %v256 = vunpack.c.l.b16 %v44
    %v257 = vunpack.c.l.b16 %v45
    %v258 = vunpack.c.l.b16 %v46
    %v259 = vunpack.c.l.b16 %v47
    %v260 = vunpack.c.l.b16 %v48
    %v261 = vunpack.c.l.b16 %v49
    %v262 = vunpack.c.l.b16 %v50
    %v263 = vunpack.c.l.b16 %v51
    %v264 = vunpack.c.l.b16 %v52
    %v265 = vunpack.c.l.b16 %v53
    %v266 = vunpack.c.l.b16 %v54
    %v267 = vunpack.c.l.b16 %v55
    %v268 = vunpack.c.l.b16 %v56
    %v269 = vunpack.c.l.b16 %v57
    %v270 = vunpack.c.l.b16 %v58
    %v271 = vunpack.c.l.b16 %v59
    %v272 = vunpack.c.l.b16 %v60
    %v273 = vunpack.c.l.b16 %v61
    %v274 = vunpack.c.l.b16 %v62
    %v275 = vunpack.c.l.b16 %v63
    %v276 = vunpack.c.l.b16 %v64
    %v277 = vunpack.c.l.b16 %v65
    %v278 = vunpack.c.l.b16 %v66
    %v279 = vunpack.c.l.b16 %v67
    %v280 = vunpack.c.l.b16 %v68
    %v281 = vunpack.c.l.b16 %v69
    %v282 = vunpack.c.l.b16 %v70
    %v283 = vunpack.c.l.b16 %v71
    %v284 = vunpack.c.l.b16 %v72
    %v285 = vunpack.c.l.b16 %v73
    %v286 = vunpack.c.l.b16 %v74
    %v287 = vunpack.c.l.b16 %v75
    %v288 = vunpack.c.l.b16 %v76
    %v289 = vunpack.c.l.b16 %v77
    %v290 = vunpack.c.l.b16 %v78
    %v291 = vunpack.c.l.b16 %v79
    %v292 = vunpack.c.l.b16 %v80
    %v293 = vunpack.c.l.b16 %v81
    %v294 = vunpack.c.l.b16 %v82
    %v295 = vunpack.c.l.b16 %v83
    %v296 = vunpack.c.l.b16 %v84
    %v297 = vunpack.c.l.b16 %v85
    %v298 = vunpack.c.l.b16 %v86
    %v299 = vunpack.c.l.b16 %v87
    %v300 = vunpack.c.l.b16 %v88
    %v301 = vunpack.c.l.b16 %v89
    %v302 = vunpack.c.l.b16 %v90
    %v303 = vunpack.c.l.b16 %v91
    %v304 = vunpack.c.l.b16 %v92
    %v305 = vunpack.c.l.b16 %v93
    %v306 = vunpack.c.l.b16 %v94
    %v307 = vunpack.c.l.b16 %v95
    %v308 = vunpack.c.l.b16 %v96
    %v309 = vunpack.c.l.b16 %v97
    %v310 = vunpack.c.l.b16 %v98
    %v311 = vunpack.c.l.b16 %v99
    %v312 = vunpack.c.l.b16 %v100
    %v313 = vunpack.c.l.b16 %v101
    %v314 = vunpack.c.l.b16 %v102
    %v315 = vunpack.c.l.b16 %v103
    %v316 = vunpack.c.l.b16 %v104
    %v317 = vunpack.c.l.b16 %v105
    %v318 = vunpack.c.l.b16 %v106
    %v319 = vunpack.c.l.b16 %v107
    %v320 = vunpack.c.l.b16 %v108
    %v321 = vpack.c.b16 %v242, %v241
    %v322 = vpack.c.b16 %v244, %v243
    %v323 = vpack.c.b16 %v246, %v245
    %v324 = vpack.c.b16 %v248, %v247
    %v325 = vpack.c.b16 %v250, %v249
    %v326 = vpack.c.b16 %v252, %v251
    %v327 = vpack.c.b16 %v254, %v253
    %v328 = vpack.c.b16 %v256, %v255
    %v329 = vpack.c.b16 %v258, %v257
    %v330 = vpack.c.b16 %v260, %v259
    %v331 = vpack.c.b16 %v262, %v261
    %v332 = vpack.c.b16 %v264, %v263
    %v333 = vpack.c.b16 %v266, %v265
    %v334 = vpack.c.b16 %v268, %v267
    %v335 = vpack.c.b16 %v270, %v269
    %v336 = vpack.c.b16 %v272, %v271
    %v337 = vpack.c.b16 %v274, %v273
    %v338 = vpack.c.b16 %v276, %v275
    %v339 = vpack.c.b16 %v278, %v277
    %v340 = vpack.c.b16 %v280, %v279
    %v341 = vpack.c.b16 %v282, %v281
    %v342 = vpack.c.b16 %v284, %v283
    %v343 = vpack.c.b16 %v286, %v285
    %v344 = vpack.c.b16 %v288, %v287
    %v345 = vpack.c.b16 %v290, %v289
    %v346 = vpack.c.b16 %v292, %v291
    %v347 = vpack.c.b16 %v294, %v293
    %v348 = vpack.c.b16 %v296, %v295
    %v349 = vpack.c.b16 %v298, %v297
    %v350 = vpack.c.b16 %v300, %v299
    %v351 = vpack.c.b16 %v302, %v301
    %v352 = vpack.c.b16 %v304, %v303
    %v353 = vpack.c.b16 %v306, %v305
    %v354 = vpack.c.b16 %v308, %v307
    %v355 = vpack.c.b16 %v310, %v309
    %v356 = vpack.c.b16 %v312, %v311
    %v357 = vpack.c.b16 %v314, %v313
    %v358 = vpack.c.b16 %v316, %v315
    %v359 = vpack.c.b16 %v318, %v317
    %v360 = vpack.c.b16 %v320, %v319
    %401 = vmatprep.subr.bf16.mxu0 0
    %402 = vmatpush1.bf16.msra.mxu0 %v321
    %403 = vmatprep.subr.bf16.mxu0 0
    %404 = vmatpush1.bf16.msra.mxu0 %v322
    %405 = vmatprep.subr.bf16.mxu0 0
    %406 = vmatpush1.bf16.msra.mxu0 %v323
    %407 = vmatprep.subr.bf16.mxu0 0
    %408 = vmatpush1.bf16.msra.mxu0 %v324
    %409 = vmatprep.subr.bf16.mxu0 0
    %410 = vmatpush1.bf16.msra.mxu0 %v325
    %411 = vmatprep.subr.bf16.mxu0 0
    %412 = vmatpush1.bf16.msra.mxu0 %v326
    %413 = vmatprep.subr.bf16.mxu0 0
    %414 = vmatpush1.bf16.msra.mxu0 %v327
    %415 = vmatprep.subr.bf16.mxu0 0
    %416 = vmatpush1.bf16.msra.mxu0 %v328
    %417 = vmatprep.subr.bf16.mxu0 0
    %418 = vmatpush1.bf16.msra.mxu0 %v329
    %419 = vmatprep.subr.bf16.mxu0 0
    %420 = vmatpush1.bf16.msra.mxu0 %v330
    %421 = vmatprep.subr.bf16.mxu0 0
    %422 = vmatpush1.bf16.msra.mxu0 %v331
    %423 = vmatprep.subr.bf16.mxu0 0
    %424 = vmatpush1.bf16.msra.mxu0 %v332
    %425 = vmatprep.subr.bf16.mxu0 0
    %426 = vmatpush1.bf16.msra.mxu0 %v333
    %427 = vmatprep.subr.bf16.mxu0 0
    %428 = vmatpush1.bf16.msra.mxu0 %v334
    %429 = vmatprep.subr.bf16.mxu0 0
    %430 = vmatpush1.bf16.msra.mxu0 %v335
    %431 = vmatprep.subr.bf16.mxu0 0
    %432 = vmatpush1.bf16.msra.mxu0 %v336
    %433 = vmatprep.mubr.bf16.mxu0 %v153
    %434 = vmatmul.mubr.bf16.gmra.mrb[0].mxu0 %v139
    %v435 = vpop.f32.mrb[0].mxu0
    %v436 = vadd.f32 %v114, %v435
    %v437 = vpop.f32.mrb[0].mxu0
    %v438 = vpop.f32.mrb[0].mxu0
    %v439 = vpop.f32.mrb[0].mxu0
    %440 = vdwg.mxu0
    %441 = vmatprep.subr.bf16.mxu0 0
    %442 = vmatpush1.bf16.msra.mxu0 %v337
    %443 = vmatprep.subr.bf16.mxu0 0
    %444 = vmatpush1.bf16.msra.mxu0 %v338
    %445 = vmatprep.subr.bf16.mxu0 0
    %446 = vmatpush1.bf16.msra.mxu0 %v339
    %447 = vmatprep.subr.bf16.mxu0 0
    %448 = vmatpush1.bf16.msra.mxu0 %v340
    %449 = vmatprep.subr.bf16.mxu0 0
    %450 = vmatpush1.bf16.msra.mxu0 %v341
    %451 = vmatprep.subr.bf16.mxu0 0
    %452 = vmatpush1.bf16.msra.mxu0 %v342
    %453 = vmatprep.subr.bf16.mxu0 0
    %454 = vmatpush1.bf16.msra.mxu0 %v343
    %455 = vmatprep.subr.bf16.mxu0 0
    %456 = vmatpush1.bf16.msra.mxu0 %v344
    %457 = vmatprep.subr.bf16.mxu0 0
    %458 = vmatpush1.bf16.msra.mxu0 %v345
    %459 = vmatprep.subr.bf16.mxu0 0
    %460 = vmatpush1.bf16.msra.mxu0 %v346
    %461 = vmatprep.subr.bf16.mxu0 0
    %462 = vmatpush1.bf16.msra.mxu0 %v347
    %463 = vmatprep.subr.bf16.mxu0 0
    %464 = vmatpush1.bf16.msra.mxu0 %v348
    %465 = vmatprep.subr.bf16.mxu0 0
    %466 = vmatpush1.bf16.msra.mxu0 %v349
    %467 = vmatprep.subr.bf16.mxu0 0
    %468 = vmatpush1.bf16.msra.mxu0 %v350
    %469 = vmatprep.subr.bf16.mxu0 0
    %470 = vmatpush1.bf16.msra.mxu0 %v351
    %471 = vmatprep.subr.bf16.mxu0 0
    %472 = vmatpush1.bf16.msra.mxu0 %v352
    %473 = vmatprep.mubr.bf16.mxu0 %v155
    %474 = vmatmul.mubr.bf16.gmra.mrb[0].mxu0 %v154
    %v475 = vpop.f32.mrb[0].mxu0
    %v476 = vadd.f32 %v436, %v475
    %v477 = vpop.f32.mrb[0].mxu0
    %v478 = vpop.f32.mrb[0].mxu0
    %v479 = vpop.f32.mrb[0].mxu0
    %480 = vdwg.mxu0
    %481 = vmatprep.subr.bf16.mxu0 0
    %482 = vmatpush1.bf16.msra.mxu0 %v353
    %483 = vmatprep.subr.bf16.mxu0 0
    %484 = vmatpush1.bf16.msra.mxu0 %v354
    %485 = vmatprep.subr.bf16.mxu0 0
    %486 = vmatpush1.bf16.msra.mxu0 %v355
    %487 = vmatprep.subr.bf16.mxu0 0
    %488 = vmatpush1.bf16.msra.mxu0 %v356
    %489 = vmatprep.subr.bf16.mxu0 0
    %490 = vmatpush1.bf16.msra.mxu0 %v357
    %491 = vmatprep.subr.bf16.mxu0 0
    %492 = vmatpush1.bf16.msra.mxu0 %v358
    %493 = vmatprep.subr.bf16.mxu0 0
    %494 = vmatpush1.bf16.msra.mxu0 %v359
    %495 = vmatprep.subr.bf16.mxu0 0
    %496 = vmatpush1.bf16.msra.mxu0 %v360
    %497 = vmatprep.subr.bf16.mxu0 0
    %498 = vmatpush1.bf16.msra.mxu0 0
    %499 = vmatprep.subr.bf16.mxu0 0
    %500 = vmatpush1.bf16.msra.mxu0 0
    %501 = vmatprep.subr.bf16.mxu0 0
    %502 = vmatpush1.bf16.msra.mxu0 0
    %503 = vmatprep.subr.bf16.mxu0 0
    %504 = vmatpush1.bf16.msra.mxu0 0
    %505 = vmatprep.subr.bf16.mxu0 0
    %506 = vmatpush1.bf16.msra.mxu0 0
    %507 = vmatprep.subr.bf16.mxu0 0
    %508 = vmatpush1.bf16.msra.mxu0 0
    %509 = vmatprep.subr.bf16.mxu0 0
    %510 = vmatpush1.bf16.msra.mxu0 0
    %511 = vmatprep.subr.bf16.mxu0 0
    %512 = vmatpush1.bf16.msra.mxu0 0
    %513 = vmatprep.mubr.bf16.mxu0 0
    %514 = vmatmul.mubr.bf16.gmra.mrb[0].mxu0 %v146
    %v515 = vpop.f32.mrb[0].mxu0
    %v516 = vadd.f32 %v476, %v515
    %v517 = vpop.f32.mrb[0].mxu0
    %v518 = vpop.f32.mrb[0].mxu0
    %v519 = vpop.f32.mrb[0].mxu0
    %520 = vdwg.mxu0
    %v521 = vmax.f32 %v516, 0.0
    %v522 = vpack.c.bf16 %v521, %v521
    %v523 = vld [vmem:[%s3] sm:$0xf]
    %v524 = vld [vmem:[%s3 + $0x4] sm:$0xf]
    %v525 = vld [vmem:[%s3 + $0x8] sm:$0xf]
    %v526 = vld [vmem:[%s3 + $0xc] sm:$0xf]
    %v527 = vld [vmem:[%s3 + $0x10] sm:$0xf]
    %v528 = vld [vmem:[%s3 + $0x14] sm:$0xf]
    %v529 = vld [vmem:[%s3 + $0x18] sm:$0xf]
    %v530 = vld [vmem:[%s3 + $0x1c] sm:$0xf]
    %v531 = vld [vmem:[%s3 + $0x20] sm:$0xf]
    %v532 = vld [vmem:[%s3 + $0x24] sm:$0xf]
    %v533 = vld [vmem:[%s3 + $0x28] sm:$0xf]
    %v534 = vld [vmem:[%s3 + $0x2c] sm:$0xf]
    %v535 = vld [vmem:[%s3 + $0x30] sm:$0xf]
    %v536 = vld [vmem:[%s3 + $0x34] sm:$0xf]
    %v537 = vld [vmem:[%s3 + $0x38] sm:$0xf]
    %v538 = vld [vmem:[%s3 + $0x3c] sm:$0xf]
    %v539 = vld [vmem:[%s4] sm:$0x1]
    %v541 = vlaneseq
    %v542 = vshrl.u32 %v541, 7
    %v543 = vsub.s32 0, %v542
    %v544 = vrot.slane %v539, %v543
    %v562 = vunpack.c.l.b16 %v523
    %v563 = vunpack.c.l.b16 %v524
    %v564 = vunpack.c.l.b16 %v525
    %v565 = vunpack.c.l.b16 %v526
    %v566 = vunpack.c.l.b16 %v527
    %v567 = vunpack.c.l.b16 %v528
    %v568 = vunpack.c.l.b16 %v529
    %v569 = vunpack.c.l.b16 %v530
    %v570 = vunpack.c.l.b16 %v531
    %v571 = vunpack.c.l.b16 %v532
    %v572 = vunpack.c.l.b16 %v533
    %v573 = vunpack.c.l.b16 %v534
    %v574 = vunpack.c.l.b16 %v535
    %v575 = vunpack.c.l.b16 %v536
    %v576 = vunpack.c.l.b16 %v537
    %v577 = vunpack.c.l.b16 %v538
    %v578 = vpack.c.b16 %v563, %v562
    %v579 = vpack.c.b16 %v565, %v564
    %v580 = vpack.c.b16 %v567, %v566
    %v581 = vpack.c.b16 %v569, %v568
    %v582 = vpack.c.b16 %v571, %v570
    %v583 = vpack.c.b16 %v573, %v572
    %v584 = vpack.c.b16 %v575, %v574
    %v585 = vpack.c.b16 %v577, %v576
    %594 = vmatprep.subr.bf16.mxu0 0
    %595 = vmatpush1.bf16.msra.mxu0 %v578
    %596 = vmatprep.subr.bf16.mxu0 0
    %597 = vmatpush1.bf16.msra.mxu0 %v579
    %598 = vmatprep.subr.bf16.mxu0 0
    %599 = vmatpush1.bf16.msra.mxu0 %v580
    %600 = vmatprep.subr.bf16.mxu0 0
    %601 = vmatpush1.bf16.msra.mxu0 %v581
    %602 = vmatprep.subr.bf16.mxu0 0
    %603 = vmatpush1.bf16.msra.mxu0 %v582
    %604 = vmatprep.subr.bf16.mxu0 0
    %605 = vmatpush1.bf16.msra.mxu0 %v583
    %606 = vmatprep.subr.bf16.mxu0 0
    %607 = vmatpush1.bf16.msra.mxu0 %v584
    %608 = vmatprep.subr.bf16.mxu0 0
    %609 = vmatpush1.bf16.msra.mxu0 %v585
    %610 = vmatprep.subr.bf16.mxu0 0
    %611 = vmatpush1.bf16.msra.mxu0 0
    %612 = vmatprep.subr.bf16.mxu0 0
    %613 = vmatpush1.bf16.msra.mxu0 0
    %614 = vmatprep.subr.bf16.mxu0 0
    %615 = vmatpush1.bf16.msra.mxu0 0
    %616 = vmatprep.subr.bf16.mxu0 0
    %617 = vmatpush1.bf16.msra.mxu0 0
    %618 = vmatprep.subr.bf16.mxu0 0
    %619 = vmatpush1.bf16.msra.mxu0 0
    %620 = vmatprep.subr.bf16.mxu0 0
    %621 = vmatpush1.bf16.msra.mxu0 0
    %622 = vmatprep.subr.bf16.mxu0 0
    %623 = vmatpush1.bf16.msra.mxu0 0
    %624 = vmatprep.subr.bf16.mxu0 0
    %625 = vmatpush1.bf16.msra.mxu0 0
    %626 = vmatprep.mubr.bf16.mxu0 0
    %627 = vmatmul.mubr.bf16.gmra.mrb[0].mxu0 %v522
    %v628 = vpop.f32.mrb[0].mxu0
    %v629 = vadd.f32 %v544, %v628
    %v630 = vpop.f32.mrb[0].mxu0
    %v631 = vpop.f32.mrb[0].mxu0
    %v632 = vpop.f32.mrb[0].mxu0
    %633 = vdwg.mxu0
    %v634 = vmax.f32 %v629, 0.0
    %v635 = vpack.c.bf16 %v634, %v634
    %v636 = vld [vmem:[%s5] sm:$0xf]
    %v637 = vld [vmem:[%s5 + $0x4] sm:$0xf]
    %v638 = vld [vmem:[%s5 + $0x8] sm:$0xf]
    %v639 = vld [vmem:[%s5 + $0xc] sm:$0xf]
    %v640 = vld [vmem:[%s5 + $0x10] sm:$0xf]
    %v641 = vld [vmem:[%s5 + $0x14] sm:$0xf]
    %v642 = vld [vmem:[%s5 + $0x18] sm:$0xf]
    %v643 = vld [vmem:[%s5 + $0x1c] sm:$0xf]
    %v644 = vld [vmem:[%s6] sm:$0x1]
    %v646 = vlaneseq
    %v647 = vshrl.u32 %v646, 7
    %v648 = vsub.s32 0, %v647
    %v649 = vrot.slane %v644, %v648
    %v659 = vunpack.c.l.b16 %v636
    %v660 = vunpack.c.l.b16 %v637
    %v661 = vunpack.c.l.b16 %v638
    %v662 = vunpack.c.l.b16 %v639
    %v663 = vunpack.c.l.b16 %v640
    %v664 = vunpack.c.l.b16 %v641
    %v665 = vunpack.c.l.b16 %v642
    %v666 = vunpack.c.l.b16 %v643
    %v667 = vpack.c.b16 %v660, %v659
    %v668 = vpack.c.b16 %v662, %v661
    %v669 = vpack.c.b16 %v664, %v663
    %v670 = vpack.c.b16 %v666, %v665
    %vm675 = vcmask 523264
    %v677 = vsel %vm675, %v635, 0
    %679 = vmatprep.subr.bf16.mxu0 0
    %680 = vmatpush1.bf16.msra.mxu0 %v667
    %681 = vmatprep.subr.bf16.mxu0 0
    %682 = vmatpush1.bf16.msra.mxu0 %v668
    %683 = vmatprep.subr.bf16.mxu0 0
    %684 = vmatpush1.bf16.msra.mxu0 %v669
    %685 = vmatprep.subr.bf16.mxu0 0
    %686 = vmatpush1.bf16.msra.mxu0 %v670
    %687 = vmatprep.subr.bf16.mxu0 0
    %688 = vmatpush1.bf16.msra.mxu0 0
    %689 = vmatprep.subr.bf16.mxu0 0
    %690 = vmatpush1.bf16.msra.mxu0 0
    %691 = vmatprep.subr.bf16.mxu0 0
    %692 = vmatpush1.bf16.msra.mxu0 0
    %693 = vmatprep.subr.bf16.mxu0 0
    %694 = vmatpush1.bf16.msra.mxu0 0
    %695 = vmatprep.subr.bf16.mxu0 0
    %696 = vmatpush1.bf16.msra.mxu0 0
    %697 = vmatprep.subr.bf16.mxu0 0
    %698 = vmatpush1.bf16.msra.mxu0 0
    %699 = vmatprep.subr.bf16.mxu0 0
    %700 = vmatpush1.bf16.msra.mxu0 0
    %701 = vmatprep.subr.bf16.mxu0 0
    %702 = vmatpush1.bf16.msra.mxu0 0
    %703 = vmatprep.subr.bf16.mxu0 0
    %704 = vmatpush1.bf16.msra.mxu0 0
    %705 = vmatprep.subr.bf16.mxu0 0
    %706 = vmatpush1.bf16.msra.mxu0 0
    %707 = vmatprep.subr.bf16.mxu0 0
    %708 = vmatpush1.bf16.msra.mxu0 0
    %709 = vmatprep.subr.bf16.mxu0 0
    %710 = vmatpush1.bf16.msra.mxu0 0
    %711 = vmatprep.mubr.bf16.mxu0 0
    %712 = vmatmul.mubr.bf16.gmra.mrb[0].mxu0 %v677
    %v713 = vpop.f32.mrb[0].mxu0
    %v714 = vadd.f32 %v649, %v713
    %v715 = vpop.f32.mrb[0].mxu0
    %v716 = vpop.f32.mrb[0].mxu0
    %v717 = vpop.f32.mrb[0].mxu0
    %718 = vdwg.mxu0
    %vm719 = vcmask 74752
    %720 = vst.msk [vmem:[#allocation2] sm:$0x3] %vm719, %v714
    // Predicated region
    $region30: #{net_forward.9} parent=1 // pred_check
      _
    $region31: #{net_forward.9} parent=1 // pred_check_branch
      %722 = sbr.rel (0) target = $region33
    $region32: #{net_forward.9} parent=1 // pred_region
      %s724 = ssub.s32 32, 32
      %725 = vsyncadd [#allocation3], %s724
      %s727 = sshll.u32 [#allocation2], 4
      %s728 = int_to_ptr.vmem [resolvable:$true] %s727
      %730 = dma.vmem_to_hbm [thread:$0]  %s728, 32, %s7, [#allocation3]
    $region33: #{net_forward.9} parent=1 // pred_fallthru
      _
    // Predicated region
    $region34: #{net_forward.9} parent=1 // pred_check
      _
    $region35: #{net_forward.9} parent=1 // pred_check_branch
      %732 = sbr.rel (0) target = $region37
    $region36: #{net_forward.9} parent=1 // pred_region
      %733 = dma.done [#allocation3], 32
    $region37: #{net_forward.9} parent=1 // pred_fallthru
      _
    %734 = vsyncpa [#allocation3], 1

</llo_original>
